<compile_context>
chip_gen: v7x
topology: tpu7x:2x2x1
jax: 0.10.0
libtpu: 0.0.40
codegen_flags: <defaults>
</compile_context>

<pallas_src>
import functools
import math

import jax
import jax.numpy as jnp
from jax.experimental import pallas as pl
from jax.experimental.pallas import tpu as pltpu

EMBED = 64
HEADS = 2
HEAD_DIM = EMBED // HEADS     # 32
HIDDEN2 = 32
LANES = 128                   # lane width of the padded output-head weight
_BM_CAP = 4096                # max batch rows per grid step (~13 MiB VMEM incl. temporaries)
_STEP_OVERHEAD_ROWS = 1024    # ~0.35 us per-grid-step overhead, expressed in row-equivalents


# --------------------------------------------------------------------------- kernels

def _finish(a, vec_ref, w2_ref, w3_ref, o_ref):
    """Shared tail: LayerNorm -> dense2+ReLU -> output head -> lane-dense shrink -> sigmoid."""
    ln_g = vec_ref[3:4, 0:EMBED]
    ln_b = vec_ref[4:5, 0:EMBED]
    b2 = vec_ref[5:6, 0:HIDDEN2]
    b3 = vec_ref[6:7, :]                       # output bias, replicated across all 128 lanes

    # LayerNorm(64), eps = 1e-5, biased variance (PyTorch semantics) — f32 math
    mean = jnp.mean(a, axis=-1, keepdims=True)
    var = jnp.mean((a - mean) ** 2, axis=-1, keepdims=True)
    a = (a - mean) * jax.lax.rsqrt(var + 1e-5) * ln_g + ln_b

    # dense2 + ReLU   (Dropout(p=0.5) is identity in eval mode)
    h = jnp.maximum(
        jnp.dot(a.astype(w2_ref.dtype), w2_ref[...],
                preferred_element_type=jnp.float32) + b2, 0.0)

    # output head: (32,128) zero-padded weight -> only lane 0 of the result is real
    logits = jnp.dot(h.astype(w3_ref.dtype), w3_ref[...],
                     preferred_element_type=jnp.float32)           # (BM, 128)

    # Shrink the (BM,128) slab to a lane-dense (BM//128, 128) output block:
    # transpose each 128-row chunk (XLU, otherwise idle) and keep row 0
    # (== column 0 of the chunk).  Kills the 128x HBM write amplification of
    # the padded head; the sigmoid (EUP) only touches real lanes.
    bm = logits.shape[0]
    parts = [logits[c * 128:(c + 1) * 128, :].T[0:1, :] for c in range(bm // 128)]
    shr = parts[0] if len(parts) == 1 else jnp.concatenate(parts, axis=0)   # (BM//128, 128)
    o_ref[...] = jax.nn.sigmoid(shr + b3)


def _kernel_folded(x_ref, wv_ref, wvo_ref, w2_ref, w3_ref, vec_ref, o_ref):
    # packed (8,128) f32 vectors: rows = [bv, biv@wo+bo, 0, ln_g, ln_b, b2, b3*ones, 0]
    bv = vec_ref[0:1, 0:EMBED]
    bvo = vec_ref[1:2, 0:EMBED]

    x = x_ref[...]                              # feature mask already folded into wv
    # dense1_v + ReLU  (dense1_q / dense1_k are dead: length-1 softmax == 1)
    v = jnp.maximum(
        jnp.dot(x, wv_ref[...], preferred_element_type=jnp.float32) + bv, 0.0)
    # MHA(seq_len=1) == out_proj(v_proj(.)): single fused (64,64) matmul (wiv@wo folded offline)
    a = jnp.dot(v.astype(wvo_ref.dtype), wvo_ref[...],
                preferred_element_type=jnp.float32) + bvo
    _finish(a, vec_ref, w2_ref, w3_ref, o_ref)


def _kernel_unfolded(x_ref, wv_ref, wiv_ref, wo_ref, w2_ref, w3_ref, vec_ref, o_ref):
    # bit-exact-with-reference variant: keeps wiv and wo as two MXU ops
    bv = vec_ref[0:1, 0:EMBED]
    biv = vec_ref[1:2, 0:EMBED]
    bo = vec_ref[2:3, 0:EMBED]

    x = x_ref[...]
    v = jnp.maximum(
        jnp.dot(x, wv_ref[...], preferred_element_type=jnp.float32) + bv, 0.0)
    vi = jnp.dot(v.astype(wiv_ref.dtype), wiv_ref[...],
                 preferred_element_type=jnp.float32) + biv
    a = jnp.dot(vi.astype(wo_ref.dtype), wo_ref[...],
                preferred_element_type=jnp.float32) + bo
    _finish(a, vec_ref, w2_ref, w3_ref, o_ref)


# --------------------------------------------------------------------------- params

def init_params(key, input_dim):
    ks = jax.random.split(key, 16)
    n = lambda k, shp: (0.1 * jax.random.normal(k, shp)).astype(jnp.float32)
    p = {
        "mask": jax.random.uniform(ks[0], (1, input_dim, 2), dtype=jnp.float32),
        # dense1_{q,k,v}: Linear(input_dim, 64) -> stored pre-transposed (in, out)
        "wq": n(ks[1], (input_dim, EMBED)), "bq": n(ks[2], (1, EMBED)),
        "wk": n(ks[3], (input_dim, EMBED)), "bk": n(ks[4], (1, EMBED)),
        "wv": n(ks[5], (input_dim, EMBED)), "bv": n(ks[6], (1, EMBED)),
        # MHA in_proj (192,64) split into q/k/v chunks, pre-transposed
        "wiq": n(ks[7], (EMBED, EMBED)), "biq": n(ks[8], (1, EMBED)),
        "wik": n(ks[9], (EMBED, EMBED)), "bik": n(ks[10], (1, EMBED)),
        "wiv": n(ks[11], (EMBED, EMBED)), "biv": n(ks[12], (1, EMBED)),
        # MHA out_proj
        "wo": n(ks[13], (EMBED, EMBED)), "bo": jnp.zeros((1, EMBED), jnp.float32),
        # LayerNorm(64)
        "ln_g": jnp.ones((1, EMBED), jnp.float32),
        "ln_b": jnp.zeros((1, EMBED), jnp.float32),
        # dense2: Linear(64, 32)
        "w2": n(ks[14], (EMBED, HIDDEN2)), "b2": jnp.zeros((1, HIDDEN2), jnp.float32),
        # output: Linear(32, 1)
        "w3": n(ks[15], (HIDDEN2, 1)), "b3": jnp.zeros((1, 1), jnp.float32),
    }
    return p


# --------------------------------------------------------------------------- tiling

@functools.lru_cache(maxsize=None)
def _num_tensorcores():
    """TensorCores per chip (best effort): 2 on v7x (and v4/v5p), 1 on v5e/v6e."""
    try:
        info = pltpu.get_tpu_info()
        for attr in ("num_cores", "core_count", "num_tensorcores",
                     "tensorcore_count", "cores_per_chip"):
            n = getattr(info, attr, None)
            if isinstance(n, int) and 1 <= n <= 8:
                return min(n, 2)
    except Exception:
        pass
    try:
        kind = jax.devices()[0].device_kind.lower().replace(" ", "")
        if any(t in kind for t in ("v7", "7x", "v4", "v5p")):
            return 2
    except Exception:
        pass
    return 1


def _pick_bm(bp, n_tc):
    """Batch tile (multiple of 128 dividing `bp`, <= _BM_CAP).

    Per-core wall ~= ceil(steps / n_tc) * (step_overhead + work(BM)): 1-TC
    chips (v5e/v6e) get the largest legal single tile; 2-TC chips (v7x, via
    dimension_semantics=('parallel',)) prefer an even, core-balanced step count.
    """
    cands = [bm for bm in range(128, min(bp, _BM_CAP) + 1, 128) if bp % bm == 0]

    def cost(bm):
        steps = bp // bm
        per_core_steps = -(-steps // n_tc)          # ceil
        return (per_core_steps * (_STEP_OVERHEAD_ROWS + bm), steps)

    return min(cands, key=cost)


# --------------------------------------------------------------------------- wrapper

def transformer_model_mask(x, params, noise_key, tau=1e-4,
                           compute_dtype=jnp.float32, fold_attn=None):
    """Eval-mode forward of TransformerModelMask. Returns (probs (B,1), mask (1,D)).

    compute_dtype: dtype of the MXU operands (x + weight matrices).  f32 keeps
      bit-parity with the reference; bf16 halves x/weight DMA, VMEM and vreg
      bytes and is worthwhile on all of v5e/v6e/v7x (the kernel is
      bandwidth/overhead bound, not MXU bound).  LayerNorm / biases / sigmoid
      stay f32 either way.
    fold_attn: fold the MHA out_proj into the v in_proj offline (wiv@wo; one
      MXU op instead of two; exact math, rounding order only).  Default: on
      for non-f32 compute dtypes, off for f32 (keeps bit parity).
    """
    B, D = x.shape
    cd = jnp.dtype(compute_dtype)
    if fold_attn is None:
        fold_attn = cd != jnp.dtype(jnp.float32)

    # --- Gumbel-softmax feature mask (tiny (1,D,2) op; plain-JAX glue) ---
    m = params["mask"]
    u = jax.random.uniform(noise_key, m.shape, minval=1e-20, maxval=1.0)
    g = -jnp.log(-jnp.log(u))
    soft = jax.nn.softmax((m + g) / tau, axis=2)
    mask = (soft[:, :, 0] > soft[:, :, 1]).astype(jnp.float32)       # (1, D)

    # --- offline weight prep (f32; exact / rounding-order-only transforms) ---
    # fold the {0,1} mask into dense1_v's rows: (x*mask) @ wv == x @ (wv * mask.T)
    wv_m = params["wv"] * mask.T                                      # (D, 64)
    # zero-pad the (32,1) output head to 128 lanes (lane-dense MXU N; only lane 0 real)
    w3_pad = jnp.zeros((HIDDEN2, LANES), jnp.float32).at[:, 0].set(params["w3"][:, 0])

    # pack all bias / LayerNorm vectors into one (8,128) block -> one BlockSpec window
    vec = jnp.zeros((8, LANES), jnp.float32)
    vec = vec.at[0, :EMBED].set(params["bv"][0])
    if fold_attn:
        wvo = params["wiv"] @ params["wo"]                            # (64, 64)
        bvo = params["biv"] @ params["wo"] + params["bo"]             # (1, 64)
        vec = vec.at[1, :EMBED].set(bvo[0])
    else:
        vec = vec.at[1, :EMBED].set(params["biv"][0])
        vec = vec.at[2, :EMBED].set(params["bo"][0])
    vec = vec.at[3, :EMBED].set(params["ln_g"][0])
    vec = vec.at[4, :EMBED].set(params["ln_b"][0])
    vec = vec.at[5, :HIDDEN2].set(params["b2"][0])
    vec = vec.at[6, :].set(params["b3"][0, 0])                        # b3 replicated over lanes

    x_c = x.astype(cd)
    wv_c = wv_m.astype(cd)
    w2_c = params["w2"].astype(cd)
    w3_c = w3_pad.astype(cd)

    # --- batch tiling: pad B to a multiple of 128 (for the lane-dense output
    # shrink) and pick a generation-aware tile ---
    Bp = ((B + LANES - 1) // LANES) * LANES
    if Bp != B:
        x_c = jnp.pad(x_c, ((0, Bp - B), (0, 0)))
    BM = _pick_bm(Bp, _num_tensorcores())
    steps = Bp // BM

    if fold_attn:
        kernel = _kernel_folded
        weight_ops = (wvo.astype(cd),)
        weight_specs = [pl.BlockSpec((EMBED, EMBED), lambda i: (0, 0))]
    else:
        kernel = _kernel_unfolded
        weight_ops = (params["wiv"].astype(cd), params["wo"].astype(cd))
        weight_specs = [pl.BlockSpec((EMBED, EMBED), lambda i: (0, 0)),
                        pl.BlockSpec((EMBED, EMBED), lambda i: (0, 0))]

    # scoped-VMEM budget from the actual footprint (double-buffered I/O +
    # weights + live f32 intermediates), with headroom; far below every
    # generation's physical VMEM at any BM we pick.
    isz = cd.itemsize
    w_bytes = (D * EMBED + len(weight_ops) * EMBED * EMBED
               + EMBED * HIDDEN2 + HIDDEN2 * LANES) * isz + 8 * LANES * 4
    io_bytes = BM * D * isz + (BM // 128) * LANES * 4
    interm_bytes = BM * 2048
    vmem_limit = int(min(max(2 * (w_bytes + io_bytes) + interm_bytes + (4 << 20),
                             16 << 20), 48 << 20))

    in_specs = ([pl.BlockSpec((BM, D), lambda i: (i, 0)),        # x (tiled over batch)
                 pl.BlockSpec((D, EMBED), lambda i: (0, 0))]     # wv (mask folded in)
                + weight_specs                                   # wvo  |  wiv, wo
                + [pl.BlockSpec((EMBED, HIDDEN2), lambda i: (0, 0)),   # w2
                   pl.BlockSpec((HIDDEN2, LANES), lambda i: (0, 0)),   # w3 (lane-padded)
                   pl.BlockSpec((8, LANES), lambda i: (0, 0))])        # packed bias/LN block

    out = pl.pallas_call(
        kernel,
        out_shape=jax.ShapeDtypeStruct((steps, BM // 128, LANES), jnp.float32),
        grid=(steps,),
        in_specs=in_specs,
        out_specs=pl.BlockSpec((None, BM // 128, LANES), lambda i: (i, 0, 0)),
        compiler_params=pltpu.CompilerParams(
            dimension_semantics=("parallel",),
            vmem_limit_bytes=vmem_limit),
    )(x_c, wv_c, *weight_ops, w2_c, w3_c, vec)

    probs = out.reshape(Bp, 1)[:B]
    return probs, mask


# --------------------------------------------------------------------------- reference

def _reference(x, params, mask):
    """Pure-JAX reference of the full (unfused) eval-mode forward."""
    xm = x * mask
    relu = lambda z: jnp.maximum(z, 0.0)
    q = relu(xm @ params["wq"] + params["bq"])
    k = relu(xm @ params["wk"] + params["bk"])
    v = relu(xm @ params["wv"] + params["bv"])
    qi = q @ params["wiq"] + params["biq"]
    ki = k @ params["wik"] + params["bik"]
    vi = v @ params["wiv"] + params["biv"]
    B = x.shape[0]
    qh = qi.reshape(B, HEADS, HEAD_DIM) / math.sqrt(HEAD_DIM)
    kh = ki.reshape(B, HEADS, HEAD_DIM)
    vh = vi.reshape(B, HEADS, HEAD_DIM)
    s = jnp.sum(qh * kh, axis=-1, keepdims=True)              # (B, H, 1) — one key
    w = jax.nn.softmax(s, axis=-1)                            # == 1
    attn = (w * vh).reshape(B, EMBED)
    a = attn @ params["wo"] + params["bo"]
    mean = jnp.mean(a, axis=-1, keepdims=True)
    var = jnp.mean((a - mean) ** 2, axis=-1, keepdims=True)
    a = (a - mean) / jnp.sqrt(var + 1e-5) * params["ln_g"] + params["ln_b"]
    h = relu(a @ params["w2"] + params["b2"])
    return jax.nn.sigmoid(h @ params["w3"] + params["b3"])


if __name__ == "__main__":
    key = jax.random.PRNGKey(0)
    k_param, k_x, k_noise = jax.random.split(key, 3)

    B, D = 512, 16                    # batch, input_dim
    params = init_params(k_param, D)
    x = jax.random.normal(k_x, (B, D), dtype=jnp.float32)

    # 1) f32, unfolded attention projection: bit-parity with the unfused reference
    out, mask = transformer_model_mask(x, params, k_noise)
    out = jax.block_until_ready(out)
    mask = jax.block_until_ready(mask)
    ref = _reference(x, params, mask)
    assert out.shape == (B, 1) and mask.shape == (1, D)
    assert bool(jnp.allclose(out, ref, atol=1e-5, rtol=1e-5))

    # 2) f32 with wiv@wo folded offline (exact math, rounding order only)
    out_fold, _ = transformer_model_mask(x, params, k_noise, fold_attn=True)
    out_fold = jax.block_until_ready(out_fold)
    assert bool(jnp.allclose(out_fold, ref, atol=1e-4))

    # 3) bf16 MXU-operand fast path (worthwhile on v5e/v6e/v7x); fold on by default
    out_bf16, _ = transformer_model_mask(x, params, k_noise,
                                         compute_dtype=jnp.bfloat16)
    out_bf16 = jax.block_until_ready(out_bf16)
    assert out_bf16.shape == (B, 1)
    assert bool(jnp.all(jnp.isfinite(out_bf16)))
    assert bool(jnp.allclose(out_bf16, ref, atol=3e-2))

    # 4) ragged batch (pads to a multiple of 128 internally, slices back)
    B2 = 100
    x2 = jax.random.normal(jax.random.PRNGKey(1), (B2, D), dtype=jnp.float32)
    out2, mask2 = transformer_model_mask(x2, params, k_noise)
    out2 = jax.block_until_ready(out2)
    ref2 = _reference(x2, params, mask2)
    assert out2.shape == (B2, 1)
    assert bool(jnp.allclose(out2, ref2, atol=1e-5, rtol=1e-5))

    print("KERNEL_OK")
</pallas_src>

<mosaic_0001>
module attributes {stable_mosaic.version = 11 : i64} {
  func.func @_kernel_unfolded(%arg0: i32, %arg1: memref<512x16xf32, #tpu.memory_space<vmem>>, %arg2: memref<16x64xf32, #tpu.memory_space<vmem>>, %arg3: memref<64x64xf32, #tpu.memory_space<vmem>>, %arg4: memref<64x64xf32, #tpu.memory_space<vmem>>, %arg5: memref<64x32xf32, #tpu.memory_space<vmem>>, %arg6: memref<32x128xf32, #tpu.memory_space<vmem>>, %arg7: memref<8x128xf32, #tpu.memory_space<vmem>>, %arg8: memref<1x4x128xf32, #tpu.memory_space<vmem>>) attributes {dimension_semantics = [#tpu.dimension_semantics<parallel>], iteration_bounds = array<i64: 1>, scalar_prefetch = 0 : i64, scratch_operands = 0 : i64, tpu.core_type = #tpu.core_type<tc>, window_params = [{transform_indices = @transform_0, window_bounds = array<i64: 512, 16>}, {pipeline_mode = #tpu.pipeline_mode<synchronous>, transform_indices = @transform_1, window_bounds = array<i64: 16, 64>}, {pipeline_mode = #tpu.pipeline_mode<synchronous>, transform_indices = @transform_2, window_bounds = array<i64: 64, 64>}, {pipeline_mode = #tpu.pipeline_mode<synchronous>, transform_indices = @transform_3, window_bounds = array<i64: 64, 64>}, {pipeline_mode = #tpu.pipeline_mode<synchronous>, transform_indices = @transform_4, window_bounds = array<i64: 64, 32>}, {pipeline_mode = #tpu.pipeline_mode<synchronous>, transform_indices = @transform_5, window_bounds = array<i64: 32, 128>}, {pipeline_mode = #tpu.pipeline_mode<synchronous>, transform_indices = @transform_6, window_bounds = array<i64: 8, 128>}, {transform_indices = @transform_7, window_bounds = array<i64: 1, 4, 128>}]} {
    %c0 = arith.constant 0 : index
    %c0_0 = arith.constant 0 : index
    %0 = vector.load %arg7[%c0, %c0_0] : memref<8x128xf32, #tpu.memory_space<vmem>>, vector<1x64xf32>
    %c1 = arith.constant 1 : index
    %c0_1 = arith.constant 0 : index
    %1 = vector.load %arg7[%c1, %c0_1] : memref<8x128xf32, #tpu.memory_space<vmem>>, vector<1x64xf32>
    %c2 = arith.constant 2 : index
    %c0_2 = arith.constant 0 : index
    %2 = vector.load %arg7[%c2, %c0_2] : memref<8x128xf32, #tpu.memory_space<vmem>>, vector<1x64xf32>
    %c0_3 = arith.constant 0 : index
    %c0_4 = arith.constant 0 : index
    %3 = vector.load %arg1[%c0_3, %c0_4] : memref<512x16xf32, #tpu.memory_space<vmem>>, vector<512x16xf32>
    %c0_5 = arith.constant 0 : index
    %c0_6 = arith.constant 0 : index
    %4 = vector.load %arg2[%c0_5, %c0_6] : memref<16x64xf32, #tpu.memory_space<vmem>>, vector<16x64xf32>
    %cst = arith.constant dense<0.000000e+00> : vector<512x64xf32>
    %5 = tpu.matmul %3, %4, %cst {dimension_numbers = #tpu.dot_dimension_numbers<[1], [0], [0], [1], [0, 0, 1, 1], [], []>} : vector<512x16xf32>, vector<16x64xf32>, vector<512x64xf32> -> vector<512x64xf32>
    %6 = vector.broadcast %0 : vector<1x64xf32> to vector<512x64xf32>
    %7 = arith.addf %5, %6 : vector<512x64xf32>
    %cst_7 = arith.constant 0.000000e+00 : f32
    %8 = vector.broadcast %cst_7 : f32 to vector<512x64xf32>
    %9 = arith.maximumf %7, %8 : vector<512x64xf32>
    %c0_8 = arith.constant 0 : index
    %c0_9 = arith.constant 0 : index
    %10 = vector.load %arg3[%c0_8, %c0_9] : memref<64x64xf32, #tpu.memory_space<vmem>>, vector<64x64xf32>
    %cst_10 = arith.constant dense<0.000000e+00> : vector<512x64xf32>
    %11 = tpu.matmul %9, %10, %cst_10 {dimension_numbers = #tpu.dot_dimension_numbers<[1], [0], [0], [1], [0, 0, 1, 1], [], []>} : vector<512x64xf32>, vector<64x64xf32>, vector<512x64xf32> -> vector<512x64xf32>
    %12 = vector.broadcast %1 : vector<1x64xf32> to vector<512x64xf32>
    %13 = arith.addf %11, %12 : vector<512x64xf32>
    %c0_11 = arith.constant 0 : index
    %c0_12 = arith.constant 0 : index
    %14 = vector.load %arg4[%c0_11, %c0_12] : memref<64x64xf32, #tpu.memory_space<vmem>>, vector<64x64xf32>
    %cst_13 = arith.constant dense<0.000000e+00> : vector<512x64xf32>
    %15 = tpu.matmul %13, %14, %cst_13 {dimension_numbers = #tpu.dot_dimension_numbers<[1], [0], [0], [1], [0, 0, 1, 1], [], []>} : vector<512x64xf32>, vector<64x64xf32>, vector<512x64xf32> -> vector<512x64xf32>
    %16 = vector.broadcast %2 : vector<1x64xf32> to vector<512x64xf32>
    %17 = arith.addf %15, %16 : vector<512x64xf32>
    %c3 = arith.constant 3 : index
    %c0_14 = arith.constant 0 : index
    %18 = vector.load %arg7[%c3, %c0_14] : memref<8x128xf32, #tpu.memory_space<vmem>>, vector<1x64xf32>
    %c4 = arith.constant 4 : index
    %c0_15 = arith.constant 0 : index
    %19 = vector.load %arg7[%c4, %c0_15] : memref<8x128xf32, #tpu.memory_space<vmem>>, vector<1x64xf32>
    %c5 = arith.constant 5 : index
    %c0_16 = arith.constant 0 : index
    %20 = vector.load %arg7[%c5, %c0_16] : memref<8x128xf32, #tpu.memory_space<vmem>>, vector<1x32xf32>
    %c6 = arith.constant 6 : index
    %c0_17 = arith.constant 0 : index
    %21 = vector.load %arg7[%c6, %c0_17] : memref<8x128xf32, #tpu.memory_space<vmem>>, vector<1x128xf32>
    %cst_18 = arith.constant dense<0.000000e+00> : vector<512xf32>
    %22 = vector.multi_reduction <add>, %17, %cst_18 [1] : vector<512x64xf32> to vector<512xf32>
    %23 = vector.shape_cast %22 : vector<512xf32> to vector<512x1xf32>
    %cst_19 = arith.constant 6.400000e+01 : f32
    %24 = vector.broadcast %cst_19 : f32 to vector<512x1xf32>
    %25 = arith.divf %23, %24 : vector<512x1xf32>
    %26 = vector.broadcast %25 : vector<512x1xf32> to vector<512x64xf32>
    %27 = arith.subf %17, %26 : vector<512x64xf32>
    %28 = arith.mulf %27, %27 : vector<512x64xf32>
    %cst_20 = arith.constant dense<0.000000e+00> : vector<512xf32>
    %29 = vector.multi_reduction <add>, %28, %cst_20 [1] : vector<512x64xf32> to vector<512xf32>
    %30 = vector.shape_cast %29 : vector<512xf32> to vector<512x1xf32>
    %cst_21 = arith.constant 6.400000e+01 : f32
    %31 = vector.broadcast %cst_21 : f32 to vector<512x1xf32>
    %32 = arith.divf %30, %31 : vector<512x1xf32>
    %33 = vector.broadcast %25 : vector<512x1xf32> to vector<512x64xf32>
    %34 = arith.subf %17, %33 : vector<512x64xf32>
    %cst_22 = arith.constant 9.99999974E-6 : f32
    %35 = vector.broadcast %cst_22 : f32 to vector<512x1xf32>
    %36 = arith.addf %32, %35 : vector<512x1xf32>
    %37 = math.rsqrt %36 : vector<512x1xf32>
    %38 = vector.broadcast %37 : vector<512x1xf32> to vector<512x64xf32>
    %39 = arith.mulf %34, %38 : vector<512x64xf32>
    %40 = vector.broadcast %18 : vector<1x64xf32> to vector<512x64xf32>
    %41 = arith.mulf %39, %40 : vector<512x64xf32>
    %42 = vector.broadcast %19 : vector<1x64xf32> to vector<512x64xf32>
    %43 = arith.addf %41, %42 : vector<512x64xf32>
    %c0_23 = arith.constant 0 : index
    %c0_24 = arith.constant 0 : index
    %44 = vector.load %arg5[%c0_23, %c0_24] : memref<64x32xf32, #tpu.memory_space<vmem>>, vector<64x32xf32>
    %cst_25 = arith.constant dense<0.000000e+00> : vector<512x32xf32>
    %45 = tpu.matmul %43, %44, %cst_25 {dimension_numbers = #tpu.dot_dimension_numbers<[1], [0], [0], [1], [0, 0, 1, 1], [], []>} : vector<512x64xf32>, vector<64x32xf32>, vector<512x32xf32> -> vector<512x32xf32>
    %46 = vector.broadcast %20 : vector<1x32xf32> to vector<512x32xf32>
    %47 = arith.addf %45, %46 : vector<512x32xf32>
    %cst_26 = arith.constant 0.000000e+00 : f32
    %48 = vector.broadcast %cst_26 : f32 to vector<512x32xf32>
    %49 = arith.maximumf %47, %48 : vector<512x32xf32>
    %c0_27 = arith.constant 0 : index
    %c0_28 = arith.constant 0 : index
    %50 = vector.load %arg6[%c0_27, %c0_28] : memref<32x128xf32, #tpu.memory_space<vmem>>, vector<32x128xf32>
    %cst_29 = arith.constant dense<0.000000e+00> : vector<512x128xf32>
    %51 = tpu.matmul %49, %50, %cst_29 {dimension_numbers = #tpu.dot_dimension_numbers<[1], [0], [0], [1], [0, 0, 1, 1], [], []>} : vector<512x32xf32>, vector<32x128xf32>, vector<512x128xf32> -> vector<512x128xf32>
    %52 = vector.extract_strided_slice %51 {offsets = [0, 0], sizes = [128, 128], strides = [1, 1]} : vector<512x128xf32> to vector<128x128xf32>
    %53 = tpu.transpose %52, [1, 0] : vector<128x128xf32> -> vector<128x128xf32>
    %54 = vector.extract_strided_slice %53 {offsets = [0, 0], sizes = [1, 128], strides = [1, 1]} : vector<128x128xf32> to vector<1x128xf32>
    %55 = vector.extract_strided_slice %51 {offsets = [128, 0], sizes = [128, 128], strides = [1, 1]} : vector<512x128xf32> to vector<128x128xf32>
    %56 = tpu.transpose %55, [1, 0] : vector<128x128xf32> -> vector<128x128xf32>
    %57 = vector.extract_strided_slice %56 {offsets = [0, 0], sizes = [1, 128], strides = [1, 1]} : vector<128x128xf32> to vector<1x128xf32>
    %58 = vector.extract_strided_slice %51 {offsets = [256, 0], sizes = [128, 128], strides = [1, 1]} : vector<512x128xf32> to vector<128x128xf32>
    %59 = tpu.transpose %58, [1, 0] : vector<128x128xf32> -> vector<128x128xf32>
    %60 = vector.extract_strided_slice %59 {offsets = [0, 0], sizes = [1, 128], strides = [1, 1]} : vector<128x128xf32> to vector<1x128xf32>
    %61 = vector.extract_strided_slice %51 {offsets = [384, 0], sizes = [128, 128], strides = [1, 1]} : vector<512x128xf32> to vector<128x128xf32>
    %62 = tpu.transpose %61, [1, 0] : vector<128x128xf32> -> vector<128x128xf32>
    %63 = vector.extract_strided_slice %62 {offsets = [0, 0], sizes = [1, 128], strides = [1, 1]} : vector<128x128xf32> to vector<1x128xf32>
    %64 = tpu.concatenate %54, %57, %60, %63 in 0 : vector<1x128xf32>, vector<1x128xf32>, vector<1x128xf32>, vector<1x128xf32> -> vector<4x128xf32>
    %65 = vector.broadcast %21 : vector<1x128xf32> to vector<4x128xf32>
    %66 = arith.addf %64, %65 : vector<4x128xf32>
    %67 = arith.negf %66 : vector<4x128xf32>
    %68 = math.exp %67 : vector<4x128xf32>
    %cst_30 = arith.constant 1.000000e+00 : f32
    %69 = vector.broadcast %cst_30 : f32 to vector<4x128xf32>
    %70 = arith.addf %69, %68 : vector<4x128xf32>
    %71 = arith.divf %69, %70 : vector<4x128xf32>
    %c0_31 = arith.constant 0 : index
    %c0_32 = arith.constant 0 : index
    %c0_33 = arith.constant 0 : index
    %72 = vector.load %arg8[%c0_31, %c0_32, %c0_33] : memref<1x4x128xf32, #tpu.memory_space<vmem>>, vector<1x4x128xf32>
    %73 = vector.shape_cast %72 : vector<1x4x128xf32> to vector<4x128xf32>
    %74 = vector.shape_cast %71 : vector<4x128xf32> to vector<1x4x128xf32>
    tpu.vector_store %arg8[%c0_31, %c0_32, %c0_33], %74 {strides = array<i32>} : memref<1x4x128xf32, #tpu.memory_space<vmem>>, vector<1x4x128xf32>,
    return
  }
  func.func @transform_0(%arg0: i32) -> (i32, i32) {
    %c0_i32 = arith.constant 0 : i32
    %c0_i32_0 = arith.constant 0 : i32
    return %arg0, %c0_i32 : i32, i32
  }
  func.func @transform_1(%arg0: i32) -> (i32, i32) {
    %c0_i32 = arith.constant 0 : i32
    %c0_i32_0 = arith.constant 0 : i32
    %c0_i32_1 = arith.constant 0 : i32
    return %c0_i32, %c0_i32_0 : i32, i32
  }
  func.func @transform_2(%arg0: i32) -> (i32, i32) {
    %c0_i32 = arith.constant 0 : i32
    %c0_i32_0 = arith.constant 0 : i32
    %c0_i32_1 = arith.constant 0 : i32
    return %c0_i32, %c0_i32_0 : i32, i32
  }
  func.func @transform_3(%arg0: i32) -> (i32, i32) {
    %c0_i32 = arith.constant 0 : i32
    %c0_i32_0 = arith.constant 0 : i32
    %c0_i32_1 = arith.constant 0 : i32
    return %c0_i32, %c0_i32_0 : i32, i32
  }
  func.func @transform_4(%arg0: i32) -> (i32, i32) {
    %c0_i32 = arith.constant 0 : i32
    %c0_i32_0 = arith.constant 0 : i32
    %c0_i32_1 = arith.constant 0 : i32
    return %c0_i32, %c0_i32_0 : i32, i32
  }
  func.func @transform_5(%arg0: i32) -> (i32, i32) {
    %c0_i32 = arith.constant 0 : i32
    %c0_i32_0 = arith.constant 0 : i32
    %c0_i32_1 = arith.constant 0 : i32
    return %c0_i32, %c0_i32_0 : i32, i32
  }
  func.func @transform_6(%arg0: i32) -> (i32, i32) {
    %c0_i32 = arith.constant 0 : i32
    %c0_i32_0 = arith.constant 0 : i32
    %c0_i32_1 = arith.constant 0 : i32
    return %c0_i32, %c0_i32_0 : i32, i32
  }
  func.func @transform_7(%arg0: i32) -> (i32, i32, i32) {
    %c0_i32 = arith.constant 0 : i32
    %c0_i32_0 = arith.constant 0 : i32
    %c0_i32_1 = arith.constant 0 : i32
    return %arg0, %c0_i32, %c0_i32_0 : i32, i32, i32
  }
}

</mosaic_0001>

<llo_original>
// kernel: tpu_custom_call.1
$region0: #{tpu_custom_call.1}
  #allocation0 [shape = 'u32[]', space=smem, size = 0x4, offset = 0x4, fixed_abs, tag = 'smem constant byte address 0x4 - core index']
  #allocation1 [shape = 'u32[144,128]{1,0:T(1,128)}', space=vmem, size = 0x12000, scoped, tag = 'internal scratch']
  %s0 = inlined_call_operand.vmem [shape: f32[512,16], index: 0, kind: input, shape index: {}]
  %s1 = inlined_call_operand.vmem [shape: f32[16,64], index: 1, kind: input, shape index: {}]
  %s2 = inlined_call_operand.vmem [shape: f32[64,64], index: 2, kind: input, shape index: {}]
  %s3 = inlined_call_operand.vmem [shape: f32[64,64], index: 3, kind: input, shape index: {}]
  %s4 = inlined_call_operand.vmem [shape: f32[64,32], index: 4, kind: input, shape index: {}]
  %s5 = inlined_call_operand.vmem [shape: f32[32,128], index: 5, kind: input, shape index: {}]
  %s6 = inlined_call_operand.vmem [shape: f32[8,128], index: 6, kind: input, shape index: {}]
  %s7 = inlined_call_operand.hbm [shape: f32[1,4,128], index: 7, kind: output, shape index: {}]
  %s8 = sld [smem:[#allocation0]]
  $region38: #{tpu_custom_call.1} parent=0
    _
  %s10 = ssub.s32 1, %s8
  %s11 = scalar_select 0, %s10, %s8
  $region1: #{tpu_custom_call.1} parent=0
    #allocation2 [shape = 'u8[2048]{0}', space=vmem, size = 0x800, scoped, tag = 'output window, operand 0, single buffered']
    #allocation3 [shape = 's32[1]{0}', space=sflag, size = 0x4, scoped, tag = 'scoped memory for tpu_custom_call.1']
    %12 = vsyncpa [#allocation3], 0
    // Predicated region
    $region2: #{tpu_custom_call.1} parent=1 // pred_check
      _
    $region3: #{tpu_custom_call.1} parent=1 // pred_check_branch
      %14 = sbr.rel (0) target = $region5
    $region4: #{tpu_custom_call.1} parent=1 // pred_region
      _
    $region5: #{tpu_custom_call.1} parent=1 // pred_fallthru
      _
    // Predicated region
    $region6: #{tpu_custom_call.1} parent=1 // pred_check
      _
    $region7: #{tpu_custom_call.1} parent=1 // pred_check_branch
      %16 = sbr.rel (0) target = $region9
    $region8: #{tpu_custom_call.1} parent=1 // pred_region
      _
    $region9: #{tpu_custom_call.1} parent=1 // pred_fallthru
      _
    // Predicated region
    $region10: #{tpu_custom_call.1} parent=1 // pred_check
      _
    $region11: #{tpu_custom_call.1} parent=1 // pred_check_branch
      %18 = sbr.rel (0) target = $region13
    $region12: #{tpu_custom_call.1} parent=1 // pred_region
      _
    $region13: #{tpu_custom_call.1} parent=1 // pred_fallthru
      _
    // Predicated region
    $region14: #{tpu_custom_call.1} parent=1 // pred_check
      _
    $region15: #{tpu_custom_call.1} parent=1 // pred_check_branch
      %20 = sbr.rel (0) target = $region17
    $region16: #{tpu_custom_call.1} parent=1 // pred_region
      _
    $region17: #{tpu_custom_call.1} parent=1 // pred_fallthru
      _
    // Predicated region
    $region18: #{tpu_custom_call.1} parent=1 // pred_check
      _
    $region19: #{tpu_custom_call.1} parent=1 // pred_check_branch
      %22 = sbr.rel (0) target = $region21
    $region20: #{tpu_custom_call.1} parent=1 // pred_region
      _
    $region21: #{tpu_custom_call.1} parent=1 // pred_fallthru
      _
    // Predicated region
    $region22: #{tpu_custom_call.1} parent=1 // pred_check
      _
    $region23: #{tpu_custom_call.1} parent=1 // pred_check_branch
      %24 = sbr.rel (0) target = $region25
    $region24: #{tpu_custom_call.1} parent=1 // pred_region
      _
    $region25: #{tpu_custom_call.1} parent=1 // pred_fallthru
      _
    // Predicated region
    $region26: #{tpu_custom_call.1} parent=1 // pred_check
      _
    $region27: #{tpu_custom_call.1} parent=1 // pred_check_branch
      %26 = sbr.rel (0) target = $region29
    $region28: #{tpu_custom_call.1} parent=1 // pred_region
      _
    $region29: #{tpu_custom_call.1} parent=1 // pred_fallthru
      _
    %v27 = vld [vmem:[%s6] sm:$0x1]
    %v28 = vld [vmem:[%s6 + $0x1] sm:$0x1]
    %v29 = vld [vmem:[%s6 + $0x2] sm:$0x1]
    %v30 = vld [vmem:[%s0] sm:$0xff]
    %v31 = vld [vmem:[%s0 + $0x8] sm:$0xff]
    %v32 = vld [vmem:[%s0 + $0x10] sm:$0xff]
    %v33 = vld [vmem:[%s0 + $0x18] sm:$0xff]
    %v34 = vld [vmem:[%s0 + $0x20] sm:$0xff]
    %v35 = vld [vmem:[%s0 + $0x28] sm:$0xff]
    %v36 = vld [vmem:[%s0 + $0x30] sm:$0xff]
    %v37 = vld [vmem:[%s0 + $0x38] sm:$0xff]
    %v38 = vld [vmem:[%s0 + $0x40] sm:$0xff]
    %v39 = vld [vmem:[%s0 + $0x48] sm:$0xff]
    %v40 = vld [vmem:[%s0 + $0x50] sm:$0xff]
    %v41 = vld [vmem:[%s0 + $0x58] sm:$0xff]
    %v42 = vld [vmem:[%s0 + $0x60] sm:$0xff]
    %v43 = vld [vmem:[%s0 + $0x68] sm:$0xff]
    %v44 = vld [vmem:[%s0 + $0x70] sm:$0xff]
    %v45 = vld [vmem:[%s0 + $0x78] sm:$0xff]
    %v46 = vld [vmem:[%s0 + $0x80] sm:$0xff]
    %v47 = vld [vmem:[%s0 + $0x88] sm:$0xff]
    %v48 = vld [vmem:[%s0 + $0x90] sm:$0xff]
    %v49 = vld [vmem:[%s0 + $0x98] sm:$0xff]
    %v50 = vld [vmem:[%s0 + $0xa0] sm:$0xff]
    %v51 = vld [vmem:[%s0 + $0xa8] sm:$0xff]
    %v52 = vld [vmem:[%s0 + $0xb0] sm:$0xff]
    %v53 = vld [vmem:[%s0 + $0xb8] sm:$0xff]
    %v54 = vld [vmem:[%s0 + $0xc0] sm:$0xff]
    %v55 = vld [vmem:[%s0 + $0xc8] sm:$0xff]
    %v56 = vld [vmem:[%s0 + $0xd0] sm:$0xff]
    %v57 = vld [vmem:[%s0 + $0xd8] sm:$0xff]
    %v58 = vld [vmem:[%s0 + $0xe0] sm:$0xff]
    %v59 = vld [vmem:[%s0 + $0xe8] sm:$0xff]
    %v60 = vld [vmem:[%s0 + $0xf0] sm:$0xff]
    %v61 = vld [vmem:[%s0 + $0xf8] sm:$0xff]
    %v62 = vld [vmem:[%s0 + $0x100] sm:$0xff]
    %v63 = vld [vmem:[%s0 + $0x108] sm:$0xff]
    %v64 = vld [vmem:[%s0 + $0x110] sm:$0xff]
    %v65 = vld [vmem:[%s0 + $0x118] sm:$0xff]
    %v66 = vld [vmem:[%s0 + $0x120] sm:$0xff]
    %v67 = vld [vmem:[%s0 + $0x128] sm:$0xff]
    %v68 = vld [vmem:[%s0 + $0x130] sm:$0xff]
    %v69 = vld [vmem:[%s0 + $0x138] sm:$0xff]
    %v70 = vld [vmem:[%s0 + $0x140] sm:$0xff]
    %v71 = vld [vmem:[%s0 + $0x148] sm:$0xff]
    %v72 = vld [vmem:[%s0 + $0x150] sm:$0xff]
    %v73 = vld [vmem:[%s0 + $0x158] sm:$0xff]
    %v74 = vld [vmem:[%s0 + $0x160] sm:$0xff]
    %v75 = vld [vmem:[%s0 + $0x168] sm:$0xff]
    %v76 = vld [vmem:[%s0 + $0x170] sm:$0xff]
    %v77 = vld [vmem:[%s0 + $0x178] sm:$0xff]
    %v78 = vld [vmem:[%s0 + $0x180] sm:$0xff]
    %v79 = vld [vmem:[%s0 + $0x188] sm:$0xff]
    %v80 = vld [vmem:[%s0 + $0x190] sm:$0xff]
    %v81 = vld [vmem:[%s0 + $0x198] sm:$0xff]
    %v82 = vld [vmem:[%s0 + $0x1a0] sm:$0xff]
    %v83 = vld [vmem:[%s0 + $0x1a8] sm:$0xff]
    %v84 = vld [vmem:[%s0 + $0x1b0] sm:$0xff]
    %v85 = vld [vmem:[%s0 + $0x1b8] sm:$0xff]
    %v86 = vld [vmem:[%s0 + $0x1c0] sm:$0xff]
    %v87 = vld [vmem:[%s0 + $0x1c8] sm:$0xff]
    %v88 = vld [vmem:[%s0 + $0x1d0] sm:$0xff]
    %v89 = vld [vmem:[%s0 + $0x1d8] sm:$0xff]
    %v90 = vld [vmem:[%s0 + $0x1e0] sm:$0xff]
    %v91 = vld [vmem:[%s0 + $0x1e8] sm:$0xff]
    %v92 = vld [vmem:[%s0 + $0x1f0] sm:$0xff]
    %v93 = vld [vmem:[%s0 + $0x1f8] sm:$0xff]
    %v94 = vld [vmem:[%s1] sm:$0xff]
    %v95 = vld [vmem:[%s1 + $0x8] sm:$0xff]
    %v96 = vlaneseq
    %v97 = vshrl.u32 %v96, 7
    %v98 = vsub.s32 0, %v97
    %v99 = vrot.slane %v27, %v98
    %vm100 = vcmask 130048
    %v102 = vsel %vm100, %v30, 0
    %v105 = vsel %vm100, %v31, 0
    %v108 = vsel %vm100, %v32, 0
    %v111 = vsel %vm100, %v33, 0
    %v114 = vsel %vm100, %v34, 0
    %v117 = vsel %vm100, %v35, 0
    %v120 = vsel %vm100, %v36, 0
    %v123 = vsel %vm100, %v37, 0
    %v126 = vsel %vm100, %v38, 0
    %v129 = vsel %vm100, %v39, 0
    %v132 = vsel %vm100, %v40, 0
    %v135 = vsel %vm100, %v41, 0
    %v138 = vsel %vm100, %v42, 0
    %v141 = vsel %vm100, %v43, 0
    %v144 = vsel %vm100, %v44, 0
    %v147 = vsel %vm100, %v45, 0
    %v150 = vsel %vm100, %v46, 0
    %v153 = vsel %vm100, %v47, 0
    %v156 = vsel %vm100, %v48, 0
    %v159 = vsel %vm100, %v49, 0
    %v162 = vsel %vm100, %v50, 0
    %v165 = vsel %vm100, %v51, 0
    %v168 = vsel %vm100, %v52, 0
    %v171 = vsel %vm100, %v53, 0
    %v174 = vsel %vm100, %v54, 0
    %v177 = vsel %vm100, %v55, 0
    %v180 = vsel %vm100, %v56, 0
    %v183 = vsel %vm100, %v57, 0
    %v186 = vsel %vm100, %v58, 0
    %v189 = vsel %vm100, %v59, 0
    %v192 = vsel %vm100, %v60, 0
    %v195 = vsel %vm100, %v61, 0
    %v198 = vsel %vm100, %v62, 0
    %v201 = vsel %vm100, %v63, 0
    %v204 = vsel %vm100, %v64, 0
    %v207 = vsel %vm100, %v65, 0
    %v210 = vsel %vm100, %v66, 0
    %v213 = vsel %vm100, %v67, 0
    %v216 = vsel %vm100, %v68, 0
    %v219 = vsel %vm100, %v69, 0
    %v222 = vsel %vm100, %v70, 0
    %v225 = vsel %vm100, %v71, 0
    %v228 = vsel %vm100, %v72, 0
    %v231 = vsel %vm100, %v73, 0
    %v234 = vsel %vm100, %v74, 0
    %v237 = vsel %vm100, %v75, 0
    %v240 = vsel %vm100, %v76, 0
    %v243 = vsel %vm100, %v77, 0
    %v246 = vsel %vm100, %v78, 0
    %v249 = vsel %vm100, %v79, 0
    %v252 = vsel %vm100, %v80, 0
    %v255 = vsel %vm100, %v81, 0
    %v258 = vsel %vm100, %v82, 0
    %v261 = vsel %vm100, %v83, 0
    %v264 = vsel %vm100, %v84, 0
    %v267 = vsel %vm100, %v85, 0
    %v270 = vsel %vm100, %v86, 0
    %v273 = vsel %vm100, %v87, 0
    %v276 = vsel %vm100, %v88, 0
    %v279 = vsel %vm100, %v89, 0
    %v282 = vsel %vm100, %v90, 0
    %v285 = vsel %vm100, %v91, 0
    %v288 = vsel %vm100, %v92, 0
    %v291 = vsel %vm100, %v93, 0
    %293 = vmatprep.subr.mxu0 0.0
    %294 = vmatpush1.msra.mxu0 %v94
    %295 = vmatprep.subr.mxu0 0.0
    %296 = vmatpush1.msra.mxu0 %v95
    %297 = vmatprep.subr.mxu0 0.0
    %298 = vmatpush1.msra.mxu0 0.0
    %299 = vmatprep.subr.mxu0 0.0
    %300 = vmatpush1.msra.mxu0 0.0
    %301 = vmatprep.subr.mxu0 0.0
    %302 = vmatpush1.msra.mxu0 0.0
    %303 = vmatprep.subr.mxu0 0.0
    %304 = vmatpush1.msra.mxu0 0.0
    %305 = vmatprep.subr.mxu0 0.0
    %306 = vmatpush1.msra.mxu0 0.0
    %307 = vmatprep.subr.mxu0 0.0
    %308 = vmatpush1.msra.mxu0 0.0
    %309 = vmatprep.subr.mxu0 0.0
    %310 = vmatpush1.msra.mxu0 0.0
    %311 = vmatprep.subr.mxu0 0.0
    %312 = vmatpush1.msra.mxu0 0.0
    %313 = vmatprep.subr.mxu0 0.0
    %314 = vmatpush1.msra.mxu0 0.0
    %315 = vmatprep.subr.mxu0 0.0
    %316 = vmatpush1.msra.mxu0 0.0
    %317 = vmatprep.subr.mxu0 0.0
    %318 = vmatpush1.msra.mxu0 0.0
    %319 = vmatprep.subr.mxu0 0.0
    %320 = vmatpush1.msra.mxu0 0.0
    %321 = vmatprep.subr.mxu0 0.0
    %322 = vmatpush1.msra.mxu0 0.0
    %323 = vmatprep.subr.mxu0 0.0
    %324 = vmatpush1.msra.mxu0 0.0
    %325 = vmatprep.subr.mxu0 0.0
    %326 = vmatpush1.msra.mxu0 0.0
    %327 = vmatprep.subr.mxu0 0.0
    %328 = vmatpush1.msra.mxu0 0.0
    %329 = vmatprep.subr.mxu0 0.0
    %330 = vmatpush1.msra.mxu0 0.0
    %331 = vmatprep.subr.mxu0 0.0
    %332 = vmatpush1.msra.mxu0 0.0
    %333 = vmatprep.subr.mxu0 0.0
    %334 = vmatpush1.msra.mxu0 0.0
    %335 = vmatprep.subr.mxu0 0.0
    %336 = vmatpush1.msra.mxu0 0.0
    %337 = vmatprep.subr.mxu0 0.0
    %338 = vmatpush1.msra.mxu0 0.0
    %339 = vmatprep.subr.mxu0 0.0
    %340 = vmatpush1.msra.mxu0 0.0
    %341 = vmatprep.subr.mxu0 0.0
    %342 = vmatpush1.msra.mxu0 0.0
    %343 = vmatprep.subr.mxu0 0.0
    %344 = vmatpush1.msra.mxu0 0.0
    %345 = vmatprep.subr.mxu0 0.0
    %346 = vmatpush1.msra.mxu0 0.0
    %347 = vmatprep.subr.mxu0 0.0
    %348 = vmatpush1.msra.mxu0 0.0
    %349 = vmatprep.subr.mxu0 0.0
    %350 = vmatpush1.msra.mxu0 0.0
    %351 = vmatprep.subr.mxu0 0.0
    %352 = vmatpush1.msra.mxu0 0.0
    %353 = vmatprep.subr.mxu0 0.0
    %354 = vmatpush1.msra.mxu0 0.0
    %355 = vmatprep.subr.mxu0 0.0
    %356 = vmatpush1.msra.mxu0 0.0
    %357 = vmatprep.mubr.f32.mxu0 0.0
    %358 = vmatmul.mubr.f32.gmra.mrb[0].mxu0 %v102
    %v359 = vpop.f32.mrb[0].mxu0
    %v360 = vadd.f32 %v99, %v359
    %v361 = vpop.f32.mrb[0].mxu0
    %362 = vmatprep.mubr.f32.mxu0 0.0
    %363 = vmatmul.mubr.f32.gmra.mrb[0].mxu0 %v105
    %v364 = vpop.f32.mrb[0].mxu0
    %v365 = vadd.f32 %v99, %v364
    %v366 = vpop.f32.mrb[0].mxu0
    %367 = vmatprep.mubr.f32.mxu0 0.0
    %368 = vmatmul.mubr.f32.gmra.mrb[0].mxu0 %v108
    %v369 = vpop.f32.mrb[0].mxu0
    %v370 = vadd.f32 %v99, %v369
    %v371 = vpop.f32.mrb[0].mxu0
    %372 = vmatprep.mubr.f32.mxu0 0.0
    %373 = vmatmul.mubr.f32.gmra.mrb[0].mxu0 %v111
    %v374 = vpop.f32.mrb[0].mxu0
    %v375 = vadd.f32 %v99, %v374
    %v376 = vpop.f32.mrb[0].mxu0
    %377 = vmatprep.mubr.f32.mxu0 0.0
    %378 = vmatmul.mubr.f32.gmra.mrb[0].mxu0 %v114
    %v379 = vpop.f32.mrb[0].mxu0
    %v380 = vadd.f32 %v99, %v379
    %v381 = vpop.f32.mrb[0].mxu0
    %382 = vmatprep.mubr.f32.mxu0 0.0
    %383 = vmatmul.mubr.f32.gmra.mrb[0].mxu0 %v117
    %v384 = vpop.f32.mrb[0].mxu0
    %v385 = vadd.f32 %v99, %v384
    %v386 = vpop.f32.mrb[0].mxu0
    %387 = vmatprep.mubr.f32.mxu0 0.0
    %388 = vmatmul.mubr.f32.gmra.mrb[0].mxu0 %v120
    %v389 = vpop.f32.mrb[0].mxu0
    %v390 = vadd.f32 %v99, %v389
    %v391 = vpop.f32.mrb[0].mxu0
    %392 = vmatprep.mubr.f32.mxu0 0.0
    %393 = vmatmul.mubr.f32.gmra.mrb[0].mxu0 %v123
    %v394 = vpop.f32.mrb[0].mxu0
    %v395 = vadd.f32 %v99, %v394
    %v396 = vpop.f32.mrb[0].mxu0
    %397 = vmatprep.mubr.f32.mxu0 0.0
    %398 = vmatmul.mubr.f32.gmra.mrb[0].mxu0 %v126
    %v399 = vpop.f32.mrb[0].mxu0
    %v400 = vadd.f32 %v99, %v399
    %v401 = vpop.f32.mrb[0].mxu0
    %402 = vmatprep.mubr.f32.mxu0 0.0
    %403 = vmatmul.mubr.f32.gmra.mrb[0].mxu0 %v129
    %v404 = vpop.f32.mrb[0].mxu0
    %v405 = vadd.f32 %v99, %v404
    %v406 = vpop.f32.mrb[0].mxu0
    %407 = vmatprep.mubr.f32.mxu0 0.0
    %408 = vmatmul.mubr.f32.gmra.mrb[0].mxu0 %v132
    %v409 = vpop.f32.mrb[0].mxu0
    %v410 = vadd.f32 %v99, %v409
    %v411 = vpop.f32.mrb[0].mxu0
    %412 = vmatprep.mubr.f32.mxu0 0.0
    %413 = vmatmul.mubr.f32.gmra.mrb[0].mxu0 %v135
    %v414 = vpop.f32.mrb[0].mxu0
    %v415 = vadd.f32 %v99, %v414
    %v416 = vpop.f32.mrb[0].mxu0
    %417 = vmatprep.mubr.f32.mxu0 0.0
    %418 = vmatmul.mubr.f32.gmra.mrb[0].mxu0 %v138
    %v419 = vpop.f32.mrb[0].mxu0
    %v420 = vadd.f32 %v99, %v419
    %v421 = vpop.f32.mrb[0].mxu0
    %422 = vmatprep.mubr.f32.mxu0 0.0
    %423 = vmatmul.mubr.f32.gmra.mrb[0].mxu0 %v141
    %v424 = vpop.f32.mrb[0].mxu0
    %v425 = vadd.f32 %v99, %v424
    %v426 = vpop.f32.mrb[0].mxu0
    %427 = vmatprep.mubr.f32.mxu0 0.0
    %428 = vmatmul.mubr.f32.gmra.mrb[0].mxu0 %v144
    %v429 = vpop.f32.mrb[0].mxu0
    %v430 = vadd.f32 %v99, %v429
    %v431 = vpop.f32.mrb[0].mxu0
    %432 = vmatprep.mubr.f32.mxu0 0.0
    %433 = vmatmul.mubr.f32.gmra.mrb[0].mxu0 %v147
    %v434 = vpop.f32.mrb[0].mxu0
    %v435 = vadd.f32 %v99, %v434
    %v436 = vpop.f32.mrb[0].mxu0
    %437 = vmatprep.mubr.f32.mxu0 0.0
    %438 = vmatmul.mubr.f32.gmra.mrb[0].mxu0 %v150
    %v439 = vpop.f32.mrb[0].mxu0
    %v440 = vadd.f32 %v99, %v439
    %v441 = vpop.f32.mrb[0].mxu0
    %442 = vmatprep.mubr.f32.mxu0 0.0
    %443 = vmatmul.mubr.f32.gmra.mrb[0].mxu0 %v153
    %v444 = vpop.f32.mrb[0].mxu0
    %v445 = vadd.f32 %v99, %v444
    %v446 = vpop.f32.mrb[0].mxu0
    %447 = vmatprep.mubr.f32.mxu0 0.0
    %448 = vmatmul.mubr.f32.gmra.mrb[0].mxu0 %v156
    %v449 = vpop.f32.mrb[0].mxu0
    %v450 = vadd.f32 %v99, %v449
    %v451 = vpop.f32.mrb[0].mxu0
    %452 = vmatprep.mubr.f32.mxu0 0.0
    %453 = vmatmul.mubr.f32.gmra.mrb[0].mxu0 %v159
    %v454 = vpop.f32.mrb[0].mxu0
    %v455 = vadd.f32 %v99, %v454
    %v456 = vpop.f32.mrb[0].mxu0
    %457 = vmatprep.mubr.f32.mxu0 0.0
    %458 = vmatmul.mubr.f32.gmra.mrb[0].mxu0 %v162
    %v459 = vpop.f32.mrb[0].mxu0
    %v460 = vadd.f32 %v99, %v459
    %v461 = vpop.f32.mrb[0].mxu0
    %462 = vmatprep.mubr.f32.mxu0 0.0
    %463 = vmatmul.mubr.f32.gmra.mrb[0].mxu0 %v165
    %v464 = vpop.f32.mrb[0].mxu0
    %v465 = vadd.f32 %v99, %v464
    %v466 = vpop.f32.mrb[0].mxu0
    %467 = vmatprep.mubr.f32.mxu0 0.0
    %468 = vmatmul.mubr.f32.gmra.mrb[0].mxu0 %v168
    %v469 = vpop.f32.mrb[0].mxu0
    %v470 = vadd.f32 %v99, %v469
    %v471 = vpop.f32.mrb[0].mxu0
    %472 = vmatprep.mubr.f32.mxu0 0.0
    %473 = vmatmul.mubr.f32.gmra.mrb[0].mxu0 %v171
    %v474 = vpop.f32.mrb[0].mxu0
    %v475 = vadd.f32 %v99, %v474
    %v476 = vpop.f32.mrb[0].mxu0
    %477 = vmatprep.mubr.f32.mxu0 0.0
    %478 = vmatmul.mubr.f32.gmra.mrb[0].mxu0 %v174
    %v479 = vpop.f32.mrb[0].mxu0
    %v480 = vadd.f32 %v99, %v479
    %v481 = vpop.f32.mrb[0].mxu0
    %482 = vmatprep.mubr.f32.mxu0 0.0
    %483 = vmatmul.mubr.f32.gmra.mrb[0].mxu0 %v177
    %v484 = vpop.f32.mrb[0].mxu0
    %v485 = vadd.f32 %v99, %v484
    %v486 = vpop.f32.mrb[0].mxu0
    %487 = vmatprep.mubr.f32.mxu0 0.0
    %488 = vmatmul.mubr.f32.gmra.mrb[0].mxu0 %v180
    %v489 = vpop.f32.mrb[0].mxu0
    %v490 = vadd.f32 %v99, %v489
    %v491 = vpop.f32.mrb[0].mxu0
    %492 = vmatprep.mubr.f32.mxu0 0.0
    %493 = vmatmul.mubr.f32.gmra.mrb[0].mxu0 %v183
    %v494 = vpop.f32.mrb[0].mxu0
    %v495 = vadd.f32 %v99, %v494
    %v496 = vpop.f32.mrb[0].mxu0
    %497 = vmatprep.mubr.f32.mxu0 0.0
    %498 = vmatmul.mubr.f32.gmra.mrb[0].mxu0 %v186
    %v499 = vpop.f32.mrb[0].mxu0
    %v500 = vadd.f32 %v99, %v499
    %v501 = vpop.f32.mrb[0].mxu0
    %502 = vmatprep.mubr.f32.mxu0 0.0
    %503 = vmatmul.mubr.f32.gmra.mrb[0].mxu0 %v189
    %v504 = vpop.f32.mrb[0].mxu0
    %v505 = vadd.f32 %v99, %v504
    %v506 = vpop.f32.mrb[0].mxu0
    %507 = vmatprep.mubr.f32.mxu0 0.0
    %508 = vmatmul.mubr.f32.gmra.mrb[0].mxu0 %v192
    %v509 = vpop.f32.mrb[0].mxu0
    %v510 = vadd.f32 %v99, %v509
    %v511 = vpop.f32.mrb[0].mxu0
    %512 = vmatprep.mubr.f32.mxu0 0.0
    %513 = vmatmul.mubr.f32.gmra.mrb[0].mxu0 %v195
    %v514 = vpop.f32.mrb[0].mxu0
    %v515 = vadd.f32 %v99, %v514
    %v516 = vpop.f32.mrb[0].mxu0
    %517 = vmatprep.mubr.f32.mxu0 0.0
    %518 = vmatmul.mubr.f32.gmra.mrb[0].mxu0 %v198
    %v519 = vpop.f32.mrb[0].mxu0
    %v520 = vadd.f32 %v99, %v519
    %v521 = vpop.f32.mrb[0].mxu0
    %522 = vmatprep.mubr.f32.mxu0 0.0
    %523 = vmatmul.mubr.f32.gmra.mrb[0].mxu0 %v201
    %v524 = vpop.f32.mrb[0].mxu0
    %v525 = vadd.f32 %v99, %v524
    %v526 = vpop.f32.mrb[0].mxu0
    %527 = vmatprep.mubr.f32.mxu0 0.0
    %528 = vmatmul.mubr.f32.gmra.mrb[0].mxu0 %v204
    %v529 = vpop.f32.mrb[0].mxu0
    %v530 = vadd.f32 %v99, %v529
    %v531 = vpop.f32.mrb[0].mxu0
    %532 = vmatprep.mubr.f32.mxu0 0.0
    %533 = vmatmul.mubr.f32.gmra.mrb[0].mxu0 %v207
    %v534 = vpop.f32.mrb[0].mxu0
    %v535 = vadd.f32 %v99, %v534
    %v536 = vpop.f32.mrb[0].mxu0
    %537 = vmatprep.mubr.f32.mxu0 0.0
    %538 = vmatmul.mubr.f32.gmra.mrb[0].mxu0 %v210
    %v539 = vpop.f32.mrb[0].mxu0
    %v540 = vadd.f32 %v99, %v539
    %v541 = vpop.f32.mrb[0].mxu0
    %542 = vmatprep.mubr.f32.mxu0 0.0
    %543 = vmatmul.mubr.f32.gmra.mrb[0].mxu0 %v213
    %v544 = vpop.f32.mrb[0].mxu0
    %v545 = vadd.f32 %v99, %v544
    %v546 = vpop.f32.mrb[0].mxu0
    %547 = vmatprep.mubr.f32.mxu0 0.0
    %548 = vmatmul.mubr.f32.gmra.mrb[0].mxu0 %v216
    %v549 = vpop.f32.mrb[0].mxu0
    %v550 = vadd.f32 %v99, %v549
    %v551 = vpop.f32.mrb[0].mxu0
    %552 = vmatprep.mubr.f32.mxu0 0.0
    %553 = vmatmul.mubr.f32.gmra.mrb[0].mxu0 %v219
    %v554 = vpop.f32.mrb[0].mxu0
    %v555 = vadd.f32 %v99, %v554
    %v556 = vpop.f32.mrb[0].mxu0
    %557 = vmatprep.mubr.f32.mxu0 0.0
    %558 = vmatmul.mubr.f32.gmra.mrb[0].mxu0 %v222
    %v559 = vpop.f32.mrb[0].mxu0
    %v560 = vadd.f32 %v99, %v559
    %v561 = vpop.f32.mrb[0].mxu0
    %562 = vmatprep.mubr.f32.mxu0 0.0
    %563 = vmatmul.mubr.f32.gmra.mrb[0].mxu0 %v225
    %v564 = vpop.f32.mrb[0].mxu0
    %v565 = vadd.f32 %v99, %v564
    %v566 = vpop.f32.mrb[0].mxu0
    %567 = vmatprep.mubr.f32.mxu0 0.0
    %568 = vmatmul.mubr.f32.gmra.mrb[0].mxu0 %v228
    %v569 = vpop.f32.mrb[0].mxu0
    %v570 = vadd.f32 %v99, %v569
    %v571 = vpop.f32.mrb[0].mxu0
    %572 = vmatprep.mubr.f32.mxu0 0.0
    %573 = vmatmul.mubr.f32.gmra.mrb[0].mxu0 %v231
    %v574 = vpop.f32.mrb[0].mxu0
    %v575 = vadd.f32 %v99, %v574
    %v576 = vpop.f32.mrb[0].mxu0
    %577 = vmatprep.mubr.f32.mxu0 0.0
    %578 = vmatmul.mubr.f32.gmra.mrb[0].mxu0 %v234
    %v579 = vpop.f32.mrb[0].mxu0
    %v580 = vadd.f32 %v99, %v579
    %v581 = vpop.f32.mrb[0].mxu0
    %582 = vmatprep.mubr.f32.mxu0 0.0
    %583 = vmatmul.mubr.f32.gmra.mrb[0].mxu0 %v237
    %v584 = vpop.f32.mrb[0].mxu0
    %v585 = vadd.f32 %v99, %v584
    %v586 = vpop.f32.mrb[0].mxu0
    %587 = vmatprep.mubr.f32.mxu0 0.0
    %588 = vmatmul.mubr.f32.gmra.mrb[0].mxu0 %v240
    %v589 = vpop.f32.mrb[0].mxu0
    %v590 = vadd.f32 %v99, %v589
    %v591 = vpop.f32.mrb[0].mxu0
    %592 = vmatprep.mubr.f32.mxu0 0.0
    %593 = vmatmul.mubr.f32.gmra.mrb[0].mxu0 %v243
    %v594 = vpop.f32.mrb[0].mxu0
    %v595 = vadd.f32 %v99, %v594
    %v596 = vpop.f32.mrb[0].mxu0
    %597 = vmatprep.mubr.f32.mxu0 0.0
    %598 = vmatmul.mubr.f32.gmra.mrb[0].mxu0 %v246
    %v599 = vpop.f32.mrb[0].mxu0
    %v600 = vadd.f32 %v99, %v599
    %v601 = vpop.f32.mrb[0].mxu0
    %602 = vmatprep.mubr.f32.mxu0 0.0
    %603 = vmatmul.mubr.f32.gmra.mrb[0].mxu0 %v249
    %v604 = vpop.f32.mrb[0].mxu0
    %v605 = vadd.f32 %v99, %v604
    %v606 = vpop.f32.mrb[0].mxu0
    %607 = vmatprep.mubr.f32.mxu0 0.0
    %608 = vmatmul.mubr.f32.gmra.mrb[0].mxu0 %v252
    %v609 = vpop.f32.mrb[0].mxu0
    %v610 = vadd.f32 %v99, %v609
    %v611 = vpop.f32.mrb[0].mxu0
    %612 = vmatprep.mubr.f32.mxu0 0.0
    %613 = vmatmul.mubr.f32.gmra.mrb[0].mxu0 %v255
    %v614 = vpop.f32.mrb[0].mxu0
    %v615 = vadd.f32 %v99, %v614
    %v616 = vpop.f32.mrb[0].mxu0
    %617 = vmatprep.mubr.f32.mxu0 0.0
    %618 = vmatmul.mubr.f32.gmra.mrb[0].mxu0 %v258
    %v619 = vpop.f32.mrb[0].mxu0
    %v620 = vadd.f32 %v99, %v619
    %v621 = vpop.f32.mrb[0].mxu0
    %622 = vmatprep.mubr.f32.mxu0 0.0
    %623 = vmatmul.mubr.f32.gmra.mrb[0].mxu0 %v261
    %v624 = vpop.f32.mrb[0].mxu0
    %v625 = vadd.f32 %v99, %v624
    %v626 = vpop.f32.mrb[0].mxu0
    %627 = vmatprep.mubr.f32.mxu0 0.0
    %628 = vmatmul.mubr.f32.gmra.mrb[0].mxu0 %v264
    %v629 = vpop.f32.mrb[0].mxu0
    %v630 = vadd.f32 %v99, %v629
    %v631 = vpop.f32.mrb[0].mxu0
    %632 = vmatprep.mubr.f32.mxu0 0.0
    %633 = vmatmul.mubr.f32.gmra.mrb[0].mxu0 %v267
    %v634 = vpop.f32.mrb[0].mxu0
    %v635 = vadd.f32 %v99, %v634
    %v636 = vpop.f32.mrb[0].mxu0
    %637 = vmatprep.mubr.f32.mxu0 0.0
    %638 = vmatmul.mubr.f32.gmra.mrb[0].mxu0 %v270
    %v639 = vpop.f32.mrb[0].mxu0
    %v640 = vadd.f32 %v99, %v639
    %v641 = vpop.f32.mrb[0].mxu0
    %642 = vmatprep.mubr.f32.mxu0 0.0
    %643 = vmatmul.mubr.f32.gmra.mrb[0].mxu0 %v273
    %v644 = vpop.f32.mrb[0].mxu0
    %v645 = vadd.f32 %v99, %v644
    %v646 = vpop.f32.mrb[0].mxu0
    %647 = vmatprep.mubr.f32.mxu0 0.0
    %648 = vmatmul.mubr.f32.gmra.mrb[0].mxu0 %v276
    %v649 = vpop.f32.mrb[0].mxu0
    %v650 = vadd.f32 %v99, %v649
    %v651 = vpop.f32.mrb[0].mxu0
    %652 = vmatprep.mubr.f32.mxu0 0.0
    %653 = vmatmul.mubr.f32.gmra.mrb[0].mxu0 %v279
    %v654 = vpop.f32.mrb[0].mxu0
    %v655 = vadd.f32 %v99, %v654
    %v656 = vpop.f32.mrb[0].mxu0
    %657 = vmatprep.mubr.f32.mxu0 0.0
    %658 = vmatmul.mubr.f32.gmra.mrb[0].mxu0 %v282
    %v659 = vpop.f32.mrb[0].mxu0
    %v660 = vadd.f32 %v99, %v659
    %v661 = vpop.f32.mrb[0].mxu0
    %662 = vmatprep.mubr.f32.mxu0 0.0
    %663 = vmatmul.mubr.f32.gmra.mrb[0].mxu0 %v285
    %v664 = vpop.f32.mrb[0].mxu0
    %v665 = vadd.f32 %v99, %v664
    %v666 = vpop.f32.mrb[0].mxu0
    %667 = vmatprep.mubr.f32.mxu0 0.0
    %668 = vmatmul.mubr.f32.gmra.mrb[0].mxu0 %v288
    %v669 = vpop.f32.mrb[0].mxu0
    %v670 = vadd.f32 %v99, %v669
    %v671 = vpop.f32.mrb[0].mxu0
    %672 = vmatprep.mubr.f32.mxu0 0.0
    %673 = vmatmul.mubr.f32.gmra.mrb[0].mxu0 %v291
    %v674 = vpop.f32.mrb[0].mxu0
    %v675 = vadd.f32 %v99, %v674
    %v676 = vpop.f32.mrb[0].mxu0
    %677 = vdwg.mxu0
    %v678 = vmax.f32 %v360, 0.0
    %v679 = vmax.f32 %v365, 0.0
    %v680 = vmax.f32 %v370, 0.0
    %v681 = vmax.f32 %v375, 0.0
    %v682 = vmax.f32 %v380, 0.0
    %v683 = vmax.f32 %v385, 0.0
    %v684 = vmax.f32 %v390, 0.0
    %v685 = vmax.f32 %v395, 0.0
    %v686 = vmax.f32 %v400, 0.0
    %v687 = vmax.f32 %v405, 0.0
    %v688 = vmax.f32 %v410, 0.0
    %v689 = vmax.f32 %v415, 0.0
    %v690 = vmax.f32 %v420, 0.0
    %v691 = vmax.f32 %v425, 0.0
    %v692 = vmax.f32 %v430, 0.0
    %v693 = vmax.f32 %v435, 0.0
    %v694 = vmax.f32 %v440, 0.0
    %v695 = vmax.f32 %v445, 0.0
    %v696 = vmax.f32 %v450, 0.0
    %v697 = vmax.f32 %v455, 0.0
    %v698 = vmax.f32 %v460, 0.0
    %v699 = vmax.f32 %v465, 0.0
    %v700 = vmax.f32 %v470, 0.0
    %v701 = vmax.f32 %v475, 0.0
    %v702 = vmax.f32 %v480, 0.0
    %v703 = vmax.f32 %v485, 0.0
    %v704 = vmax.f32 %v490, 0.0
    %v705 = vmax.f32 %v495, 0.0
    %v706 = vmax.f32 %v500, 0.0
    %v707 = vmax.f32 %v505, 0.0
    %v708 = vmax.f32 %v510, 0.0
    %v709 = vmax.f32 %v515, 0.0
    %v710 = vmax.f32 %v520, 0.0
    %v711 = vmax.f32 %v525, 0.0
    %v712 = vmax.f32 %v530, 0.0
    %v713 = vmax.f32 %v535, 0.0
    %v714 = vmax.f32 %v540, 0.0
    %v715 = vmax.f32 %v545, 0.0
    %v716 = vmax.f32 %v550, 0.0
    %v717 = vmax.f32 %v555, 0.0
    %v718 = vmax.f32 %v560, 0.0
    %v719 = vmax.f32 %v565, 0.0
    %v720 = vmax.f32 %v570, 0.0
    %v721 = vmax.f32 %v575, 0.0
    %v722 = vmax.f32 %v580, 0.0
    %v723 = vmax.f32 %v585, 0.0
    %v724 = vmax.f32 %v590, 0.0
    %v725 = vmax.f32 %v595, 0.0
    %v726 = vmax.f32 %v600, 0.0
    %v727 = vmax.f32 %v605, 0.0
    %v728 = vmax.f32 %v610, 0.0
    %v729 = vmax.f32 %v615, 0.0
    %v730 = vmax.f32 %v620, 0.0
    %v731 = vmax.f32 %v625, 0.0
    %v732 = vmax.f32 %v630, 0.0
    %v733 = vmax.f32 %v635, 0.0
    %v734 = vmax.f32 %v640, 0.0
    %v735 = vmax.f32 %v645, 0.0
    %v736 = vmax.f32 %v650, 0.0
    %v737 = vmax.f32 %v655, 0.0
    %v738 = vmax.f32 %v660, 0.0
    %v739 = vmax.f32 %v665, 0.0
    %v740 = vmax.f32 %v670, 0.0
    %v741 = vmax.f32 %v675, 0.0
    %v742 = vld [vmem:[%s2] sm:$0xff]
    %v743 = vld [vmem:[%s2 + $0x8] sm:$0xff]
    %v744 = vld [vmem:[%s2 + $0x10] sm:$0xff]
    %v745 = vld [vmem:[%s2 + $0x18] sm:$0xff]
    %v746 = vld [vmem:[%s2 + $0x20] sm:$0xff]
    %v747 = vld [vmem:[%s2 + $0x28] sm:$0xff]
    %v748 = vld [vmem:[%s2 + $0x30] sm:$0xff]
    %v749 = vld [vmem:[%s2 + $0x38] sm:$0xff]
    %v750 = vlaneseq
    %v751 = vshrl.u32 %v750, 7
    %v752 = vsub.s32 0, %v751
    %v753 = vrot.slane %v28, %v752
    %vm754 = vcmask 523264
    %v756 = vsel %vm754, %v678, 0
    %v759 = vsel %vm754, %v679, 0
    %v762 = vsel %vm754, %v680, 0
    %v765 = vsel %vm754, %v681, 0
    %v768 = vsel %vm754, %v682, 0
    %v771 = vsel %vm754, %v683, 0
    %v774 = vsel %vm754, %v684, 0
    %v777 = vsel %vm754, %v685, 0
    %v780 = vsel %vm754, %v686, 0
    %v783 = vsel %vm754, %v687, 0
    %v786 = vsel %vm754, %v688, 0
    %v789 = vsel %vm754, %v689, 0
    %v792 = vsel %vm754, %v690, 0
    %v795 = vsel %vm754, %v691, 0
    %v798 = vsel %vm754, %v692, 0
    %v801 = vsel %vm754, %v693, 0
    %v804 = vsel %vm754, %v694, 0
    %v807 = vsel %vm754, %v695, 0
    %v810 = vsel %vm754, %v696, 0
    %v813 = vsel %vm754, %v697, 0
    %v816 = vsel %vm754, %v698, 0
    %v819 = vsel %vm754, %v699, 0
    %v822 = vsel %vm754, %v700, 0
    %v825 = vsel %vm754, %v701, 0
    %v828 = vsel %vm754, %v702, 0
    %v831 = vsel %vm754, %v703, 0
    %v834 = vsel %vm754, %v704, 0
    %v837 = vsel %vm754, %v705, 0
    %v840 = vsel %vm754, %v706, 0
    %v843 = vsel %vm754, %v707, 0
    %v846 = vsel %vm754, %v708, 0
    %v849 = vsel %vm754, %v709, 0
    %v852 = vsel %vm754, %v710, 0
    %v855 = vsel %vm754, %v711, 0
    %v858 = vsel %vm754, %v712, 0
    %v861 = vsel %vm754, %v713, 0
    %v864 = vsel %vm754, %v714, 0
    %v867 = vsel %vm754, %v715, 0
    %v870 = vsel %vm754, %v716, 0
    %v873 = vsel %vm754, %v717, 0
    %v876 = vsel %vm754, %v718, 0
    %v879 = vsel %vm754, %v719, 0
    %v882 = vsel %vm754, %v720, 0
    %v885 = vsel %vm754, %v721, 0
    %v888 = vsel %vm754, %v722, 0
    %v891 = vsel %vm754, %v723, 0
    %v894 = vsel %vm754, %v724, 0
    %v897 = vsel %vm754, %v725, 0
    %v900 = vsel %vm754, %v726, 0
    %v903 = vsel %vm754, %v727, 0
    %v906 = vsel %vm754, %v728, 0
    %v909 = vsel %vm754, %v729, 0
    %v912 = vsel %vm754, %v730, 0
    %v915 = vsel %vm754, %v731, 0
    %v918 = vsel %vm754, %v732, 0
    %v921 = vsel %vm754, %v733, 0
    %v924 = vsel %vm754, %v734, 0
    %v927 = vsel %vm754, %v735, 0
    %v930 = vsel %vm754, %v736, 0
    %v933 = vsel %vm754, %v737, 0
    %v936 = vsel %vm754, %v738, 0
    %v939 = vsel %vm754, %v739, 0
    %v942 = vsel %vm754, %v740, 0
    %v945 = vsel %vm754, %v741, 0
    %947 = vmatprep.subr.mxu0 0.0
    %948 = vmatpush1.msra.mxu0 %v742
    %949 = vmatprep.subr.mxu0 0.0
    %950 = vmatpush1.msra.mxu0 %v743
    %951 = vmatprep.subr.mxu0 0.0
    %952 = vmatpush1.msra.mxu0 %v744
    %953 = vmatprep.subr.mxu0 0.0
    %954 = vmatpush1.msra.mxu0 %v745
    %955 = vmatprep.subr.mxu0 0.0
    %956 = vmatpush1.msra.mxu0 %v746
    %957 = vmatprep.subr.mxu0 0.0
    %958 = vmatpush1.msra.mxu0 %v747
    %959 = vmatprep.subr.mxu0 0.0
    %960 = vmatpush1.msra.mxu0 %v748
    %961 = vmatprep.subr.mxu0 0.0
    %962 = vmatpush1.msra.mxu0 %v749
    %963 = vmatprep.subr.mxu0 0.0
    %964 = vmatpush1.msra.mxu0 0.0
    %965 = vmatprep.subr.mxu0 0.0
    %966 = vmatpush1.msra.mxu0 0.0
    %967 = vmatprep.subr.mxu0 0.0
    %968 = vmatpush1.msra.mxu0 0.0
    %969 = vmatprep.subr.mxu0 0.0
    %970 = vmatpush1.msra.mxu0 0.0
    %971 = vmatprep.subr.mxu0 0.0
    %972 = vmatpush1.msra.mxu0 0.0
    %973 = vmatprep.subr.mxu0 0.0
    %974 = vmatpush1.msra.mxu0 0.0
    %975 = vmatprep.subr.mxu0 0.0
    %976 = vmatpush1.msra.mxu0 0.0
    %977 = vmatprep.subr.mxu0 0.0
    %978 = vmatpush1.msra.mxu0 0.0
    %979 = vmatprep.subr.mxu0 0.0
    %980 = vmatpush1.msra.mxu0 0.0
    %981 = vmatprep.subr.mxu0 0.0
    %982 = vmatpush1.msra.mxu0 0.0
    %983 = vmatprep.subr.mxu0 0.0
    %984 = vmatpush1.msra.mxu0 0.0
    %985 = vmatprep.subr.mxu0 0.0
    %986 = vmatpush1.msra.mxu0 0.0
    %987 = vmatprep.subr.mxu0 0.0
    %988 = vmatpush1.msra.mxu0 0.0
    %989 = vmatprep.subr.mxu0 0.0
    %990 = vmatpush1.msra.mxu0 0.0
    %991 = vmatprep.subr.mxu0 0.0
    %992 = vmatpush1.msra.mxu0 0.0
    %993 = vmatprep.subr.mxu0 0.0
    %994 = vmatpush1.msra.mxu0 0.0
    %995 = vmatprep.subr.mxu0 0.0
    %996 = vmatpush1.msra.mxu0 0.0
    %997 = vmatprep.subr.mxu0 0.0
    %998 = vmatpush1.msra.mxu0 0.0
    %999 = vmatprep.subr.mxu0 0.0
    %1000 = vmatpush1.msra.mxu0 0.0
    %1001 = vmatprep.subr.mxu0 0.0
    %1002 = vmatpush1.msra.mxu0 0.0
    %1003 = vmatprep.subr.mxu0 0.0
    %1004 = vmatpush1.msra.mxu0 0.0
    %1005 = vmatprep.subr.mxu0 0.0
    %1006 = vmatpush1.msra.mxu0 0.0
    %1007 = vmatprep.subr.mxu0 0.0
    %1008 = vmatpush1.msra.mxu0 0.0
    %1009 = vmatprep.subr.mxu0 0.0
    %1010 = vmatpush1.msra.mxu0 0.0
    %1011 = vmatprep.mubr.f32.mxu0 0.0
    %1012 = vmatmul.mubr.f32.gmra.mrb[0].mxu0 %v756
    %v1013 = vpop.f32.mrb[0].mxu0
    %v1014 = vadd.f32 %v753, %v1013
    %v1015 = vpop.f32.mrb[0].mxu0
    %1016 = vmatprep.mubr.f32.mxu0 0.0
    %1017 = vmatmul.mubr.f32.gmra.mrb[0].mxu0 %v759
    %v1018 = vpop.f32.mrb[0].mxu0
    %v1019 = vadd.f32 %v753, %v1018
    %v1020 = vpop.f32.mrb[0].mxu0
    %1021 = vmatprep.mubr.f32.mxu0 0.0
    %1022 = vmatmul.mubr.f32.gmra.mrb[0].mxu0 %v762
    %v1023 = vpop.f32.mrb[0].mxu0
    %v1024 = vadd.f32 %v753, %v1023
    %v1025 = vpop.f32.mrb[0].mxu0
    %1026 = vmatprep.mubr.f32.mxu0 0.0
    %1027 = vmatmul.mubr.f32.gmra.mrb[0].mxu0 %v765
    %v1028 = vpop.f32.mrb[0].mxu0
    %v1029 = vadd.f32 %v753, %v1028
    %v1030 = vpop.f32.mrb[0].mxu0
    %1031 = vmatprep.mubr.f32.mxu0 0.0
    %1032 = vmatmul.mubr.f32.gmra.mrb[0].mxu0 %v768
    %v1033 = vpop.f32.mrb[0].mxu0
    %v1034 = vadd.f32 %v753, %v1033
    %v1035 = vpop.f32.mrb[0].mxu0
    %1036 = vmatprep.mubr.f32.mxu0 0.0
    %1037 = vmatmul.mubr.f32.gmra.mrb[0].mxu0 %v771
    %v1038 = vpop.f32.mrb[0].mxu0
    %v1039 = vadd.f32 %v753, %v1038
    %v1040 = vpop.f32.mrb[0].mxu0
    %1041 = vmatprep.mubr.f32.mxu0 0.0
    %1042 = vmatmul.mubr.f32.gmra.mrb[0].mxu0 %v774
    %v1043 = vpop.f32.mrb[0].mxu0
    %v1044 = vadd.f32 %v753, %v1043
    %v1045 = vpop.f32.mrb[0].mxu0
    %1046 = vmatprep.mubr.f32.mxu0 0.0
    %1047 = vmatmul.mubr.f32.gmra.mrb[0].mxu0 %v777
    %v1048 = vpop.f32.mrb[0].mxu0
    %v1049 = vadd.f32 %v753, %v1048
    %v1050 = vpop.f32.mrb[0].mxu0
    %1051 = vmatprep.mubr.f32.mxu0 0.0
    %1052 = vmatmul.mubr.f32.gmra.mrb[0].mxu0 %v780
    %v1053 = vpop.f32.mrb[0].mxu0
    %v1054 = vadd.f32 %v753, %v1053
    %v1055 = vpop.f32.mrb[0].mxu0
    %1056 = vmatprep.mubr.f32.mxu0 0.0
    %1057 = vmatmul.mubr.f32.gmra.mrb[0].mxu0 %v783
    %v1058 = vpop.f32.mrb[0].mxu0
    %v1059 = vadd.f32 %v753, %v1058
    %v1060 = vpop.f32.mrb[0].mxu0
    %1061 = vmatprep.mubr.f32.mxu0 0.0
    %1062 = vmatmul.mubr.f32.gmra.mrb[0].mxu0 %v786
    %v1063 = vpop.f32.mrb[0].mxu0
    %v1064 = vadd.f32 %v753, %v1063
    %v1065 = vpop.f32.mrb[0].mxu0
    %1066 = vmatprep.mubr.f32.mxu0 0.0
    %1067 = vmatmul.mubr.f32.gmra.mrb[0].mxu0 %v789
    %v1068 = vpop.f32.mrb[0].mxu0
    %v1069 = vadd.f32 %v753, %v1068
    %v1070 = vpop.f32.mrb[0].mxu0
    %1071 = vmatprep.mubr.f32.mxu0 0.0
    %1072 = vmatmul.mubr.f32.gmra.mrb[0].mxu0 %v792
    %v1073 = vpop.f32.mrb[0].mxu0
    %v1074 = vadd.f32 %v753, %v1073
    %v1075 = vpop.f32.mrb[0].mxu0
    %1076 = vmatprep.mubr.f32.mxu0 0.0
    %1077 = vmatmul.mubr.f32.gmra.mrb[0].mxu0 %v795
    %v1078 = vpop.f32.mrb[0].mxu0
    %v1079 = vadd.f32 %v753, %v1078
    %v1080 = vpop.f32.mrb[0].mxu0
    %1081 = vmatprep.mubr.f32.mxu0 0.0
    %1082 = vmatmul.mubr.f32.gmra.mrb[0].mxu0 %v798
    %v1083 = vpop.f32.mrb[0].mxu0
    %v1084 = vadd.f32 %v753, %v1083
    %v1085 = vpop.f32.mrb[0].mxu0
    %1086 = vmatprep.mubr.f32.mxu0 0.0
    %1087 = vmatmul.mubr.f32.gmra.mrb[0].mxu0 %v801
    %v1088 = vpop.f32.mrb[0].mxu0
    %v1089 = vadd.f32 %v753, %v1088
    %v1090 = vpop.f32.mrb[0].mxu0
    %1091 = vmatprep.mubr.f32.mxu0 0.0
    %1092 = vmatmul.mubr.f32.gmra.mrb[0].mxu0 %v804
    %v1093 = vpop.f32.mrb[0].mxu0
    %v1094 = vadd.f32 %v753, %v1093
    %v1095 = vpop.f32.mrb[0].mxu0
    %1096 = vmatprep.mubr.f32.mxu0 0.0
    %1097 = vmatmul.mubr.f32.gmra.mrb[0].mxu0 %v807
    %v1098 = vpop.f32.mrb[0].mxu0
    %v1099 = vadd.f32 %v753, %v1098
    %v1100 = vpop.f32.mrb[0].mxu0
    %1101 = vmatprep.mubr.f32.mxu0 0.0
    %1102 = vmatmul.mubr.f32.gmra.mrb[0].mxu0 %v810
    %v1103 = vpop.f32.mrb[0].mxu0
    %v1104 = vadd.f32 %v753, %v1103
    %v1105 = vpop.f32.mrb[0].mxu0
    %1106 = vmatprep.mubr.f32.mxu0 0.0
    %1107 = vmatmul.mubr.f32.gmra.mrb[0].mxu0 %v813
    %v1108 = vpop.f32.mrb[0].mxu0
    %v1109 = vadd.f32 %v753, %v1108
    %v1110 = vpop.f32.mrb[0].mxu0
    %1111 = vmatprep.mubr.f32.mxu0 0.0
    %1112 = vmatmul.mubr.f32.gmra.mrb[0].mxu0 %v816
    %v1113 = vpop.f32.mrb[0].mxu0
    %v1114 = vadd.f32 %v753, %v1113
    %v1115 = vpop.f32.mrb[0].mxu0
    %1116 = vmatprep.mubr.f32.mxu0 0.0
    %1117 = vmatmul.mubr.f32.gmra.mrb[0].mxu0 %v819
    %v1118 = vpop.f32.mrb[0].mxu0
    %v1119 = vadd.f32 %v753, %v1118
    %v1120 = vpop.f32.mrb[0].mxu0
    %1121 = vmatprep.mubr.f32.mxu0 0.0
    %1122 = vmatmul.mubr.f32.gmra.mrb[0].mxu0 %v822
    %v1123 = vpop.f32.mrb[0].mxu0
    %v1124 = vadd.f32 %v753, %v1123
    %v1125 = vpop.f32.mrb[0].mxu0
    %1126 = vmatprep.mubr.f32.mxu0 0.0
    %1127 = vmatmul.mubr.f32.gmra.mrb[0].mxu0 %v825
    %v1128 = vpop.f32.mrb[0].mxu0
    %v1129 = vadd.f32 %v753, %v1128
    %v1130 = vpop.f32.mrb[0].mxu0
    %1131 = vmatprep.mubr.f32.mxu0 0.0
    %1132 = vmatmul.mubr.f32.gmra.mrb[0].mxu0 %v828
    %v1133 = vpop.f32.mrb[0].mxu0
    %v1134 = vadd.f32 %v753, %v1133
    %v1135 = vpop.f32.mrb[0].mxu0
    %1136 = vmatprep.mubr.f32.mxu0 0.0
    %1137 = vmatmul.mubr.f32.gmra.mrb[0].mxu0 %v831
    %v1138 = vpop.f32.mrb[0].mxu0
    %v1139 = vadd.f32 %v753, %v1138
    %v1140 = vpop.f32.mrb[0].mxu0
    %1141 = vmatprep.mubr.f32.mxu0 0.0
    %1142 = vmatmul.mubr.f32.gmra.mrb[0].mxu0 %v834
    %v1143 = vpop.f32.mrb[0].mxu0
    %v1144 = vadd.f32 %v753, %v1143
    %v1145 = vpop.f32.mrb[0].mxu0
    %1146 = vmatprep.mubr.f32.mxu0 0.0
    %1147 = vmatmul.mubr.f32.gmra.mrb[0].mxu0 %v837
    %v1148 = vpop.f32.mrb[0].mxu0
    %v1149 = vadd.f32 %v753, %v1148
    %v1150 = vpop.f32.mrb[0].mxu0
    %1151 = vmatprep.mubr.f32.mxu0 0.0
    %1152 = vmatmul.mubr.f32.gmra.mrb[0].mxu0 %v840
    %v1153 = vpop.f32.mrb[0].mxu0
    %v1154 = vadd.f32 %v753, %v1153
    %v1155 = vpop.f32.mrb[0].mxu0
    %1156 = vmatprep.mubr.f32.mxu0 0.0
    %1157 = vmatmul.mubr.f32.gmra.mrb[0].mxu0 %v843
    %v1158 = vpop.f32.mrb[0].mxu0
    %v1159 = vadd.f32 %v753, %v1158
    %v1160 = vpop.f32.mrb[0].mxu0
    %1161 = vmatprep.mubr.f32.mxu0 0.0
    %1162 = vmatmul.mubr.f32.gmra.mrb[0].mxu0 %v846
    %v1163 = vpop.f32.mrb[0].mxu0
    %v1164 = vadd.f32 %v753, %v1163
    %v1165 = vpop.f32.mrb[0].mxu0
    %1166 = vmatprep.mubr.f32.mxu0 0.0
    %1167 = vmatmul.mubr.f32.gmra.mrb[0].mxu0 %v849
    %v1168 = vpop.f32.mrb[0].mxu0
    %v1169 = vadd.f32 %v753, %v1168
    %v1170 = vpop.f32.mrb[0].mxu0
    %1171 = vmatprep.mubr.f32.mxu0 0.0
    %1172 = vmatmul.mubr.f32.gmra.mrb[0].mxu0 %v852
    %v1173 = vpop.f32.mrb[0].mxu0
    %v1174 = vadd.f32 %v753, %v1173
    %v1175 = vpop.f32.mrb[0].mxu0
    %1176 = vmatprep.mubr.f32.mxu0 0.0
    %1177 = vmatmul.mubr.f32.gmra.mrb[0].mxu0 %v855
    %v1178 = vpop.f32.mrb[0].mxu0
    %v1179 = vadd.f32 %v753, %v1178
    %v1180 = vpop.f32.mrb[0].mxu0
    %1181 = vmatprep.mubr.f32.mxu0 0.0
    %1182 = vmatmul.mubr.f32.gmra.mrb[0].mxu0 %v858
    %v1183 = vpop.f32.mrb[0].mxu0
    %v1184 = vadd.f32 %v753, %v1183
    %v1185 = vpop.f32.mrb[0].mxu0
    %1186 = vmatprep.mubr.f32.mxu0 0.0
    %1187 = vmatmul.mubr.f32.gmra.mrb[0].mxu0 %v861
    %v1188 = vpop.f32.mrb[0].mxu0
    %v1189 = vadd.f32 %v753, %v1188
    %v1190 = vpop.f32.mrb[0].mxu0
    %1191 = vmatprep.mubr.f32.mxu0 0.0
    %1192 = vmatmul.mubr.f32.gmra.mrb[0].mxu0 %v864
    %v1193 = vpop.f32.mrb[0].mxu0
    %v1194 = vadd.f32 %v753, %v1193
    %v1195 = vpop.f32.mrb[0].mxu0
    %1196 = vmatprep.mubr.f32.mxu0 0.0
    %1197 = vmatmul.mubr.f32.gmra.mrb[0].mxu0 %v867
    %v1198 = vpop.f32.mrb[0].mxu0
    %v1199 = vadd.f32 %v753, %v1198
    %v1200 = vpop.f32.mrb[0].mxu0
    %1201 = vmatprep.mubr.f32.mxu0 0.0
    %1202 = vmatmul.mubr.f32.gmra.mrb[0].mxu0 %v870
    %v1203 = vpop.f32.mrb[0].mxu0
    %v1204 = vadd.f32 %v753, %v1203
    %v1205 = vpop.f32.mrb[0].mxu0
    %1206 = vmatprep.mubr.f32.mxu0 0.0
    %1207 = vmatmul.mubr.f32.gmra.mrb[0].mxu0 %v873
    %v1208 = vpop.f32.mrb[0].mxu0
    %v1209 = vadd.f32 %v753, %v1208
    %v1210 = vpop.f32.mrb[0].mxu0
    %1211 = vmatprep.mubr.f32.mxu0 0.0
    %1212 = vmatmul.mubr.f32.gmra.mrb[0].mxu0 %v876
    %v1213 = vpop.f32.mrb[0].mxu0
    %v1214 = vadd.f32 %v753, %v1213
    %v1215 = vpop.f32.mrb[0].mxu0
    %1216 = vmatprep.mubr.f32.mxu0 0.0
    %1217 = vmatmul.mubr.f32.gmra.mrb[0].mxu0 %v879
    %v1218 = vpop.f32.mrb[0].mxu0
    %v1219 = vadd.f32 %v753, %v1218
    %v1220 = vpop.f32.mrb[0].mxu0
    %1221 = vmatprep.mubr.f32.mxu0 0.0
    %1222 = vmatmul.mubr.f32.gmra.mrb[0].mxu0 %v882
    %v1223 = vpop.f32.mrb[0].mxu0
    %v1224 = vadd.f32 %v753, %v1223
    %v1225 = vpop.f32.mrb[0].mxu0
    %1226 = vmatprep.mubr.f32.mxu0 0.0
    %1227 = vmatmul.mubr.f32.gmra.mrb[0].mxu0 %v885
    %v1228 = vpop.f32.mrb[0].mxu0
    %v1229 = vadd.f32 %v753, %v1228
    %v1230 = vpop.f32.mrb[0].mxu0
    %1231 = vmatprep.mubr.f32.mxu0 0.0
    %1232 = vmatmul.mubr.f32.gmra.mrb[0].mxu0 %v888
    %v1233 = vpop.f32.mrb[0].mxu0
    %v1234 = vadd.f32 %v753, %v1233
    %v1235 = vpop.f32.mrb[0].mxu0
    %1236 = vmatprep.mubr.f32.mxu0 0.0
    %1237 = vmatmul.mubr.f32.gmra.mrb[0].mxu0 %v891
    %v1238 = vpop.f32.mrb[0].mxu0
    %v1239 = vadd.f32 %v753, %v1238
    %v1240 = vpop.f32.mrb[0].mxu0
    %1241 = vmatprep.mubr.f32.mxu0 0.0
    %1242 = vmatmul.mubr.f32.gmra.mrb[0].mxu0 %v894
    %v1243 = vpop.f32.mrb[0].mxu0
    %v1244 = vadd.f32 %v753, %v1243
    %v1245 = vpop.f32.mrb[0].mxu0
    %1246 = vmatprep.mubr.f32.mxu0 0.0
    %1247 = vmatmul.mubr.f32.gmra.mrb[0].mxu0 %v897
    %v1248 = vpop.f32.mrb[0].mxu0
    %v1249 = vadd.f32 %v753, %v1248
    %v1250 = vpop.f32.mrb[0].mxu0
    %1251 = vmatprep.mubr.f32.mxu0 0.0
    %1252 = vmatmul.mubr.f32.gmra.mrb[0].mxu0 %v900
    %v1253 = vpop.f32.mrb[0].mxu0
    %v1254 = vadd.f32 %v753, %v1253
    %v1255 = vpop.f32.mrb[0].mxu0
    %1256 = vmatprep.mubr.f32.mxu0 0.0
    %1257 = vmatmul.mubr.f32.gmra.mrb[0].mxu0 %v903
    %v1258 = vpop.f32.mrb[0].mxu0
    %v1259 = vadd.f32 %v753, %v1258
    %v1260 = vpop.f32.mrb[0].mxu0
    %1261 = vmatprep.mubr.f32.mxu0 0.0
    %1262 = vmatmul.mubr.f32.gmra.mrb[0].mxu0 %v906
    %v1263 = vpop.f32.mrb[0].mxu0
    %v1264 = vadd.f32 %v753, %v1263
    %v1265 = vpop.f32.mrb[0].mxu0
    %1266 = vmatprep.mubr.f32.mxu0 0.0
    %1267 = vmatmul.mubr.f32.gmra.mrb[0].mxu0 %v909
    %v1268 = vpop.f32.mrb[0].mxu0
    %v1269 = vadd.f32 %v753, %v1268
    %v1270 = vpop.f32.mrb[0].mxu0
    %1271 = vmatprep.mubr.f32.mxu0 0.0
    %1272 = vmatmul.mubr.f32.gmra.mrb[0].mxu0 %v912
    %v1273 = vpop.f32.mrb[0].mxu0
    %v1274 = vadd.f32 %v753, %v1273
    %v1275 = vpop.f32.mrb[0].mxu0
    %1276 = vmatprep.mubr.f32.mxu0 0.0
    %1277 = vmatmul.mubr.f32.gmra.mrb[0].mxu0 %v915
    %v1278 = vpop.f32.mrb[0].mxu0
    %v1279 = vadd.f32 %v753, %v1278
    %v1280 = vpop.f32.mrb[0].mxu0
    %1281 = vmatprep.mubr.f32.mxu0 0.0
    %1282 = vmatmul.mubr.f32.gmra.mrb[0].mxu0 %v918
    %v1283 = vpop.f32.mrb[0].mxu0
    %v1284 = vadd.f32 %v753, %v1283
    %v1285 = vpop.f32.mrb[0].mxu0
    %1286 = vmatprep.mubr.f32.mxu0 0.0
    %1287 = vmatmul.mubr.f32.gmra.mrb[0].mxu0 %v921
    %v1288 = vpop.f32.mrb[0].mxu0
    %v1289 = vadd.f32 %v753, %v1288
    %v1290 = vpop.f32.mrb[0].mxu0
    %1291 = vmatprep.mubr.f32.mxu0 0.0
    %1292 = vmatmul.mubr.f32.gmra.mrb[0].mxu0 %v924
    %v1293 = vpop.f32.mrb[0].mxu0
    %v1294 = vadd.f32 %v753, %v1293
    %v1295 = vpop.f32.mrb[0].mxu0
    %1296 = vmatprep.mubr.f32.mxu0 0.0
    %1297 = vmatmul.mubr.f32.gmra.mrb[0].mxu0 %v927
    %v1298 = vpop.f32.mrb[0].mxu0
    %v1299 = vadd.f32 %v753, %v1298
    %v1300 = vpop.f32.mrb[0].mxu0
    %1301 = vmatprep.mubr.f32.mxu0 0.0
    %1302 = vmatmul.mubr.f32.gmra.mrb[0].mxu0 %v930
    %v1303 = vpop.f32.mrb[0].mxu0
    %v1304 = vadd.f32 %v753, %v1303
    %v1305 = vpop.f32.mrb[0].mxu0
    %1306 = vmatprep.mubr.f32.mxu0 0.0
    %1307 = vmatmul.mubr.f32.gmra.mrb[0].mxu0 %v933
    %v1308 = vpop.f32.mrb[0].mxu0
    %v1309 = vadd.f32 %v753, %v1308
    %v1310 = vpop.f32.mrb[0].mxu0
    %1311 = vmatprep.mubr.f32.mxu0 0.0
    %1312 = vmatmul.mubr.f32.gmra.mrb[0].mxu0 %v936
    %v1313 = vpop.f32.mrb[0].mxu0
    %v1314 = vadd.f32 %v753, %v1313
    %v1315 = vpop.f32.mrb[0].mxu0
    %1316 = vmatprep.mubr.f32.mxu0 0.0
    %1317 = vmatmul.mubr.f32.gmra.mrb[0].mxu0 %v939
    %v1318 = vpop.f32.mrb[0].mxu0
    %v1319 = vadd.f32 %v753, %v1318
    %v1320 = vpop.f32.mrb[0].mxu0
    %1321 = vmatprep.mubr.f32.mxu0 0.0
    %1322 = vmatmul.mubr.f32.gmra.mrb[0].mxu0 %v942
    %v1323 = vpop.f32.mrb[0].mxu0
    %v1324 = vadd.f32 %v753, %v1323
    %v1325 = vpop.f32.mrb[0].mxu0
    %1326 = vmatprep.mubr.f32.mxu0 0.0
    %1327 = vmatmul.mubr.f32.gmra.mrb[0].mxu0 %v945
    %v1328 = vpop.f32.mrb[0].mxu0
    %v1329 = vadd.f32 %v753, %v1328
    %v1330 = vpop.f32.mrb[0].mxu0
    %1331 = vdwg.mxu0
    %v1332 = vld [vmem:[%s3] sm:$0xff]
    %v1333 = vld [vmem:[%s3 + $0x8] sm:$0xff]
    %v1334 = vld [vmem:[%s3 + $0x10] sm:$0xff]
    %v1335 = vld [vmem:[%s3 + $0x18] sm:$0xff]
    %v1336 = vld [vmem:[%s3 + $0x20] sm:$0xff]
    %v1337 = vld [vmem:[%s3 + $0x28] sm:$0xff]
    %v1338 = vld [vmem:[%s3 + $0x30] sm:$0xff]
    %v1339 = vld [vmem:[%s3 + $0x38] sm:$0xff]
    %v1340 = vlaneseq
    %v1341 = vshrl.u32 %v1340, 7
    %v1342 = vsub.s32 0, %v1341
    %v1343 = vrot.slane %v29, %v1342
    %v1345 = vsel %vm754, %v1014, 0
    %v1348 = vsel %vm754, %v1019, 0
    %v1351 = vsel %vm754, %v1024, 0
    %v1354 = vsel %vm754, %v1029, 0
    %v1357 = vsel %vm754, %v1034, 0
    %v1360 = vsel %vm754, %v1039, 0
    %v1363 = vsel %vm754, %v1044, 0
    %v1366 = vsel %vm754, %v1049, 0
    %v1369 = vsel %vm754, %v1054, 0
    %v1372 = vsel %vm754, %v1059, 0
    %v1375 = vsel %vm754, %v1064, 0
    %v1378 = vsel %vm754, %v1069, 0
    %v1381 = vsel %vm754, %v1074, 0
    %v1384 = vsel %vm754, %v1079, 0
    %v1387 = vsel %vm754, %v1084, 0
    %v1390 = vsel %vm754, %v1089, 0
    %v1393 = vsel %vm754, %v1094, 0
    %v1396 = vsel %vm754, %v1099, 0
    %v1399 = vsel %vm754, %v1104, 0
    %v1402 = vsel %vm754, %v1109, 0
    %v1405 = vsel %vm754, %v1114, 0
    %v1408 = vsel %vm754, %v1119, 0
    %v1411 = vsel %vm754, %v1124, 0
    %v1414 = vsel %vm754, %v1129, 0
    %v1417 = vsel %vm754, %v1134, 0
    %v1420 = vsel %vm754, %v1139, 0
    %v1423 = vsel %vm754, %v1144, 0
    %v1426 = vsel %vm754, %v1149, 0
    %v1429 = vsel %vm754, %v1154, 0
    %v1432 = vsel %vm754, %v1159, 0
    %v1435 = vsel %vm754, %v1164, 0
    %v1438 = vsel %vm754, %v1169, 0
    %v1441 = vsel %vm754, %v1174, 0
    %v1444 = vsel %vm754, %v1179, 0
    %v1447 = vsel %vm754, %v1184, 0
    %v1450 = vsel %vm754, %v1189, 0
    %v1453 = vsel %vm754, %v1194, 0
    %v1456 = vsel %vm754, %v1199, 0
    %v1459 = vsel %vm754, %v1204, 0
    %v1462 = vsel %vm754, %v1209, 0
    %v1465 = vsel %vm754, %v1214, 0
    %v1468 = vsel %vm754, %v1219, 0
    %v1471 = vsel %vm754, %v1224, 0
    %v1474 = vsel %vm754, %v1229, 0
    %v1477 = vsel %vm754, %v1234, 0
    %v1480 = vsel %vm754, %v1239, 0
    %v1483 = vsel %vm754, %v1244, 0
    %v1486 = vsel %vm754, %v1249, 0
    %v1489 = vsel %vm754, %v1254, 0
    %v1492 = vsel %vm754, %v1259, 0
    %v1495 = vsel %vm754, %v1264, 0
    %v1498 = vsel %vm754, %v1269, 0
    %v1501 = vsel %vm754, %v1274, 0
    %v1504 = vsel %vm754, %v1279, 0
    %v1507 = vsel %vm754, %v1284, 0
    %v1510 = vsel %vm754, %v1289, 0
    %v1513 = vsel %vm754, %v1294, 0
    %v1516 = vsel %vm754, %v1299, 0
    %v1519 = vsel %vm754, %v1304, 0
    %v1522 = vsel %vm754, %v1309, 0
    %v1525 = vsel %vm754, %v1314, 0
    %v1528 = vsel %vm754, %v1319, 0
    %v1531 = vsel %vm754, %v1324, 0
    %v1534 = vsel %vm754, %v1329, 0
    %1536 = vmatprep.subr.mxu0 0.0
    %1537 = vmatpush1.msra.mxu0 %v1332
    %1538 = vmatprep.subr.mxu0 0.0
    %1539 = vmatpush1.msra.mxu0 %v1333
    %1540 = vmatprep.subr.mxu0 0.0
    %1541 = vmatpush1.msra.mxu0 %v1334
    %1542 = vmatprep.subr.mxu0 0.0
    %1543 = vmatpush1.msra.mxu0 %v1335
    %1544 = vmatprep.subr.mxu0 0.0
    %1545 = vmatpush1.msra.mxu0 %v1336
    %1546 = vmatprep.subr.mxu0 0.0
    %1547 = vmatpush1.msra.mxu0 %v1337
    %1548 = vmatprep.subr.mxu0 0.0
    %1549 = vmatpush1.msra.mxu0 %v1338
    %1550 = vmatprep.subr.mxu0 0.0
    %1551 = vmatpush1.msra.mxu0 %v1339
    %1552 = vmatprep.subr.mxu0 0.0
    %1553 = vmatpush1.msra.mxu0 0.0
    %1554 = vmatprep.subr.mxu0 0.0
    %1555 = vmatpush1.msra.mxu0 0.0
    %1556 = vmatprep.subr.mxu0 0.0
    %1557 = vmatpush1.msra.mxu0 0.0
    %1558 = vmatprep.subr.mxu0 0.0
    %1559 = vmatpush1.msra.mxu0 0.0
    %1560 = vmatprep.subr.mxu0 0.0
    %1561 = vmatpush1.msra.mxu0 0.0
    %1562 = vmatprep.subr.mxu0 0.0
    %1563 = vmatpush1.msra.mxu0 0.0
    %1564 = vmatprep.subr.mxu0 0.0
    %1565 = vmatpush1.msra.mxu0 0.0
    %1566 = vmatprep.subr.mxu0 0.0
    %1567 = vmatpush1.msra.mxu0 0.0
    %1568 = vmatprep.subr.mxu0 0.0
    %1569 = vmatpush1.msra.mxu0 0.0
    %1570 = vmatprep.subr.mxu0 0.0
    %1571 = vmatpush1.msra.mxu0 0.0
    %1572 = vmatprep.subr.mxu0 0.0
    %1573 = vmatpush1.msra.mxu0 0.0
    %1574 = vmatprep.subr.mxu0 0.0
    %1575 = vmatpush1.msra.mxu0 0.0
    %1576 = vmatprep.subr.mxu0 0.0
    %1577 = vmatpush1.msra.mxu0 0.0
    %1578 = vmatprep.subr.mxu0 0.0
    %1579 = vmatpush1.msra.mxu0 0.0
    %1580 = vmatprep.subr.mxu0 0.0
    %1581 = vmatpush1.msra.mxu0 0.0
    %1582 = vmatprep.subr.mxu0 0.0
    %1583 = vmatpush1.msra.mxu0 0.0
    %1584 = vmatprep.subr.mxu0 0.0
    %1585 = vmatpush1.msra.mxu0 0.0
    %1586 = vmatprep.subr.mxu0 0.0
    %1587 = vmatpush1.msra.mxu0 0.0
    %1588 = vmatprep.subr.mxu0 0.0
    %1589 = vmatpush1.msra.mxu0 0.0
    %1590 = vmatprep.subr.mxu0 0.0
    %1591 = vmatpush1.msra.mxu0 0.0
    %1592 = vmatprep.subr.mxu0 0.0
    %1593 = vmatpush1.msra.mxu0 0.0
    %1594 = vmatprep.subr.mxu0 0.0
    %1595 = vmatpush1.msra.mxu0 0.0
    %1596 = vmatprep.subr.mxu0 0.0
    %1597 = vmatpush1.msra.mxu0 0.0
    %1598 = vmatprep.subr.mxu0 0.0
    %1599 = vmatpush1.msra.mxu0 0.0
    %1600 = vmatprep.mubr.f32.mxu0 0.0
    %1601 = vmatmul.mubr.f32.gmra.mrb[0].mxu0 %v1345
    %v1602 = vpop.f32.mrb[0].mxu0
    %v1603 = vadd.f32 %v1343, %v1602
    %v1604 = vpop.f32.mrb[0].mxu0
    %1605 = vmatprep.mubr.f32.mxu0 0.0
    %1606 = vmatmul.mubr.f32.gmra.mrb[0].mxu0 %v1348
    %v1607 = vpop.f32.mrb[0].mxu0
    %v1608 = vadd.f32 %v1343, %v1607
    %v1609 = vpop.f32.mrb[0].mxu0
    %1610 = vmatprep.mubr.f32.mxu0 0.0
    %1611 = vmatmul.mubr.f32.gmra.mrb[0].mxu0 %v1351
    %v1612 = vpop.f32.mrb[0].mxu0
    %v1613 = vadd.f32 %v1343, %v1612
    %v1614 = vpop.f32.mrb[0].mxu0
    %1615 = vmatprep.mubr.f32.mxu0 0.0
    %1616 = vmatmul.mubr.f32.gmra.mrb[0].mxu0 %v1354
    %v1617 = vpop.f32.mrb[0].mxu0
    %v1618 = vadd.f32 %v1343, %v1617
    %v1619 = vpop.f32.mrb[0].mxu0
    %1620 = vmatprep.mubr.f32.mxu0 0.0
    %1621 = vmatmul.mubr.f32.gmra.mrb[0].mxu0 %v1357
    %v1622 = vpop.f32.mrb[0].mxu0
    %v1623 = vadd.f32 %v1343, %v1622
    %v1624 = vpop.f32.mrb[0].mxu0
    %1625 = vmatprep.mubr.f32.mxu0 0.0
    %1626 = vmatmul.mubr.f32.gmra.mrb[0].mxu0 %v1360
    %v1627 = vpop.f32.mrb[0].mxu0
    %v1628 = vadd.f32 %v1343, %v1627
    %v1629 = vpop.f32.mrb[0].mxu0
    %1630 = vmatprep.mubr.f32.mxu0 0.0
    %1631 = vmatmul.mubr.f32.gmra.mrb[0].mxu0 %v1363
    %v1632 = vpop.f32.mrb[0].mxu0
    %v1633 = vadd.f32 %v1343, %v1632
    %v1634 = vpop.f32.mrb[0].mxu0
    %1635 = vmatprep.mubr.f32.mxu0 0.0
    %1636 = vmatmul.mubr.f32.gmra.mrb[0].mxu0 %v1366
    %v1637 = vpop.f32.mrb[0].mxu0
    %v1638 = vadd.f32 %v1343, %v1637
    %v1639 = vpop.f32.mrb[0].mxu0
    %1640 = vmatprep.mubr.f32.mxu0 0.0
    %1641 = vmatmul.mubr.f32.gmra.mrb[0].mxu0 %v1369
    %v1642 = vpop.f32.mrb[0].mxu0
    %v1643 = vadd.f32 %v1343, %v1642
    %v1644 = vpop.f32.mrb[0].mxu0
    %1645 = vmatprep.mubr.f32.mxu0 0.0
    %1646 = vmatmul.mubr.f32.gmra.mrb[0].mxu0 %v1372
    %v1647 = vpop.f32.mrb[0].mxu0
    %v1648 = vadd.f32 %v1343, %v1647
    %v1649 = vpop.f32.mrb[0].mxu0
    %1650 = vmatprep.mubr.f32.mxu0 0.0
    %1651 = vmatmul.mubr.f32.gmra.mrb[0].mxu0 %v1375
    %v1652 = vpop.f32.mrb[0].mxu0
    %v1653 = vadd.f32 %v1343, %v1652
    %v1654 = vpop.f32.mrb[0].mxu0
    %1655 = vmatprep.mubr.f32.mxu0 0.0
    %1656 = vmatmul.mubr.f32.gmra.mrb[0].mxu0 %v1378
    %v1657 = vpop.f32.mrb[0].mxu0
    %v1658 = vadd.f32 %v1343, %v1657
    %v1659 = vpop.f32.mrb[0].mxu0
    %1660 = vmatprep.mubr.f32.mxu0 0.0
    %1661 = vmatmul.mubr.f32.gmra.mrb[0].mxu0 %v1381
    %v1662 = vpop.f32.mrb[0].mxu0
    %v1663 = vadd.f32 %v1343, %v1662
    %v1664 = vpop.f32.mrb[0].mxu0
    %1665 = vmatprep.mubr.f32.mxu0 0.0
    %1666 = vmatmul.mubr.f32.gmra.mrb[0].mxu0 %v1384
    %v1667 = vpop.f32.mrb[0].mxu0
    %v1668 = vadd.f32 %v1343, %v1667
    %v1669 = vpop.f32.mrb[0].mxu0
    %1670 = vmatprep.mubr.f32.mxu0 0.0
    %1671 = vmatmul.mubr.f32.gmra.mrb[0].mxu0 %v1387
    %v1672 = vpop.f32.mrb[0].mxu0
    %v1673 = vadd.f32 %v1343, %v1672
    %v1674 = vpop.f32.mrb[0].mxu0
    %1675 = vmatprep.mubr.f32.mxu0 0.0
    %1676 = vmatmul.mubr.f32.gmra.mrb[0].mxu0 %v1390
    %v1677 = vpop.f32.mrb[0].mxu0
    %v1678 = vadd.f32 %v1343, %v1677
    %v1679 = vpop.f32.mrb[0].mxu0
    %1680 = vmatprep.mubr.f32.mxu0 0.0
    %1681 = vmatmul.mubr.f32.gmra.mrb[0].mxu0 %v1393
    %v1682 = vpop.f32.mrb[0].mxu0
    %v1683 = vadd.f32 %v1343, %v1682
    %v1684 = vpop.f32.mrb[0].mxu0
    %1685 = vmatprep.mubr.f32.mxu0 0.0
    %1686 = vmatmul.mubr.f32.gmra.mrb[0].mxu0 %v1396
    %v1687 = vpop.f32.mrb[0].mxu0
    %v1688 = vadd.f32 %v1343, %v1687
    %v1689 = vpop.f32.mrb[0].mxu0
    %1690 = vmatprep.mubr.f32.mxu0 0.0
    %1691 = vmatmul.mubr.f32.gmra.mrb[0].mxu0 %v1399
    %v1692 = vpop.f32.mrb[0].mxu0
    %v1693 = vadd.f32 %v1343, %v1692
    %v1694 = vpop.f32.mrb[0].mxu0
    %1695 = vmatprep.mubr.f32.mxu0 0.0
    %1696 = vmatmul.mubr.f32.gmra.mrb[0].mxu0 %v1402
    %v1697 = vpop.f32.mrb[0].mxu0
    %v1698 = vadd.f32 %v1343, %v1697
    %v1699 = vpop.f32.mrb[0].mxu0
    %1700 = vmatprep.mubr.f32.mxu0 0.0
    %1701 = vmatmul.mubr.f32.gmra.mrb[0].mxu0 %v1405
    %v1702 = vpop.f32.mrb[0].mxu0
    %v1703 = vadd.f32 %v1343, %v1702
    %v1704 = vpop.f32.mrb[0].mxu0
    %1705 = vmatprep.mubr.f32.mxu0 0.0
    %1706 = vmatmul.mubr.f32.gmra.mrb[0].mxu0 %v1408
    %v1707 = vpop.f32.mrb[0].mxu0
    %v1708 = vadd.f32 %v1343, %v1707
    %v1709 = vpop.f32.mrb[0].mxu0
    %1710 = vmatprep.mubr.f32.mxu0 0.0
    %1711 = vmatmul.mubr.f32.gmra.mrb[0].mxu0 %v1411
    %v1712 = vpop.f32.mrb[0].mxu0
    %v1713 = vadd.f32 %v1343, %v1712
    %v1714 = vpop.f32.mrb[0].mxu0
    %1715 = vmatprep.mubr.f32.mxu0 0.0
    %1716 = vmatmul.mubr.f32.gmra.mrb[0].mxu0 %v1414
    %v1717 = vpop.f32.mrb[0].mxu0
    %v1718 = vadd.f32 %v1343, %v1717
    %v1719 = vpop.f32.mrb[0].mxu0
    %1720 = vmatprep.mubr.f32.mxu0 0.0
    %1721 = vmatmul.mubr.f32.gmra.mrb[0].mxu0 %v1417
    %v1722 = vpop.f32.mrb[0].mxu0
    %v1723 = vadd.f32 %v1343, %v1722
    %v1724 = vpop.f32.mrb[0].mxu0
    %1725 = vmatprep.mubr.f32.mxu0 0.0
    %1726 = vmatmul.mubr.f32.gmra.mrb[0].mxu0 %v1420
    %v1727 = vpop.f32.mrb[0].mxu0
    %v1728 = vadd.f32 %v1343, %v1727
    %v1729 = vpop.f32.mrb[0].mxu0
    %1730 = vmatprep.mubr.f32.mxu0 0.0
    %1731 = vmatmul.mubr.f32.gmra.mrb[0].mxu0 %v1423
    %v1732 = vpop.f32.mrb[0].mxu0
    %v1733 = vadd.f32 %v1343, %v1732
    %v1734 = vpop.f32.mrb[0].mxu0
    %1735 = vmatprep.mubr.f32.mxu0 0.0
    %1736 = vmatmul.mubr.f32.gmra.mrb[0].mxu0 %v1426
    %v1737 = vpop.f32.mrb[0].mxu0
    %v1738 = vadd.f32 %v1343, %v1737
    %v1739 = vpop.f32.mrb[0].mxu0
    %1740 = vmatprep.mubr.f32.mxu0 0.0
    %1741 = vmatmul.mubr.f32.gmra.mrb[0].mxu0 %v1429
    %v1742 = vpop.f32.mrb[0].mxu0
    %v1743 = vadd.f32 %v1343, %v1742
    %v1744 = vpop.f32.mrb[0].mxu0
    %1745 = vmatprep.mubr.f32.mxu0 0.0
    %1746 = vmatmul.mubr.f32.gmra.mrb[0].mxu0 %v1432
    %v1747 = vpop.f32.mrb[0].mxu0
    %v1748 = vadd.f32 %v1343, %v1747
    %v1749 = vpop.f32.mrb[0].mxu0
    %1750 = vmatprep.mubr.f32.mxu0 0.0
    %1751 = vmatmul.mubr.f32.gmra.mrb[0].mxu0 %v1435
    %v1752 = vpop.f32.mrb[0].mxu0
    %v1753 = vadd.f32 %v1343, %v1752
    %v1754 = vpop.f32.mrb[0].mxu0
    %1755 = vmatprep.mubr.f32.mxu0 0.0
    %1756 = vmatmul.mubr.f32.gmra.mrb[0].mxu0 %v1438
    %v1757 = vpop.f32.mrb[0].mxu0
    %v1758 = vadd.f32 %v1343, %v1757
    %v1759 = vpop.f32.mrb[0].mxu0
    %1760 = vmatprep.mubr.f32.mxu0 0.0
    %1761 = vmatmul.mubr.f32.gmra.mrb[0].mxu0 %v1441
    %v1762 = vpop.f32.mrb[0].mxu0
    %v1763 = vadd.f32 %v1343, %v1762
    %v1764 = vpop.f32.mrb[0].mxu0
    %1765 = vmatprep.mubr.f32.mxu0 0.0
    %1766 = vmatmul.mubr.f32.gmra.mrb[0].mxu0 %v1444
    %v1767 = vpop.f32.mrb[0].mxu0
    %v1768 = vadd.f32 %v1343, %v1767
    %v1769 = vpop.f32.mrb[0].mxu0
    %1770 = vmatprep.mubr.f32.mxu0 0.0
    %1771 = vmatmul.mubr.f32.gmra.mrb[0].mxu0 %v1447
    %v1772 = vpop.f32.mrb[0].mxu0
    %v1773 = vadd.f32 %v1343, %v1772
    %v1774 = vpop.f32.mrb[0].mxu0
    %1775 = vmatprep.mubr.f32.mxu0 0.0
    %1776 = vmatmul.mubr.f32.gmra.mrb[0].mxu0 %v1450
    %v1777 = vpop.f32.mrb[0].mxu0
    %v1778 = vadd.f32 %v1343, %v1777
    %v1779 = vpop.f32.mrb[0].mxu0
    %1780 = vmatprep.mubr.f32.mxu0 0.0
    %1781 = vmatmul.mubr.f32.gmra.mrb[0].mxu0 %v1453
    %v1782 = vpop.f32.mrb[0].mxu0
    %v1783 = vadd.f32 %v1343, %v1782
    %v1784 = vpop.f32.mrb[0].mxu0
    %1785 = vmatprep.mubr.f32.mxu0 0.0
    %1786 = vmatmul.mubr.f32.gmra.mrb[0].mxu0 %v1456
    %v1787 = vpop.f32.mrb[0].mxu0
    %v1788 = vadd.f32 %v1343, %v1787
    %v1789 = vpop.f32.mrb[0].mxu0
    %1790 = vmatprep.mubr.f32.mxu0 0.0
    %1791 = vmatmul.mubr.f32.gmra.mrb[0].mxu0 %v1459
    %v1792 = vpop.f32.mrb[0].mxu0
    %v1793 = vadd.f32 %v1343, %v1792
    %v1794 = vpop.f32.mrb[0].mxu0
    %1795 = vmatprep.mubr.f32.mxu0 0.0
    %1796 = vmatmul.mubr.f32.gmra.mrb[0].mxu0 %v1462
    %v1797 = vpop.f32.mrb[0].mxu0
    %v1798 = vadd.f32 %v1343, %v1797
    %v1799 = vpop.f32.mrb[0].mxu0
    %1800 = vmatprep.mubr.f32.mxu0 0.0
    %1801 = vmatmul.mubr.f32.gmra.mrb[0].mxu0 %v1465
    %v1802 = vpop.f32.mrb[0].mxu0
    %v1803 = vadd.f32 %v1343, %v1802
    %v1804 = vpop.f32.mrb[0].mxu0
    %1805 = vmatprep.mubr.f32.mxu0 0.0
    %1806 = vmatmul.mubr.f32.gmra.mrb[0].mxu0 %v1468
    %v1807 = vpop.f32.mrb[0].mxu0
    %v1808 = vadd.f32 %v1343, %v1807
    %v1809 = vpop.f32.mrb[0].mxu0
    %1810 = vmatprep.mubr.f32.mxu0 0.0
    %1811 = vmatmul.mubr.f32.gmra.mrb[0].mxu0 %v1471
    %v1812 = vpop.f32.mrb[0].mxu0
    %v1813 = vadd.f32 %v1343, %v1812
    %v1814 = vpop.f32.mrb[0].mxu0
    %1815 = vmatprep.mubr.f32.mxu0 0.0
    %1816 = vmatmul.mubr.f32.gmra.mrb[0].mxu0 %v1474
    %v1817 = vpop.f32.mrb[0].mxu0
    %v1818 = vadd.f32 %v1343, %v1817
    %v1819 = vpop.f32.mrb[0].mxu0
    %1820 = vmatprep.mubr.f32.mxu0 0.0
    %1821 = vmatmul.mubr.f32.gmra.mrb[0].mxu0 %v1477
    %v1822 = vpop.f32.mrb[0].mxu0
    %v1823 = vadd.f32 %v1343, %v1822
    %v1824 = vpop.f32.mrb[0].mxu0
    %1825 = vmatprep.mubr.f32.mxu0 0.0
    %1826 = vmatmul.mubr.f32.gmra.mrb[0].mxu0 %v1480
    %v1827 = vpop.f32.mrb[0].mxu0
    %v1828 = vadd.f32 %v1343, %v1827
    %v1829 = vpop.f32.mrb[0].mxu0
    %1830 = vmatprep.mubr.f32.mxu0 0.0
    %1831 = vmatmul.mubr.f32.gmra.mrb[0].mxu0 %v1483
    %v1832 = vpop.f32.mrb[0].mxu0
    %v1833 = vadd.f32 %v1343, %v1832
    %v1834 = vpop.f32.mrb[0].mxu0
    %1835 = vmatprep.mubr.f32.mxu0 0.0
    %1836 = vmatmul.mubr.f32.gmra.mrb[0].mxu0 %v1486
    %v1837 = vpop.f32.mrb[0].mxu0
    %v1838 = vadd.f32 %v1343, %v1837
    %v1839 = vpop.f32.mrb[0].mxu0
    %1840 = vmatprep.mubr.f32.mxu0 0.0
    %1841 = vmatmul.mubr.f32.gmra.mrb[0].mxu0 %v1489
    %v1842 = vpop.f32.mrb[0].mxu0
    %v1843 = vadd.f32 %v1343, %v1842
    %v1844 = vpop.f32.mrb[0].mxu0
    %1845 = vmatprep.mubr.f32.mxu0 0.0
    %1846 = vmatmul.mubr.f32.gmra.mrb[0].mxu0 %v1492
    %v1847 = vpop.f32.mrb[0].mxu0
    %v1848 = vadd.f32 %v1343, %v1847
    %v1849 = vpop.f32.mrb[0].mxu0
    %1850 = vmatprep.mubr.f32.mxu0 0.0
    %1851 = vmatmul.mubr.f32.gmra.mrb[0].mxu0 %v1495
    %v1852 = vpop.f32.mrb[0].mxu0
    %v1853 = vadd.f32 %v1343, %v1852
    %v1854 = vpop.f32.mrb[0].mxu0
    %1855 = vmatprep.mubr.f32.mxu0 0.0
    %1856 = vmatmul.mubr.f32.gmra.mrb[0].mxu0 %v1498
    %v1857 = vpop.f32.mrb[0].mxu0
    %v1858 = vadd.f32 %v1343, %v1857
    %v1859 = vpop.f32.mrb[0].mxu0
    %1860 = vmatprep.mubr.f32.mxu0 0.0
    %1861 = vmatmul.mubr.f32.gmra.mrb[0].mxu0 %v1501
    %v1862 = vpop.f32.mrb[0].mxu0
    %v1863 = vadd.f32 %v1343, %v1862
    %v1864 = vpop.f32.mrb[0].mxu0
    %1865 = vmatprep.mubr.f32.mxu0 0.0
    %1866 = vmatmul.mubr.f32.gmra.mrb[0].mxu0 %v1504
    %v1867 = vpop.f32.mrb[0].mxu0
    %v1868 = vadd.f32 %v1343, %v1867
    %v1869 = vpop.f32.mrb[0].mxu0
    %1870 = vmatprep.mubr.f32.mxu0 0.0
    %1871 = vmatmul.mubr.f32.gmra.mrb[0].mxu0 %v1507
    %v1872 = vpop.f32.mrb[0].mxu0
    %v1873 = vadd.f32 %v1343, %v1872
    %v1874 = vpop.f32.mrb[0].mxu0
    %1875 = vmatprep.mubr.f32.mxu0 0.0
    %1876 = vmatmul.mubr.f32.gmra.mrb[0].mxu0 %v1510
    %v1877 = vpop.f32.mrb[0].mxu0
    %v1878 = vadd.f32 %v1343, %v1877
    %v1879 = vpop.f32.mrb[0].mxu0
    %1880 = vmatprep.mubr.f32.mxu0 0.0
    %1881 = vmatmul.mubr.f32.gmra.mrb[0].mxu0 %v1513
    %v1882 = vpop.f32.mrb[0].mxu0
    %v1883 = vadd.f32 %v1343, %v1882
    %v1884 = vpop.f32.mrb[0].mxu0
    %1885 = vmatprep.mubr.f32.mxu0 0.0
    %1886 = vmatmul.mubr.f32.gmra.mrb[0].mxu0 %v1516
    %v1887 = vpop.f32.mrb[0].mxu0
    %v1888 = vadd.f32 %v1343, %v1887
    %v1889 = vpop.f32.mrb[0].mxu0
    %1890 = vmatprep.mubr.f32.mxu0 0.0
    %1891 = vmatmul.mubr.f32.gmra.mrb[0].mxu0 %v1519
    %v1892 = vpop.f32.mrb[0].mxu0
    %v1893 = vadd.f32 %v1343, %v1892
    %v1894 = vpop.f32.mrb[0].mxu0
    %1895 = vmatprep.mubr.f32.mxu0 0.0
    %1896 = vmatmul.mubr.f32.gmra.mrb[0].mxu0 %v1522
    %v1897 = vpop.f32.mrb[0].mxu0
    %v1898 = vadd.f32 %v1343, %v1897
    %v1899 = vpop.f32.mrb[0].mxu0
    %1900 = vmatprep.mubr.f32.mxu0 0.0
    %1901 = vmatmul.mubr.f32.gmra.mrb[0].mxu0 %v1525
    %v1902 = vpop.f32.mrb[0].mxu0
    %v1903 = vadd.f32 %v1343, %v1902
    %v1904 = vpop.f32.mrb[0].mxu0
    %1905 = vmatprep.mubr.f32.mxu0 0.0
    %1906 = vmatmul.mubr.f32.gmra.mrb[0].mxu0 %v1528
    %v1907 = vpop.f32.mrb[0].mxu0
    %v1908 = vadd.f32 %v1343, %v1907
    %v1909 = vpop.f32.mrb[0].mxu0
    %1910 = vmatprep.mubr.f32.mxu0 0.0
    %1911 = vmatmul.mubr.f32.gmra.mrb[0].mxu0 %v1531
    %v1912 = vpop.f32.mrb[0].mxu0
    %v1913 = vadd.f32 %v1343, %v1912
    %v1914 = vpop.f32.mrb[0].mxu0
    %1915 = vmatprep.mubr.f32.mxu0 0.0
    %1916 = vmatmul.mubr.f32.gmra.mrb[0].mxu0 %v1534
    %v1917 = vpop.f32.mrb[0].mxu0
    %v1918 = vadd.f32 %v1343, %v1917
    %v1919 = vpop.f32.mrb[0].mxu0
    %1920 = vdwg.mxu0
    %v1921 = vld [vmem:[%s6 + $0x3] sm:$0x1]
    %v1922 = vld [vmem:[%s6 + $0x4] sm:$0x1]
    %v1923 = vld [vmem:[%s6 + $0x5] sm:$0x1]
    %v1924 = vld [vmem:[%s6 + $0x6] sm:$0x1]
    %v1925 = vsel %vm754, %v1603, 0.0
    %1926 = vadd.xlane.f32.xlu0 %v1925
    %v1927 = vpop.xlane.xlu0 %1926
    %v1928 = vsel %vm754, %v1608, 0.0
    %1929 = vadd.xlane.f32.xlu0 %v1928
    %v1930 = vpop.xlane.xlu0 %1929
    %v1931 = vsel %vm754, %v1613, 0.0
    %1932 = vadd.xlane.f32.xlu0 %v1931
    %v1933 = vpop.xlane.xlu0 %1932
    %v1934 = vsel %vm754, %v1618, 0.0
    %1935 = vadd.xlane.f32.xlu0 %v1934
    %v1936 = vpop.xlane.xlu0 %1935
    %v1937 = vsel %vm754, %v1623, 0.0
    %1938 = vadd.xlane.f32.xlu0 %v1937
    %v1939 = vpop.xlane.xlu0 %1938
    %v1940 = vsel %vm754, %v1628, 0.0
    %1941 = vadd.xlane.f32.xlu0 %v1940
    %v1942 = vpop.xlane.xlu0 %1941
    %v1943 = vsel %vm754, %v1633, 0.0
    %1944 = vadd.xlane.f32.xlu0 %v1943
    %v1945 = vpop.xlane.xlu0 %1944
    %v1946 = vsel %vm754, %v1638, 0.0
    %1947 = vadd.xlane.f32.xlu0 %v1946
    %v1948 = vpop.xlane.xlu0 %1947
    %v1949 = vsel %vm754, %v1643, 0.0
    %1950 = vadd.xlane.f32.xlu0 %v1949
    %v1951 = vpop.xlane.xlu0 %1950
    %v1952 = vsel %vm754, %v1648, 0.0
    %1953 = vadd.xlane.f32.xlu0 %v1952
    %v1954 = vpop.xlane.xlu0 %1953
    %v1955 = vsel %vm754, %v1653, 0.0
    %1956 = vadd.xlane.f32.xlu0 %v1955
    %v1957 = vpop.xlane.xlu0 %1956
    %v1958 = vsel %vm754, %v1658, 0.0
    %1959 = vadd.xlane.f32.xlu0 %v1958
    %v1960 = vpop.xlane.xlu0 %1959
    %v1961 = vsel %vm754, %v1663, 0.0
    %1962 = vadd.xlane.f32.xlu0 %v1961
    %v1963 = vpop.xlane.xlu0 %1962
    %v1964 = vsel %vm754, %v1668, 0.0
    %1965 = vadd.xlane.f32.xlu0 %v1964
    %v1966 = vpop.xlane.xlu0 %1965
    %v1967 = vsel %vm754, %v1673, 0.0
    %1968 = vadd.xlane.f32.xlu0 %v1967
    %v1969 = vpop.xlane.xlu0 %1968
    %v1970 = vsel %vm754, %v1678, 0.0
    %1971 = vadd.xlane.f32.xlu0 %v1970
    %v1972 = vpop.xlane.xlu0 %1971
    %v1973 = vsel %vm754, %v1683, 0.0
    %1974 = vadd.xlane.f32.xlu0 %v1973
    %v1975 = vpop.xlane.xlu0 %1974
    %v1976 = vsel %vm754, %v1688, 0.0
    %1977 = vadd.xlane.f32.xlu0 %v1976
    %v1978 = vpop.xlane.xlu0 %1977
    %v1979 = vsel %vm754, %v1693, 0.0
    %1980 = vadd.xlane.f32.xlu0 %v1979
    %v1981 = vpop.xlane.xlu0 %1980
    %v1982 = vsel %vm754, %v1698, 0.0
    %1983 = vadd.xlane.f32.xlu0 %v1982
    %v1984 = vpop.xlane.xlu0 %1983
    %v1985 = vsel %vm754, %v1703, 0.0
    %1986 = vadd.xlane.f32.xlu0 %v1985
    %v1987 = vpop.xlane.xlu0 %1986
    %v1988 = vsel %vm754, %v1708, 0.0
    %1989 = vadd.xlane.f32.xlu0 %v1988
    %v1990 = vpop.xlane.xlu0 %1989
    %v1991 = vsel %vm754, %v1713, 0.0
    %1992 = vadd.xlane.f32.xlu0 %v1991
    %v1993 = vpop.xlane.xlu0 %1992
    %v1994 = vsel %vm754, %v1718, 0.0
    %1995 = vadd.xlane.f32.xlu0 %v1994
    %v1996 = vpop.xlane.xlu0 %1995
    %v1997 = vsel %vm754, %v1723, 0.0
    %1998 = vadd.xlane.f32.xlu0 %v1997
    %v1999 = vpop.xlane.xlu0 %1998
    %v2000 = vsel %vm754, %v1728, 0.0
    %2001 = vadd.xlane.f32.xlu0 %v2000
    %v2002 = vpop.xlane.xlu0 %2001
    %v2003 = vsel %vm754, %v1733, 0.0
    %2004 = vadd.xlane.f32.xlu0 %v2003
    %v2005 = vpop.xlane.xlu0 %2004
    %v2006 = vsel %vm754, %v1738, 0.0
    %2007 = vadd.xlane.f32.xlu0 %v2006
    %v2008 = vpop.xlane.xlu0 %2007
    %v2009 = vsel %vm754, %v1743, 0.0
    %2010 = vadd.xlane.f32.xlu0 %v2009
    %v2011 = vpop.xlane.xlu0 %2010
    %v2012 = vsel %vm754, %v1748, 0.0
    %2013 = vadd.xlane.f32.xlu0 %v2012
    %v2014 = vpop.xlane.xlu0 %2013
    %v2015 = vsel %vm754, %v1753, 0.0
    %2016 = vadd.xlane.f32.xlu0 %v2015
    %v2017 = vpop.xlane.xlu0 %2016
    %v2018 = vsel %vm754, %v1758, 0.0
    %2019 = vadd.xlane.f32.xlu0 %v2018
    %v2020 = vpop.xlane.xlu0 %2019
    %v2021 = vsel %vm754, %v1763, 0.0
    %2022 = vadd.xlane.f32.xlu0 %v2021
    %v2023 = vpop.xlane.xlu0 %2022
    %v2024 = vsel %vm754, %v1768, 0.0
    %2025 = vadd.xlane.f32.xlu0 %v2024
    %v2026 = vpop.xlane.xlu0 %2025
    %v2027 = vsel %vm754, %v1773, 0.0
    %2028 = vadd.xlane.f32.xlu0 %v2027
    %v2029 = vpop.xlane.xlu0 %2028
    %v2030 = vsel %vm754, %v1778, 0.0
    %2031 = vadd.xlane.f32.xlu0 %v2030
    %v2032 = vpop.xlane.xlu0 %2031
    %v2033 = vsel %vm754, %v1783, 0.0
    %2034 = vadd.xlane.f32.xlu0 %v2033
    %v2035 = vpop.xlane.xlu0 %2034
    %v2036 = vsel %vm754, %v1788, 0.0
    %2037 = vadd.xlane.f32.xlu0 %v2036
    %v2038 = vpop.xlane.xlu0 %2037
    %v2039 = vsel %vm754, %v1793, 0.0
    %2040 = vadd.xlane.f32.xlu0 %v2039
    %v2041 = vpop.xlane.xlu0 %2040
    %v2042 = vsel %vm754, %v1798, 0.0
    %2043 = vadd.xlane.f32.xlu0 %v2042
    %v2044 = vpop.xlane.xlu0 %2043
    %v2045 = vsel %vm754, %v1803, 0.0
    %2046 = vadd.xlane.f32.xlu0 %v2045
    %v2047 = vpop.xlane.xlu0 %2046
    %v2048 = vsel %vm754, %v1808, 0.0
    %2049 = vadd.xlane.f32.xlu0 %v2048
    %v2050 = vpop.xlane.xlu0 %2049
    %v2051 = vsel %vm754, %v1813, 0.0
    %2052 = vadd.xlane.f32.xlu0 %v2051
    %v2053 = vpop.xlane.xlu0 %2052
    %v2054 = vsel %vm754, %v1818, 0.0
    %2055 = vadd.xlane.f32.xlu0 %v2054
    %v2056 = vpop.xlane.xlu0 %2055
    %v2057 = vsel %vm754, %v1823, 0.0
    %2058 = vadd.xlane.f32.xlu0 %v2057
    %v2059 = vpop.xlane.xlu0 %2058
    %v2060 = vsel %vm754, %v1828, 0.0
    %2061 = vadd.xlane.f32.xlu0 %v2060
    %v2062 = vpop.xlane.xlu0 %2061
    %v2063 = vsel %vm754, %v1833, 0.0
    %2064 = vadd.xlane.f32.xlu0 %v2063
    %v2065 = vpop.xlane.xlu0 %2064
    %v2066 = vsel %vm754, %v1838, 0.0
    %2067 = vadd.xlane.f32.xlu0 %v2066
    %v2068 = vpop.xlane.xlu0 %2067
    %v2069 = vsel %vm754, %v1843, 0.0
    %2070 = vadd.xlane.f32.xlu0 %v2069
    %v2071 = vpop.xlane.xlu0 %2070
    %v2072 = vsel %vm754, %v1848, 0.0
    %2073 = vadd.xlane.f32.xlu0 %v2072
    %v2074 = vpop.xlane.xlu0 %2073
    %v2075 = vsel %vm754, %v1853, 0.0
    %2076 = vadd.xlane.f32.xlu0 %v2075
    %v2077 = vpop.xlane.xlu0 %2076
    %v2078 = vsel %vm754, %v1858, 0.0
    %2079 = vadd.xlane.f32.xlu0 %v2078
    %v2080 = vpop.xlane.xlu0 %2079
    %v2081 = vsel %vm754, %v1863, 0.0
    %2082 = vadd.xlane.f32.xlu0 %v2081
    %v2083 = vpop.xlane.xlu0 %2082
    %v2084 = vsel %vm754, %v1868, 0.0
    %2085 = vadd.xlane.f32.xlu0 %v2084
    %v2086 = vpop.xlane.xlu0 %2085
    %v2087 = vsel %vm754, %v1873, 0.0
    %2088 = vadd.xlane.f32.xlu0 %v2087
    %v2089 = vpop.xlane.xlu0 %2088
    %v2090 = vsel %vm754, %v1878, 0.0
    %2091 = vadd.xlane.f32.xlu0 %v2090
    %v2092 = vpop.xlane.xlu0 %2091
    %v2093 = vsel %vm754, %v1883, 0.0
    %2094 = vadd.xlane.f32.xlu0 %v2093
    %v2095 = vpop.xlane.xlu0 %2094
    %v2096 = vsel %vm754, %v1888, 0.0
    %2097 = vadd.xlane.f32.xlu0 %v2096
    %v2098 = vpop.xlane.xlu0 %2097
    %v2099 = vsel %vm754, %v1893, 0.0
    %2100 = vadd.xlane.f32.xlu0 %v2099
    %v2101 = vpop.xlane.xlu0 %2100
    %v2102 = vsel %vm754, %v1898, 0.0
    %2103 = vadd.xlane.f32.xlu0 %v2102
    %v2104 = vpop.xlane.xlu0 %2103
    %v2105 = vsel %vm754, %v1903, 0.0
    %2106 = vadd.xlane.f32.xlu0 %v2105
    %v2107 = vpop.xlane.xlu0 %2106
    %v2108 = vsel %vm754, %v1908, 0.0
    %2109 = vadd.xlane.f32.xlu0 %v2108
    %v2110 = vpop.xlane.xlu0 %2109
    %v2111 = vsel %vm754, %v1913, 0.0
    %2112 = vadd.xlane.f32.xlu0 %v2111
    %v2113 = vpop.xlane.xlu0 %2112
    %v2114 = vsel %vm754, %v1918, 0.0
    %2115 = vadd.xlane.f32.xlu0 %v2114
    %v2116 = vpop.xlane.xlu0 %2115
    %v2117 = vrcp.pop 64.0
    %v2118 = vmul.f32 %v1927, %v2117
    %v2119 = vmul.f32 %v1930, %v2117
    %v2120 = vmul.f32 %v1933, %v2117
    %v2121 = vmul.f32 %v1936, %v2117
    %v2122 = vmul.f32 %v1939, %v2117
    %v2123 = vmul.f32 %v1942, %v2117
    %v2124 = vmul.f32 %v1945, %v2117
    %v2125 = vmul.f32 %v1948, %v2117
    %v2126 = vmul.f32 %v1951, %v2117
    %v2127 = vmul.f32 %v1954, %v2117
    %v2128 = vmul.f32 %v1957, %v2117
    %v2129 = vmul.f32 %v1960, %v2117
    %v2130 = vmul.f32 %v1963, %v2117
    %v2131 = vmul.f32 %v1966, %v2117
    %v2132 = vmul.f32 %v1969, %v2117
    %v2133 = vmul.f32 %v1972, %v2117
    %v2134 = vmul.f32 %v1975, %v2117
    %v2135 = vmul.f32 %v1978, %v2117
    %v2136 = vmul.f32 %v1981, %v2117
    %v2137 = vmul.f32 %v1984, %v2117
    %v2138 = vmul.f32 %v1987, %v2117
    %v2139 = vmul.f32 %v1990, %v2117
    %v2140 = vmul.f32 %v1993, %v2117
    %v2141 = vmul.f32 %v1996, %v2117
    %v2142 = vmul.f32 %v1999, %v2117
    %v2143 = vmul.f32 %v2002, %v2117
    %v2144 = vmul.f32 %v2005, %v2117
    %v2145 = vmul.f32 %v2008, %v2117
    %v2146 = vmul.f32 %v2011, %v2117
    %v2147 = vmul.f32 %v2014, %v2117
    %v2148 = vmul.f32 %v2017, %v2117
    %v2149 = vmul.f32 %v2020, %v2117
    %v2150 = vmul.f32 %v2023, %v2117
    %v2151 = vmul.f32 %v2026, %v2117
    %v2152 = vmul.f32 %v2029, %v2117
    %v2153 = vmul.f32 %v2032, %v2117
    %v2154 = vmul.f32 %v2035, %v2117
    %v2155 = vmul.f32 %v2038, %v2117
    %v2156 = vmul.f32 %v2041, %v2117
    %v2157 = vmul.f32 %v2044, %v2117
    %v2158 = vmul.f32 %v2047, %v2117
    %v2159 = vmul.f32 %v2050, %v2117
    %v2160 = vmul.f32 %v2053, %v2117
    %v2161 = vmul.f32 %v2056, %v2117
    %v2162 = vmul.f32 %v2059, %v2117
    %v2163 = vmul.f32 %v2062, %v2117
    %v2164 = vmul.f32 %v2065, %v2117
    %v2165 = vmul.f32 %v2068, %v2117
    %v2166 = vmul.f32 %v2071, %v2117
    %v2167 = vmul.f32 %v2074, %v2117
    %v2168 = vmul.f32 %v2077, %v2117
    %v2169 = vmul.f32 %v2080, %v2117
    %v2170 = vmul.f32 %v2083, %v2117
    %v2171 = vmul.f32 %v2086, %v2117
    %v2172 = vmul.f32 %v2089, %v2117
    %v2173 = vmul.f32 %v2092, %v2117
    %v2174 = vmul.f32 %v2095, %v2117
    %v2175 = vmul.f32 %v2098, %v2117
    %v2176 = vmul.f32 %v2101, %v2117
    %v2177 = vmul.f32 %v2104, %v2117
    %v2178 = vmul.f32 %v2107, %v2117
    %v2179 = vmul.f32 %v2110, %v2117
    %v2180 = vmul.f32 %v2113, %v2117
    %v2181 = vmul.f32 %v2116, %v2117
    %v2182 = vsub.f32 %v1603, %v2118
    %v2183 = vsub.f32 %v1608, %v2119
    %v2184 = vsub.f32 %v1613, %v2120
    %v2185 = vsub.f32 %v1618, %v2121
    %v2186 = vsub.f32 %v1623, %v2122
    %v2187 = vsub.f32 %v1628, %v2123
    %v2188 = vsub.f32 %v1633, %v2124
    %v2189 = vsub.f32 %v1638, %v2125
    %v2190 = vsub.f32 %v1643, %v2126
    %v2191 = vsub.f32 %v1648, %v2127
    %v2192 = vsub.f32 %v1653, %v2128
    %v2193 = vsub.f32 %v1658, %v2129
    %v2194 = vsub.f32 %v1663, %v2130
    %v2195 = vsub.f32 %v1668, %v2131
    %v2196 = vsub.f32 %v1673, %v2132
    %v2197 = vsub.f32 %v1678, %v2133
    %v2198 = vsub.f32 %v1683, %v2134
    %v2199 = vsub.f32 %v1688, %v2135
    %v2200 = vsub.f32 %v1693, %v2136
    %v2201 = vsub.f32 %v1698, %v2137
    %v2202 = vsub.f32 %v1703, %v2138
    %v2203 = vsub.f32 %v1708, %v2139
    %v2204 = vsub.f32 %v1713, %v2140
    %v2205 = vsub.f32 %v1718, %v2141
    %v2206 = vsub.f32 %v1723, %v2142
    %v2207 = vsub.f32 %v1728, %v2143
    %v2208 = vsub.f32 %v1733, %v2144
    %v2209 = vsub.f32 %v1738, %v2145
    %v2210 = vsub.f32 %v1743, %v2146
    %v2211 = vsub.f32 %v1748, %v2147
    %v2212 = vsub.f32 %v1753, %v2148
    %v2213 = vsub.f32 %v1758, %v2149
    %v2214 = vsub.f32 %v1763, %v2150
    %v2215 = vsub.f32 %v1768, %v2151
    %v2216 = vsub.f32 %v1773, %v2152
    %v2217 = vsub.f32 %v1778, %v2153
    %v2218 = vsub.f32 %v1783, %v2154
    %v2219 = vsub.f32 %v1788, %v2155
    %v2220 = vsub.f32 %v1793, %v2156
    %v2221 = vsub.f32 %v1798, %v2157
    %v2222 = vsub.f32 %v1803, %v2158
    %v2223 = vsub.f32 %v1808, %v2159
    %v2224 = vsub.f32 %v1813, %v2160
    %v2225 = vsub.f32 %v1818, %v2161
    %v2226 = vsub.f32 %v1823, %v2162
    %v2227 = vsub.f32 %v1828, %v2163
    %v2228 = vsub.f32 %v1833, %v2164
    %v2229 = vsub.f32 %v1838, %v2165
    %v2230 = vsub.f32 %v1843, %v2166
    %v2231 = vsub.f32 %v1848, %v2167
    %v2232 = vsub.f32 %v1853, %v2168
    %v2233 = vsub.f32 %v1858, %v2169
    %v2234 = vsub.f32 %v1863, %v2170
    %v2235 = vsub.f32 %v1868, %v2171
    %v2236 = vsub.f32 %v1873, %v2172
    %v2237 = vsub.f32 %v1878, %v2173
    %v2238 = vsub.f32 %v1883, %v2174
    %v2239 = vsub.f32 %v1888, %v2175
    %v2240 = vsub.f32 %v1893, %v2176
    %v2241 = vsub.f32 %v1898, %v2177
    %v2242 = vsub.f32 %v1903, %v2178
    %v2243 = vsub.f32 %v1908, %v2179
    %v2244 = vsub.f32 %v1913, %v2180
    %v2245 = vsub.f32 %v1918, %v2181
    %v2246 = vmul.f32 %v2182, %v2182
    %v2247 = vmul.f32 %v2183, %v2183
    %v2248 = vmul.f32 %v2184, %v2184
    %v2249 = vmul.f32 %v2185, %v2185
    %v2250 = vmul.f32 %v2186, %v2186
    %v2251 = vmul.f32 %v2187, %v2187
    %v2252 = vmul.f32 %v2188, %v2188
    %v2253 = vmul.f32 %v2189, %v2189
    %v2254 = vmul.f32 %v2190, %v2190
    %v2255 = vmul.f32 %v2191, %v2191
    %v2256 = vmul.f32 %v2192, %v2192
    %v2257 = vmul.f32 %v2193, %v2193
    %v2258 = vmul.f32 %v2194, %v2194
    %v2259 = vmul.f32 %v2195, %v2195
    %v2260 = vmul.f32 %v2196, %v2196
    %v2261 = vmul.f32 %v2197, %v2197
    %v2262 = vmul.f32 %v2198, %v2198
    %v2263 = vmul.f32 %v2199, %v2199
    %v2264 = vmul.f32 %v2200, %v2200
    %v2265 = vmul.f32 %v2201, %v2201
    %v2266 = vmul.f32 %v2202, %v2202
    %v2267 = vmul.f32 %v2203, %v2203
    %v2268 = vmul.f32 %v2204, %v2204
    %v2269 = vmul.f32 %v2205, %v2205
    %v2270 = vmul.f32 %v2206, %v2206
    %v2271 = vmul.f32 %v2207, %v2207
    %v2272 = vmul.f32 %v2208, %v2208
    %v2273 = vmul.f32 %v2209, %v2209
    %v2274 = vmul.f32 %v2210, %v2210
    %v2275 = vmul.f32 %v2211, %v2211
    %v2276 = vmul.f32 %v2212, %v2212
    %v2277 = vmul.f32 %v2213, %v2213
    %v2278 = vmul.f32 %v2214, %v2214
    %v2279 = vmul.f32 %v2215, %v2215
    %v2280 = vmul.f32 %v2216, %v2216
    %v2281 = vmul.f32 %v2217, %v2217
    %v2282 = vmul.f32 %v2218, %v2218
    %v2283 = vmul.f32 %v2219, %v2219
    %v2284 = vmul.f32 %v2220, %v2220
    %v2285 = vmul.f32 %v2221, %v2221
    %v2286 = vmul.f32 %v2222, %v2222
    %v2287 = vmul.f32 %v2223, %v2223
    %v2288 = vmul.f32 %v2224, %v2224
    %v2289 = vmul.f32 %v2225, %v2225
    %v2290 = vmul.f32 %v2226, %v2226
    %v2291 = vmul.f32 %v2227, %v2227
    %v2292 = vmul.f32 %v2228, %v2228
    %v2293 = vmul.f32 %v2229, %v2229
    %v2294 = vmul.f32 %v2230, %v2230
    %v2295 = vmul.f32 %v2231, %v2231
    %v2296 = vmul.f32 %v2232, %v2232
    %v2297 = vmul.f32 %v2233, %v2233
    %v2298 = vmul.f32 %v2234, %v2234
    %v2299 = vmul.f32 %v2235, %v2235
    %v2300 = vmul.f32 %v2236, %v2236
    %v2301 = vmul.f32 %v2237, %v2237
    %v2302 = vmul.f32 %v2238, %v2238
    %v2303 = vmul.f32 %v2239, %v2239
    %v2304 = vmul.f32 %v2240, %v2240
    %v2305 = vmul.f32 %v2241, %v2241
    %v2306 = vmul.f32 %v2242, %v2242
    %v2307 = vmul.f32 %v2243, %v2243
    %v2308 = vmul.f32 %v2244, %v2244
    %v2309 = vmul.f32 %v2245, %v2245
    %v2310 = vsel %vm754, %v2246, 0.0
    %2311 = vadd.xlane.f32.xlu0 %v2310
    %v2312 = vpop.xlane.xlu0 %2311
    %v2313 = vsel %vm754, %v2247, 0.0
    %2314 = vadd.xlane.f32.xlu0 %v2313
    %v2315 = vpop.xlane.xlu0 %2314
    %v2316 = vsel %vm754, %v2248, 0.0
    %2317 = vadd.xlane.f32.xlu0 %v2316
    %v2318 = vpop.xlane.xlu0 %2317
    %v2319 = vsel %vm754, %v2249, 0.0
    %2320 = vadd.xlane.f32.xlu0 %v2319
    %v2321 = vpop.xlane.xlu0 %2320
    %v2322 = vsel %vm754, %v2250, 0.0
    %2323 = vadd.xlane.f32.xlu0 %v2322
    %v2324 = vpop.xlane.xlu0 %2323
    %v2325 = vsel %vm754, %v2251, 0.0
    %2326 = vadd.xlane.f32.xlu0 %v2325
    %v2327 = vpop.xlane.xlu0 %2326
    %v2328 = vsel %vm754, %v2252, 0.0
    %2329 = vadd.xlane.f32.xlu0 %v2328
    %v2330 = vpop.xlane.xlu0 %2329
    %v2331 = vsel %vm754, %v2253, 0.0
    %2332 = vadd.xlane.f32.xlu0 %v2331
    %v2333 = vpop.xlane.xlu0 %2332
    %v2334 = vsel %vm754, %v2254, 0.0
    %2335 = vadd.xlane.f32.xlu0 %v2334
    %v2336 = vpop.xlane.xlu0 %2335
    %v2337 = vsel %vm754, %v2255, 0.0
    %2338 = vadd.xlane.f32.xlu0 %v2337
    %v2339 = vpop.xlane.xlu0 %2338
    %v2340 = vsel %vm754, %v2256, 0.0
    %2341 = vadd.xlane.f32.xlu0 %v2340
    %v2342 = vpop.xlane.xlu0 %2341
    %v2343 = vsel %vm754, %v2257, 0.0
    %2344 = vadd.xlane.f32.xlu0 %v2343
    %v2345 = vpop.xlane.xlu0 %2344
    %v2346 = vsel %vm754, %v2258, 0.0
    %2347 = vadd.xlane.f32.xlu0 %v2346
    %v2348 = vpop.xlane.xlu0 %2347
    %v2349 = vsel %vm754, %v2259, 0.0
    %2350 = vadd.xlane.f32.xlu0 %v2349
    %v2351 = vpop.xlane.xlu0 %2350
    %v2352 = vsel %vm754, %v2260, 0.0
    %2353 = vadd.xlane.f32.xlu0 %v2352
    %v2354 = vpop.xlane.xlu0 %2353
    %v2355 = vsel %vm754, %v2261, 0.0
    %2356 = vadd.xlane.f32.xlu0 %v2355
    %v2357 = vpop.xlane.xlu0 %2356
    %v2358 = vsel %vm754, %v2262, 0.0
    %2359 = vadd.xlane.f32.xlu0 %v2358
    %v2360 = vpop.xlane.xlu0 %2359
    %v2361 = vsel %vm754, %v2263, 0.0
    %2362 = vadd.xlane.f32.xlu0 %v2361
    %v2363 = vpop.xlane.xlu0 %2362
    %v2364 = vsel %vm754, %v2264, 0.0
    %2365 = vadd.xlane.f32.xlu0 %v2364
    %v2366 = vpop.xlane.xlu0 %2365
    %v2367 = vsel %vm754, %v2265, 0.0
    %2368 = vadd.xlane.f32.xlu0 %v2367
    %v2369 = vpop.xlane.xlu0 %2368
    %v2370 = vsel %vm754, %v2266, 0.0
    %2371 = vadd.xlane.f32.xlu0 %v2370
    %v2372 = vpop.xlane.xlu0 %2371
    %v2373 = vsel %vm754, %v2267, 0.0
    %2374 = vadd.xlane.f32.xlu0 %v2373
    %v2375 = vpop.xlane.xlu0 %2374
    %v2376 = vsel %vm754, %v2268, 0.0
    %2377 = vadd.xlane.f32.xlu0 %v2376
    %v2378 = vpop.xlane.xlu0 %2377
    %v2379 = vsel %vm754, %v2269, 0.0
    %2380 = vadd.xlane.f32.xlu0 %v2379
    %v2381 = vpop.xlane.xlu0 %2380
    %v2382 = vsel %vm754, %v2270, 0.0
    %2383 = vadd.xlane.f32.xlu0 %v2382
    %v2384 = vpop.xlane.xlu0 %2383
    %v2385 = vsel %vm754, %v2271, 0.0
    %2386 = vadd.xlane.f32.xlu0 %v2385
    %v2387 = vpop.xlane.xlu0 %2386
    %v2388 = vsel %vm754, %v2272, 0.0
    %2389 = vadd.xlane.f32.xlu0 %v2388
    %v2390 = vpop.xlane.xlu0 %2389
    %v2391 = vsel %vm754, %v2273, 0.0
    %2392 = vadd.xlane.f32.xlu0 %v2391
    %v2393 = vpop.xlane.xlu0 %2392
    %v2394 = vsel %vm754, %v2274, 0.0
    %2395 = vadd.xlane.f32.xlu0 %v2394
    %v2396 = vpop.xlane.xlu0 %2395
    %v2397 = vsel %vm754, %v2275, 0.0
    %2398 = vadd.xlane.f32.xlu0 %v2397
    %v2399 = vpop.xlane.xlu0 %2398
    %v2400 = vsel %vm754, %v2276, 0.0
    %2401 = vadd.xlane.f32.xlu0 %v2400
    %v2402 = vpop.xlane.xlu0 %2401
    %v2403 = vsel %vm754, %v2277, 0.0
    %2404 = vadd.xlane.f32.xlu0 %v2403
    %v2405 = vpop.xlane.xlu0 %2404
    %v2406 = vsel %vm754, %v2278, 0.0
    %2407 = vadd.xlane.f32.xlu0 %v2406
    %v2408 = vpop.xlane.xlu0 %2407
    %v2409 = vsel %vm754, %v2279, 0.0
    %2410 = vadd.xlane.f32.xlu0 %v2409
    %v2411 = vpop.xlane.xlu0 %2410
    %v2412 = vsel %vm754, %v2280, 0.0
    %2413 = vadd.xlane.f32.xlu0 %v2412
    %v2414 = vpop.xlane.xlu0 %2413
    %v2415 = vsel %vm754, %v2281, 0.0
    %2416 = vadd.xlane.f32.xlu0 %v2415
    %v2417 = vpop.xlane.xlu0 %2416
    %v2418 = vsel %vm754, %v2282, 0.0
    %2419 = vadd.xlane.f32.xlu0 %v2418
    %v2420 = vpop.xlane.xlu0 %2419
    %v2421 = vsel %vm754, %v2283, 0.0
    %2422 = vadd.xlane.f32.xlu0 %v2421
    %v2423 = vpop.xlane.xlu0 %2422
    %v2424 = vsel %vm754, %v2284, 0.0
    %2425 = vadd.xlane.f32.xlu0 %v2424
    %v2426 = vpop.xlane.xlu0 %2425
    %v2427 = vsel %vm754, %v2285, 0.0
    %2428 = vadd.xlane.f32.xlu0 %v2427
    %v2429 = vpop.xlane.xlu0 %2428
    %v2430 = vsel %vm754, %v2286, 0.0
    %2431 = vadd.xlane.f32.xlu0 %v2430
    %v2432 = vpop.xlane.xlu0 %2431
    %v2433 = vsel %vm754, %v2287, 0.0
    %2434 = vadd.xlane.f32.xlu0 %v2433
    %v2435 = vpop.xlane.xlu0 %2434
    %v2436 = vsel %vm754, %v2288, 0.0
    %2437 = vadd.xlane.f32.xlu0 %v2436
    %v2438 = vpop.xlane.xlu0 %2437
    %v2439 = vsel %vm754, %v2289, 0.0
    %2440 = vadd.xlane.f32.xlu0 %v2439
    %v2441 = vpop.xlane.xlu0 %2440
    %v2442 = vsel %vm754, %v2290, 0.0
    %2443 = vadd.xlane.f32.xlu0 %v2442
    %v2444 = vpop.xlane.xlu0 %2443
    %v2445 = vsel %vm754, %v2291, 0.0
    %2446 = vadd.xlane.f32.xlu0 %v2445
    %v2447 = vpop.xlane.xlu0 %2446
    %v2448 = vsel %vm754, %v2292, 0.0
    %2449 = vadd.xlane.f32.xlu0 %v2448
    %v2450 = vpop.xlane.xlu0 %2449
    %v2451 = vsel %vm754, %v2293, 0.0
    %2452 = vadd.xlane.f32.xlu0 %v2451
    %v2453 = vpop.xlane.xlu0 %2452
    %v2454 = vsel %vm754, %v2294, 0.0
    %2455 = vadd.xlane.f32.xlu0 %v2454
    %v2456 = vpop.xlane.xlu0 %2455
    %v2457 = vsel %vm754, %v2295, 0.0
    %2458 = vadd.xlane.f32.xlu0 %v2457
    %v2459 = vpop.xlane.xlu0 %2458
    %v2460 = vsel %vm754, %v2296, 0.0
    %2461 = vadd.xlane.f32.xlu0 %v2460
    %v2462 = vpop.xlane.xlu0 %2461
    %v2463 = vsel %vm754, %v2297, 0.0
    %2464 = vadd.xlane.f32.xlu0 %v2463
    %v2465 = vpop.xlane.xlu0 %2464
    %v2466 = vsel %vm754, %v2298, 0.0
    %2467 = vadd.xlane.f32.xlu0 %v2466
    %v2468 = vpop.xlane.xlu0 %2467
    %v2469 = vsel %vm754, %v2299, 0.0
    %2470 = vadd.xlane.f32.xlu0 %v2469
    %v2471 = vpop.xlane.xlu0 %2470
    %v2472 = vsel %vm754, %v2300, 0.0
    %2473 = vadd.xlane.f32.xlu0 %v2472
    %v2474 = vpop.xlane.xlu0 %2473
    %v2475 = vsel %vm754, %v2301, 0.0
    %2476 = vadd.xlane.f32.xlu0 %v2475
    %v2477 = vpop.xlane.xlu0 %2476
    %v2478 = vsel %vm754, %v2302, 0.0
    %2479 = vadd.xlane.f32.xlu0 %v2478
    %v2480 = vpop.xlane.xlu0 %2479
    %v2481 = vsel %vm754, %v2303, 0.0
    %2482 = vadd.xlane.f32.xlu0 %v2481
    %v2483 = vpop.xlane.xlu0 %2482
    %v2484 = vsel %vm754, %v2304, 0.0
    %2485 = vadd.xlane.f32.xlu0 %v2484
    %v2486 = vpop.xlane.xlu0 %2485
    %v2487 = vsel %vm754, %v2305, 0.0
    %2488 = vadd.xlane.f32.xlu0 %v2487
    %v2489 = vpop.xlane.xlu0 %2488
    %v2490 = vsel %vm754, %v2306, 0.0
    %2491 = vadd.xlane.f32.xlu0 %v2490
    %v2492 = vpop.xlane.xlu0 %2491
    %v2493 = vsel %vm754, %v2307, 0.0
    %2494 = vadd.xlane.f32.xlu0 %v2493
    %v2495 = vpop.xlane.xlu0 %2494
    %v2496 = vsel %vm754, %v2308, 0.0
    %2497 = vadd.xlane.f32.xlu0 %v2496
    %v2498 = vpop.xlane.xlu0 %2497
    %v2499 = vsel %vm754, %v2309, 0.0
    %2500 = vadd.xlane.f32.xlu0 %v2499
    %v2501 = vpop.xlane.xlu0 %2500
    %v2502 = vmul.f32 %v2312, %v2117
    %v2503 = vmul.f32 %v2315, %v2117
    %v2504 = vmul.f32 %v2318, %v2117
    %v2505 = vmul.f32 %v2321, %v2117
    %v2506 = vmul.f32 %v2324, %v2117
    %v2507 = vmul.f32 %v2327, %v2117
    %v2508 = vmul.f32 %v2330, %v2117
    %v2509 = vmul.f32 %v2333, %v2117
    %v2510 = vmul.f32 %v2336, %v2117
    %v2511 = vmul.f32 %v2339, %v2117
    %v2512 = vmul.f32 %v2342, %v2117
    %v2513 = vmul.f32 %v2345, %v2117
    %v2514 = vmul.f32 %v2348, %v2117
    %v2515 = vmul.f32 %v2351, %v2117
    %v2516 = vmul.f32 %v2354, %v2117
    %v2517 = vmul.f32 %v2357, %v2117
    %v2518 = vmul.f32 %v2360, %v2117
    %v2519 = vmul.f32 %v2363, %v2117
    %v2520 = vmul.f32 %v2366, %v2117
    %v2521 = vmul.f32 %v2369, %v2117
    %v2522 = vmul.f32 %v2372, %v2117
    %v2523 = vmul.f32 %v2375, %v2117
    %v2524 = vmul.f32 %v2378, %v2117
    %v2525 = vmul.f32 %v2381, %v2117
    %v2526 = vmul.f32 %v2384, %v2117
    %v2527 = vmul.f32 %v2387, %v2117
    %v2528 = vmul.f32 %v2390, %v2117
    %v2529 = vmul.f32 %v2393, %v2117
    %v2530 = vmul.f32 %v2396, %v2117
    %v2531 = vmul.f32 %v2399, %v2117
    %v2532 = vmul.f32 %v2402, %v2117
    %v2533 = vmul.f32 %v2405, %v2117
    %v2534 = vmul.f32 %v2408, %v2117
    %v2535 = vmul.f32 %v2411, %v2117
    %v2536 = vmul.f32 %v2414, %v2117
    %v2537 = vmul.f32 %v2417, %v2117
    %v2538 = vmul.f32 %v2420, %v2117
    %v2539 = vmul.f32 %v2423, %v2117
    %v2540 = vmul.f32 %v2426, %v2117
    %v2541 = vmul.f32 %v2429, %v2117
    %v2542 = vmul.f32 %v2432, %v2117
    %v2543 = vmul.f32 %v2435, %v2117
    %v2544 = vmul.f32 %v2438, %v2117
    %v2545 = vmul.f32 %v2441, %v2117
    %v2546 = vmul.f32 %v2444, %v2117
    %v2547 = vmul.f32 %v2447, %v2117
    %v2548 = vmul.f32 %v2450, %v2117
    %v2549 = vmul.f32 %v2453, %v2117
    %v2550 = vmul.f32 %v2456, %v2117
    %v2551 = vmul.f32 %v2459, %v2117
    %v2552 = vmul.f32 %v2462, %v2117
    %v2553 = vmul.f32 %v2465, %v2117
    %v2554 = vmul.f32 %v2468, %v2117
    %v2555 = vmul.f32 %v2471, %v2117
    %v2556 = vmul.f32 %v2474, %v2117
    %v2557 = vmul.f32 %v2477, %v2117
    %v2558 = vmul.f32 %v2480, %v2117
    %v2559 = vmul.f32 %v2483, %v2117
    %v2560 = vmul.f32 %v2486, %v2117
    %v2561 = vmul.f32 %v2489, %v2117
    %v2562 = vmul.f32 %v2492, %v2117
    %v2563 = vmul.f32 %v2495, %v2117
    %v2564 = vmul.f32 %v2498, %v2117
    %v2565 = vmul.f32 %v2501, %v2117
    %v2566 = vadd.f32 %v2502, 1e-05
    %v2567 = vadd.f32 %v2503, 1e-05
    %v2568 = vadd.f32 %v2504, 1e-05
    %v2569 = vadd.f32 %v2505, 1e-05
    %v2570 = vadd.f32 %v2506, 1e-05
    %v2571 = vadd.f32 %v2507, 1e-05
    %v2572 = vadd.f32 %v2508, 1e-05
    %v2573 = vadd.f32 %v2509, 1e-05
    %v2574 = vadd.f32 %v2510, 1e-05
    %v2575 = vadd.f32 %v2511, 1e-05
    %v2576 = vadd.f32 %v2512, 1e-05
    %v2577 = vadd.f32 %v2513, 1e-05
    %v2578 = vadd.f32 %v2514, 1e-05
    %v2579 = vadd.f32 %v2515, 1e-05
    %v2580 = vadd.f32 %v2516, 1e-05
    %v2581 = vadd.f32 %v2517, 1e-05
    %v2582 = vadd.f32 %v2518, 1e-05
    %v2583 = vadd.f32 %v2519, 1e-05
    %v2584 = vadd.f32 %v2520, 1e-05
    %v2585 = vadd.f32 %v2521, 1e-05
    %v2586 = vadd.f32 %v2522, 1e-05
    %v2587 = vadd.f32 %v2523, 1e-05
    %v2588 = vadd.f32 %v2524, 1e-05
    %v2589 = vadd.f32 %v2525, 1e-05
    %v2590 = vadd.f32 %v2526, 1e-05
    %v2591 = vadd.f32 %v2527, 1e-05
    %v2592 = vadd.f32 %v2528, 1e-05
    %v2593 = vadd.f32 %v2529, 1e-05
    %v2594 = vadd.f32 %v2530, 1e-05
    %v2595 = vadd.f32 %v2531, 1e-05
    %v2596 = vadd.f32 %v2532, 1e-05
    %v2597 = vadd.f32 %v2533, 1e-05
    %v2598 = vadd.f32 %v2534, 1e-05
    %v2599 = vadd.f32 %v2535, 1e-05
    %v2600 = vadd.f32 %v2536, 1e-05
    %v2601 = vadd.f32 %v2537, 1e-05
    %v2602 = vadd.f32 %v2538, 1e-05
    %v2603 = vadd.f32 %v2539, 1e-05
    %v2604 = vadd.f32 %v2540, 1e-05
    %v2605 = vadd.f32 %v2541, 1e-05
    %v2606 = vadd.f32 %v2542, 1e-05
    %v2607 = vadd.f32 %v2543, 1e-05
    %v2608 = vadd.f32 %v2544, 1e-05
    %v2609 = vadd.f32 %v2545, 1e-05
    %v2610 = vadd.f32 %v2546, 1e-05
    %v2611 = vadd.f32 %v2547, 1e-05
    %v2612 = vadd.f32 %v2548, 1e-05
    %v2613 = vadd.f32 %v2549, 1e-05
    %v2614 = vadd.f32 %v2550, 1e-05
    %v2615 = vadd.f32 %v2551, 1e-05
    %v2616 = vadd.f32 %v2552, 1e-05
    %v2617 = vadd.f32 %v2553, 1e-05
    %v2618 = vadd.f32 %v2554, 1e-05
    %v2619 = vadd.f32 %v2555, 1e-05
    %v2620 = vadd.f32 %v2556, 1e-05
    %v2621 = vadd.f32 %v2557, 1e-05
    %v2622 = vadd.f32 %v2558, 1e-05
    %v2623 = vadd.f32 %v2559, 1e-05
    %v2624 = vadd.f32 %v2560, 1e-05
    %v2625 = vadd.f32 %v2561, 1e-05
    %v2626 = vadd.f32 %v2562, 1e-05
    %v2627 = vadd.f32 %v2563, 1e-05
    %v2628 = vadd.f32 %v2564, 1e-05
    %v2629 = vadd.f32 %v2565, 1e-05
    %v2630 = vrsqrt.pop %v2566
    %v2631 = vrsqrt.pop %v2567
    %v2632 = vrsqrt.pop %v2568
    %v2633 = vrsqrt.pop %v2569
    %v2634 = vrsqrt.pop %v2570
    %v2635 = vrsqrt.pop %v2571
    %v2636 = vrsqrt.pop %v2572
    %v2637 = vrsqrt.pop %v2573
    %v2638 = vrsqrt.pop %v2574
    %v2639 = vrsqrt.pop %v2575
    %v2640 = vrsqrt.pop %v2576
    %v2641 = vrsqrt.pop %v2577
    %v2642 = vrsqrt.pop %v2578
    %v2643 = vrsqrt.pop %v2579
    %v2644 = vrsqrt.pop %v2580
    %v2645 = vrsqrt.pop %v2581
    %v2646 = vrsqrt.pop %v2582
    %v2647 = vrsqrt.pop %v2583
    %v2648 = vrsqrt.pop %v2584
    %v2649 = vrsqrt.pop %v2585
    %v2650 = vrsqrt.pop %v2586
    %v2651 = vrsqrt.pop %v2587
    %v2652 = vrsqrt.pop %v2588
    %v2653 = vrsqrt.pop %v2589
    %v2654 = vrsqrt.pop %v2590
    %v2655 = vrsqrt.pop %v2591
    %v2656 = vrsqrt.pop %v2592
    %v2657 = vrsqrt.pop %v2593
    %v2658 = vrsqrt.pop %v2594
    %v2659 = vrsqrt.pop %v2595
    %v2660 = vrsqrt.pop %v2596
    %v2661 = vrsqrt.pop %v2597
    %v2662 = vrsqrt.pop %v2598
    %v2663 = vrsqrt.pop %v2599
    %v2664 = vrsqrt.pop %v2600
    %v2665 = vrsqrt.pop %v2601
    %v2666 = vrsqrt.pop %v2602
    %v2667 = vrsqrt.pop %v2603
    %v2668 = vrsqrt.pop %v2604
    %v2669 = vrsqrt.pop %v2605
    %v2670 = vrsqrt.pop %v2606
    %v2671 = vrsqrt.pop %v2607
    %v2672 = vrsqrt.pop %v2608
    %v2673 = vrsqrt.pop %v2609
    %v2674 = vrsqrt.pop %v2610
    %v2675 = vrsqrt.pop %v2611
    %v2676 = vrsqrt.pop %v2612
    %v2677 = vrsqrt.pop %v2613
    %v2678 = vrsqrt.pop %v2614
    %v2679 = vrsqrt.pop %v2615
    %v2680 = vrsqrt.pop %v2616
    %v2681 = vrsqrt.pop %v2617
    %v2682 = vrsqrt.pop %v2618
    %v2683 = vrsqrt.pop %v2619
    %v2684 = vrsqrt.pop %v2620
    %v2685 = vrsqrt.pop %v2621
    %v2686 = vrsqrt.pop %v2622
    %v2687 = vrsqrt.pop %v2623
    %v2688 = vrsqrt.pop %v2624
    %v2689 = vrsqrt.pop %v2625
    %v2690 = vrsqrt.pop %v2626
    %v2691 = vrsqrt.pop %v2627
    %v2692 = vrsqrt.pop %v2628
    %v2693 = vrsqrt.pop %v2629
    %v2694 = vmul.f32 %v2182, %v2630
    %v2695 = vmul.f32 %v2183, %v2631
    %v2696 = vmul.f32 %v2184, %v2632
    %v2697 = vmul.f32 %v2185, %v2633
    %v2698 = vmul.f32 %v2186, %v2634
    %v2699 = vmul.f32 %v2187, %v2635
    %v2700 = vmul.f32 %v2188, %v2636
    %v2701 = vmul.f32 %v2189, %v2637
    %v2702 = vmul.f32 %v2190, %v2638
    %v2703 = vmul.f32 %v2191, %v2639
    %v2704 = vmul.f32 %v2192, %v2640
    %v2705 = vmul.f32 %v2193, %v2641
    %v2706 = vmul.f32 %v2194, %v2642
    %v2707 = vmul.f32 %v2195, %v2643
    %v2708 = vmul.f32 %v2196, %v2644
    %v2709 = vmul.f32 %v2197, %v2645
    %v2710 = vmul.f32 %v2198, %v2646
    %v2711 = vmul.f32 %v2199, %v2647
    %v2712 = vmul.f32 %v2200, %v2648
    %v2713 = vmul.f32 %v2201, %v2649
    %v2714 = vmul.f32 %v2202, %v2650
    %v2715 = vmul.f32 %v2203, %v2651
    %v2716 = vmul.f32 %v2204, %v2652
    %v2717 = vmul.f32 %v2205, %v2653
    %v2718 = vmul.f32 %v2206, %v2654
    %v2719 = vmul.f32 %v2207, %v2655
    %v2720 = vmul.f32 %v2208, %v2656
    %v2721 = vmul.f32 %v2209, %v2657
    %v2722 = vmul.f32 %v2210, %v2658
    %v2723 = vmul.f32 %v2211, %v2659
    %v2724 = vmul.f32 %v2212, %v2660
    %v2725 = vmul.f32 %v2213, %v2661
    %v2726 = vmul.f32 %v2214, %v2662
    %v2727 = vmul.f32 %v2215, %v2663
    %v2728 = vmul.f32 %v2216, %v2664
    %v2729 = vmul.f32 %v2217, %v2665
    %v2730 = vmul.f32 %v2218, %v2666
    %v2731 = vmul.f32 %v2219, %v2667
    %v2732 = vmul.f32 %v2220, %v2668
    %v2733 = vmul.f32 %v2221, %v2669
    %v2734 = vmul.f32 %v2222, %v2670
    %v2735 = vmul.f32 %v2223, %v2671
    %v2736 = vmul.f32 %v2224, %v2672
    %v2737 = vmul.f32 %v2225, %v2673
    %v2738 = vmul.f32 %v2226, %v2674
    %v2739 = vmul.f32 %v2227, %v2675
    %v2740 = vmul.f32 %v2228, %v2676
    %v2741 = vmul.f32 %v2229, %v2677
    %v2742 = vmul.f32 %v2230, %v2678
    %v2743 = vmul.f32 %v2231, %v2679
    %v2744 = vmul.f32 %v2232, %v2680
    %v2745 = vmul.f32 %v2233, %v2681
    %v2746 = vmul.f32 %v2234, %v2682
    %v2747 = vmul.f32 %v2235, %v2683
    %v2748 = vmul.f32 %v2236, %v2684
    %v2749 = vmul.f32 %v2237, %v2685
    %v2750 = vmul.f32 %v2238, %v2686
    %v2751 = vmul.f32 %v2239, %v2687
    %v2752 = vmul.f32 %v2240, %v2688
    %v2753 = vmul.f32 %v2241, %v2689
    %v2754 = vmul.f32 %v2242, %v2690
    %v2755 = vmul.f32 %v2243, %v2691
    %v2756 = vmul.f32 %v2244, %v2692
    %v2757 = vmul.f32 %v2245, %v2693
    %v2758 = vlaneseq
    %v2759 = vshrl.u32 %v2758, 7
    %v2760 = vsub.s32 0, %v2759
    %v2761 = vrot.slane %v1921, %v2760
    %v2762 = vmul.f32 %v2694, %v2761
    %v2763 = vmul.f32 %v2695, %v2761
    %v2764 = vmul.f32 %v2696, %v2761
    %v2765 = vmul.f32 %v2697, %v2761
    %v2766 = vmul.f32 %v2698, %v2761
    %v2767 = vmul.f32 %v2699, %v2761
    %v2768 = vmul.f32 %v2700, %v2761
    %v2769 = vmul.f32 %v2701, %v2761
    %v2770 = vmul.f32 %v2702, %v2761
    %v2771 = vmul.f32 %v2703, %v2761
    %v2772 = vmul.f32 %v2704, %v2761
    %v2773 = vmul.f32 %v2705, %v2761
    %v2774 = vmul.f32 %v2706, %v2761
    %v2775 = vmul.f32 %v2707, %v2761
    %v2776 = vmul.f32 %v2708, %v2761
    %v2777 = vmul.f32 %v2709, %v2761
    %v2778 = vmul.f32 %v2710, %v2761
    %v2779 = vmul.f32 %v2711, %v2761
    %v2780 = vmul.f32 %v2712, %v2761
    %v2781 = vmul.f32 %v2713, %v2761
    %v2782 = vmul.f32 %v2714, %v2761
    %v2783 = vmul.f32 %v2715, %v2761
    %v2784 = vmul.f32 %v2716, %v2761
    %v2785 = vmul.f32 %v2717, %v2761
    %v2786 = vmul.f32 %v2718, %v2761
    %v2787 = vmul.f32 %v2719, %v2761
    %v2788 = vmul.f32 %v2720, %v2761
    %v2789 = vmul.f32 %v2721, %v2761
    %v2790 = vmul.f32 %v2722, %v2761
    %v2791 = vmul.f32 %v2723, %v2761
    %v2792 = vmul.f32 %v2724, %v2761
    %v2793 = vmul.f32 %v2725, %v2761
    %v2794 = vmul.f32 %v2726, %v2761
    %v2795 = vmul.f32 %v2727, %v2761
    %v2796 = vmul.f32 %v2728, %v2761
    %v2797 = vmul.f32 %v2729, %v2761
    %v2798 = vmul.f32 %v2730, %v2761
    %v2799 = vmul.f32 %v2731, %v2761
    %v2800 = vmul.f32 %v2732, %v2761
    %v2801 = vmul.f32 %v2733, %v2761
    %v2802 = vmul.f32 %v2734, %v2761
    %v2803 = vmul.f32 %v2735, %v2761
    %v2804 = vmul.f32 %v2736, %v2761
    %v2805 = vmul.f32 %v2737, %v2761
    %v2806 = vmul.f32 %v2738, %v2761
    %v2807 = vmul.f32 %v2739, %v2761
    %v2808 = vmul.f32 %v2740, %v2761
    %v2809 = vmul.f32 %v2741, %v2761
    %v2810 = vmul.f32 %v2742, %v2761
    %v2811 = vmul.f32 %v2743, %v2761
    %v2812 = vmul.f32 %v2744, %v2761
    %v2813 = vmul.f32 %v2745, %v2761
    %v2814 = vmul.f32 %v2746, %v2761
    %v2815 = vmul.f32 %v2747, %v2761
    %v2816 = vmul.f32 %v2748, %v2761
    %v2817 = vmul.f32 %v2749, %v2761
    %v2818 = vmul.f32 %v2750, %v2761
    %v2819 = vmul.f32 %v2751, %v2761
    %v2820 = vmul.f32 %v2752, %v2761
    %v2821 = vmul.f32 %v2753, %v2761
    %v2822 = vmul.f32 %v2754, %v2761
    %v2823 = vmul.f32 %v2755, %v2761
    %v2824 = vmul.f32 %v2756, %v2761
    %v2825 = vmul.f32 %v2757, %v2761
    %v2826 = vlaneseq
    %v2827 = vshrl.u32 %v2826, 7
    %v2828 = vsub.s32 0, %v2827
    %v2829 = vrot.slane %v1922, %v2828
    %v2830 = vadd.f32 %v2762, %v2829
    %v2831 = vadd.f32 %v2763, %v2829
    %v2832 = vadd.f32 %v2764, %v2829
    %v2833 = vadd.f32 %v2765, %v2829
    %v2834 = vadd.f32 %v2766, %v2829
    %v2835 = vadd.f32 %v2767, %v2829
    %v2836 = vadd.f32 %v2768, %v2829
    %v2837 = vadd.f32 %v2769, %v2829
    %v2838 = vadd.f32 %v2770, %v2829
    %v2839 = vadd.f32 %v2771, %v2829
    %v2840 = vadd.f32 %v2772, %v2829
    %v2841 = vadd.f32 %v2773, %v2829
    %v2842 = vadd.f32 %v2774, %v2829
    %v2843 = vadd.f32 %v2775, %v2829
    %v2844 = vadd.f32 %v2776, %v2829
    %v2845 = vadd.f32 %v2777, %v2829
    %v2846 = vadd.f32 %v2778, %v2829
    %v2847 = vadd.f32 %v2779, %v2829
    %v2848 = vadd.f32 %v2780, %v2829
    %v2849 = vadd.f32 %v2781, %v2829
    %v2850 = vadd.f32 %v2782, %v2829
    %v2851 = vadd.f32 %v2783, %v2829
    %v2852 = vadd.f32 %v2784, %v2829
    %v2853 = vadd.f32 %v2785, %v2829
    %v2854 = vadd.f32 %v2786, %v2829
    %v2855 = vadd.f32 %v2787, %v2829
    %v2856 = vadd.f32 %v2788, %v2829
    %v2857 = vadd.f32 %v2789, %v2829
    %v2858 = vadd.f32 %v2790, %v2829
    %v2859 = vadd.f32 %v2791, %v2829
    %v2860 = vadd.f32 %v2792, %v2829
    %v2861 = vadd.f32 %v2793, %v2829
    %v2862 = vadd.f32 %v2794, %v2829
    %v2863 = vadd.f32 %v2795, %v2829
    %v2864 = vadd.f32 %v2796, %v2829
    %v2865 = vadd.f32 %v2797, %v2829
    %v2866 = vadd.f32 %v2798, %v2829
    %v2867 = vadd.f32 %v2799, %v2829
    %v2868 = vadd.f32 %v2800, %v2829
    %v2869 = vadd.f32 %v2801, %v2829
    %v2870 = vadd.f32 %v2802, %v2829
    %v2871 = vadd.f32 %v2803, %v2829
    %v2872 = vadd.f32 %v2804, %v2829
    %v2873 = vadd.f32 %v2805, %v2829
    %v2874 = vadd.f32 %v2806, %v2829
    %v2875 = vadd.f32 %v2807, %v2829
    %v2876 = vadd.f32 %v2808, %v2829
    %v2877 = vadd.f32 %v2809, %v2829
    %v2878 = vadd.f32 %v2810, %v2829
    %v2879 = vadd.f32 %v2811, %v2829
    %v2880 = vadd.f32 %v2812, %v2829
    %v2881 = vadd.f32 %v2813, %v2829
    %v2882 = vadd.f32 %v2814, %v2829
    %v2883 = vadd.f32 %v2815, %v2829
    %v2884 = vadd.f32 %v2816, %v2829
    %v2885 = vadd.f32 %v2817, %v2829
    %v2886 = vadd.f32 %v2818, %v2829
    %v2887 = vadd.f32 %v2819, %v2829
    %v2888 = vadd.f32 %v2820, %v2829
    %v2889 = vadd.f32 %v2821, %v2829
    %v2890 = vadd.f32 %v2822, %v2829
    %v2891 = vadd.f32 %v2823, %v2829
    %v2892 = vadd.f32 %v2824, %v2829
    %v2893 = vadd.f32 %v2825, %v2829
    %v2894 = vld [vmem:[%s4] sm:$0xff]
    %v2895 = vld [vmem:[%s4 + $0x8] sm:$0xff]
    %v2896 = vld [vmem:[%s4 + $0x10] sm:$0xff]
    %v2897 = vld [vmem:[%s4 + $0x18] sm:$0xff]
    %v2898 = vld [vmem:[%s4 + $0x20] sm:$0xff]
    %v2899 = vld [vmem:[%s4 + $0x28] sm:$0xff]
    %v2900 = vld [vmem:[%s4 + $0x30] sm:$0xff]
    %v2901 = vld [vmem:[%s4 + $0x38] sm:$0xff]
    %v2902 = vlaneseq
    %v2903 = vshrl.u32 %v2902, 7
    %v2904 = vsub.s32 0, %v2903
    %v2905 = vrot.slane %v1923, %v2904
    %v2907 = vsel %vm754, %v2830, 0
    %v2910 = vsel %vm754, %v2831, 0
    %v2913 = vsel %vm754, %v2832, 0
    %v2916 = vsel %vm754, %v2833, 0
    %v2919 = vsel %vm754, %v2834, 0
    %v2922 = vsel %vm754, %v2835, 0
    %v2925 = vsel %vm754, %v2836, 0
    %v2928 = vsel %vm754, %v2837, 0
    %v2931 = vsel %vm754, %v2838, 0
    %v2934 = vsel %vm754, %v2839, 0
    %v2937 = vsel %vm754, %v2840, 0
    %v2940 = vsel %vm754, %v2841, 0
    %v2943 = vsel %vm754, %v2842, 0
    %v2946 = vsel %vm754, %v2843, 0
    %v2949 = vsel %vm754, %v2844, 0
    %v2952 = vsel %vm754, %v2845, 0
    %v2955 = vsel %vm754, %v2846, 0
    %v2958 = vsel %vm754, %v2847, 0
    %v2961 = vsel %vm754, %v2848, 0
    %v2964 = vsel %vm754, %v2849, 0
    %v2967 = vsel %vm754, %v2850, 0
    %v2970 = vsel %vm754, %v2851, 0
    %v2973 = vsel %vm754, %v2852, 0
    %v2976 = vsel %vm754, %v2853, 0
    %v2979 = vsel %vm754, %v2854, 0
    %v2982 = vsel %vm754, %v2855, 0
    %v2985 = vsel %vm754, %v2856, 0
    %v2988 = vsel %vm754, %v2857, 0
    %v2991 = vsel %vm754, %v2858, 0
    %v2994 = vsel %vm754, %v2859, 0
    %v2997 = vsel %vm754, %v2860, 0
    %v3000 = vsel %vm754, %v2861, 0
    %v3003 = vsel %vm754, %v2862, 0
    %v3006 = vsel %vm754, %v2863, 0
    %v3009 = vsel %vm754, %v2864, 0
    %v3012 = vsel %vm754, %v2865, 0
    %v3015 = vsel %vm754, %v2866, 0
    %v3018 = vsel %vm754, %v2867, 0
    %v3021 = vsel %vm754, %v2868, 0
    %v3024 = vsel %vm754, %v2869, 0
    %v3027 = vsel %vm754, %v2870, 0
    %v3030 = vsel %vm754, %v2871, 0
    %v3033 = vsel %vm754, %v2872, 0
    %v3036 = vsel %vm754, %v2873, 0
    %v3039 = vsel %vm754, %v2874, 0
    %v3042 = vsel %vm754, %v2875, 0
    %v3045 = vsel %vm754, %v2876, 0
    %v3048 = vsel %vm754, %v2877, 0
    %v3051 = vsel %vm754, %v2878, 0
    %v3054 = vsel %vm754, %v2879, 0
    %v3057 = vsel %vm754, %v2880, 0
    %v3060 = vsel %vm754, %v2881, 0
    %v3063 = vsel %vm754, %v2882, 0
    %v3066 = vsel %vm754, %v2883, 0
    %v3069 = vsel %vm754, %v2884, 0
    %v3072 = vsel %vm754, %v2885, 0
    %v3075 = vsel %vm754, %v2886, 0
    %v3078 = vsel %vm754, %v2887, 0
    %v3081 = vsel %vm754, %v2888, 0
    %v3084 = vsel %vm754, %v2889, 0
    %v3087 = vsel %vm754, %v2890, 0
    %v3090 = vsel %vm754, %v2891, 0
    %v3093 = vsel %vm754, %v2892, 0
    %v3096 = vsel %vm754, %v2893, 0
    %3098 = vmatprep.subr.mxu0 0.0
    %3099 = vmatpush1.msra.mxu0 %v2894
    %3100 = vmatprep.subr.mxu0 0.0
    %3101 = vmatpush1.msra.mxu0 %v2895
    %3102 = vmatprep.subr.mxu0 0.0
    %3103 = vmatpush1.msra.mxu0 %v2896
    %3104 = vmatprep.subr.mxu0 0.0
    %3105 = vmatpush1.msra.mxu0 %v2897
    %3106 = vmatprep.subr.mxu0 0.0
    %3107 = vmatpush1.msra.mxu0 %v2898
    %3108 = vmatprep.subr.mxu0 0.0
    %3109 = vmatpush1.msra.mxu0 %v2899
    %3110 = vmatprep.subr.mxu0 0.0
    %3111 = vmatpush1.msra.mxu0 %v2900
    %3112 = vmatprep.subr.mxu0 0.0
    %3113 = vmatpush1.msra.mxu0 %v2901
    %3114 = vmatprep.subr.mxu0 0.0
    %3115 = vmatpush1.msra.mxu0 0.0
    %3116 = vmatprep.subr.mxu0 0.0
    %3117 = vmatpush1.msra.mxu0 0.0
    %3118 = vmatprep.subr.mxu0 0.0
    %3119 = vmatpush1.msra.mxu0 0.0
    %3120 = vmatprep.subr.mxu0 0.0
    %3121 = vmatpush1.msra.mxu0 0.0
    %3122 = vmatprep.subr.mxu0 0.0
    %3123 = vmatpush1.msra.mxu0 0.0
    %3124 = vmatprep.subr.mxu0 0.0
    %3125 = vmatpush1.msra.mxu0 0.0
    %3126 = vmatprep.subr.mxu0 0.0
    %3127 = vmatpush1.msra.mxu0 0.0
    %3128 = vmatprep.subr.mxu0 0.0
    %3129 = vmatpush1.msra.mxu0 0.0
    %3130 = vmatprep.subr.mxu0 0.0
    %3131 = vmatpush1.msra.mxu0 0.0
    %3132 = vmatprep.subr.mxu0 0.0
    %3133 = vmatpush1.msra.mxu0 0.0
    %3134 = vmatprep.subr.mxu0 0.0
    %3135 = vmatpush1.msra.mxu0 0.0
    %3136 = vmatprep.subr.mxu0 0.0
    %3137 = vmatpush1.msra.mxu0 0.0
    %3138 = vmatprep.subr.mxu0 0.0
    %3139 = vmatpush1.msra.mxu0 0.0
    %3140 = vmatprep.subr.mxu0 0.0
    %3141 = vmatpush1.msra.mxu0 0.0
    %3142 = vmatprep.subr.mxu0 0.0
    %3143 = vmatpush1.msra.mxu0 0.0
    %3144 = vmatprep.subr.mxu0 0.0
    %3145 = vmatpush1.msra.mxu0 0.0
    %3146 = vmatprep.subr.mxu0 0.0
    %3147 = vmatpush1.msra.mxu0 0.0
    %3148 = vmatprep.subr.mxu0 0.0
    %3149 = vmatpush1.msra.mxu0 0.0
    %3150 = vmatprep.subr.mxu0 0.0
    %3151 = vmatpush1.msra.mxu0 0.0
    %3152 = vmatprep.subr.mxu0 0.0
    %3153 = vmatpush1.msra.mxu0 0.0
    %3154 = vmatprep.subr.mxu0 0.0
    %3155 = vmatpush1.msra.mxu0 0.0
    %3156 = vmatprep.subr.mxu0 0.0
    %3157 = vmatpush1.msra.mxu0 0.0
    %3158 = vmatprep.subr.mxu0 0.0
    %3159 = vmatpush1.msra.mxu0 0.0
    %3160 = vmatprep.subr.mxu0 0.0
    %3161 = vmatpush1.msra.mxu0 0.0
    %3162 = vmatprep.mubr.f32.mxu0 0.0
    %3163 = vmatmul.mubr.f32.gmra.mrb[0].mxu0 %v2907
    %v3164 = vpop.f32.mrb[0].mxu0
    %v3165 = vadd.f32 %v2905, %v3164
    %v3166 = vpop.f32.mrb[0].mxu0
    %3167 = vmatprep.mubr.f32.mxu0 0.0
    %3168 = vmatmul.mubr.f32.gmra.mrb[0].mxu0 %v2910
    %v3169 = vpop.f32.mrb[0].mxu0
    %v3170 = vadd.f32 %v2905, %v3169
    %v3171 = vpop.f32.mrb[0].mxu0
    %3172 = vmatprep.mubr.f32.mxu0 0.0
    %3173 = vmatmul.mubr.f32.gmra.mrb[0].mxu0 %v2913
    %v3174 = vpop.f32.mrb[0].mxu0
    %v3175 = vadd.f32 %v2905, %v3174
    %v3176 = vpop.f32.mrb[0].mxu0
    %3177 = vmatprep.mubr.f32.mxu0 0.0
    %3178 = vmatmul.mubr.f32.gmra.mrb[0].mxu0 %v2916
    %v3179 = vpop.f32.mrb[0].mxu0
    %v3180 = vadd.f32 %v2905, %v3179
    %v3181 = vpop.f32.mrb[0].mxu0
    %3182 = vmatprep.mubr.f32.mxu0 0.0
    %3183 = vmatmul.mubr.f32.gmra.mrb[0].mxu0 %v2919
    %v3184 = vpop.f32.mrb[0].mxu0
    %v3185 = vadd.f32 %v2905, %v3184
    %v3186 = vpop.f32.mrb[0].mxu0
    %3187 = vmatprep.mubr.f32.mxu0 0.0
    %3188 = vmatmul.mubr.f32.gmra.mrb[0].mxu0 %v2922
    %v3189 = vpop.f32.mrb[0].mxu0
    %v3190 = vadd.f32 %v2905, %v3189
    %v3191 = vpop.f32.mrb[0].mxu0
    %3192 = vmatprep.mubr.f32.mxu0 0.0
    %3193 = vmatmul.mubr.f32.gmra.mrb[0].mxu0 %v2925
    %v3194 = vpop.f32.mrb[0].mxu0
    %v3195 = vadd.f32 %v2905, %v3194
    %v3196 = vpop.f32.mrb[0].mxu0
    %3197 = vmatprep.mubr.f32.mxu0 0.0
    %3198 = vmatmul.mubr.f32.gmra.mrb[0].mxu0 %v2928
    %v3199 = vpop.f32.mrb[0].mxu0
    %v3200 = vadd.f32 %v2905, %v3199
    %v3201 = vpop.f32.mrb[0].mxu0
    %3202 = vmatprep.mubr.f32.mxu0 0.0
    %3203 = vmatmul.mubr.f32.gmra.mrb[0].mxu0 %v2931
    %v3204 = vpop.f32.mrb[0].mxu0
    %v3205 = vadd.f32 %v2905, %v3204
    %v3206 = vpop.f32.mrb[0].mxu0
    %3207 = vmatprep.mubr.f32.mxu0 0.0
    %3208 = vmatmul.mubr.f32.gmra.mrb[0].mxu0 %v2934
    %v3209 = vpop.f32.mrb[0].mxu0
    %v3210 = vadd.f32 %v2905, %v3209
    %v3211 = vpop.f32.mrb[0].mxu0
    %3212 = vmatprep.mubr.f32.mxu0 0.0
    %3213 = vmatmul.mubr.f32.gmra.mrb[0].mxu0 %v2937
    %v3214 = vpop.f32.mrb[0].mxu0
    %v3215 = vadd.f32 %v2905, %v3214
    %v3216 = vpop.f32.mrb[0].mxu0
    %3217 = vmatprep.mubr.f32.mxu0 0.0
    %3218 = vmatmul.mubr.f32.gmra.mrb[0].mxu0 %v2940
    %v3219 = vpop.f32.mrb[0].mxu0
    %v3220 = vadd.f32 %v2905, %v3219
    %v3221 = vpop.f32.mrb[0].mxu0
    %3222 = vmatprep.mubr.f32.mxu0 0.0
    %3223 = vmatmul.mubr.f32.gmra.mrb[0].mxu0 %v2943
    %v3224 = vpop.f32.mrb[0].mxu0
    %v3225 = vadd.f32 %v2905, %v3224
    %v3226 = vpop.f32.mrb[0].mxu0
    %3227 = vmatprep.mubr.f32.mxu0 0.0
    %3228 = vmatmul.mubr.f32.gmra.mrb[0].mxu0 %v2946
    %v3229 = vpop.f32.mrb[0].mxu0
    %v3230 = vadd.f32 %v2905, %v3229
    %v3231 = vpop.f32.mrb[0].mxu0
    %3232 = vmatprep.mubr.f32.mxu0 0.0
    %3233 = vmatmul.mubr.f32.gmra.mrb[0].mxu0 %v2949
    %v3234 = vpop.f32.mrb[0].mxu0
    %v3235 = vadd.f32 %v2905, %v3234
    %v3236 = vpop.f32.mrb[0].mxu0
    %3237 = vmatprep.mubr.f32.mxu0 0.0
    %3238 = vmatmul.mubr.f32.gmra.mrb[0].mxu0 %v2952
    %v3239 = vpop.f32.mrb[0].mxu0
    %v3240 = vadd.f32 %v2905, %v3239
    %v3241 = vpop.f32.mrb[0].mxu0
    %3242 = vmatprep.mubr.f32.mxu0 0.0
    %3243 = vmatmul.mubr.f32.gmra.mrb[0].mxu0 %v2955
    %v3244 = vpop.f32.mrb[0].mxu0
    %v3245 = vadd.f32 %v2905, %v3244
    %v3246 = vpop.f32.mrb[0].mxu0
    %3247 = vmatprep.mubr.f32.mxu0 0.0
    %3248 = vmatmul.mubr.f32.gmra.mrb[0].mxu0 %v2958
    %v3249 = vpop.f32.mrb[0].mxu0
    %v3250 = vadd.f32 %v2905, %v3249
    %v3251 = vpop.f32.mrb[0].mxu0
    %3252 = vmatprep.mubr.f32.mxu0 0.0
    %3253 = vmatmul.mubr.f32.gmra.mrb[0].mxu0 %v2961
    %v3254 = vpop.f32.mrb[0].mxu0
    %v3255 = vadd.f32 %v2905, %v3254
    %v3256 = vpop.f32.mrb[0].mxu0
    %3257 = vmatprep.mubr.f32.mxu0 0.0
    %3258 = vmatmul.mubr.f32.gmra.mrb[0].mxu0 %v2964
    %v3259 = vpop.f32.mrb[0].mxu0
    %v3260 = vadd.f32 %v2905, %v3259
    %v3261 = vpop.f32.mrb[0].mxu0
    %3262 = vmatprep.mubr.f32.mxu0 0.0
    %3263 = vmatmul.mubr.f32.gmra.mrb[0].mxu0 %v2967
    %v3264 = vpop.f32.mrb[0].mxu0
    %v3265 = vadd.f32 %v2905, %v3264
    %v3266 = vpop.f32.mrb[0].mxu0
    %3267 = vmatprep.mubr.f32.mxu0 0.0
    %3268 = vmatmul.mubr.f32.gmra.mrb[0].mxu0 %v2970
    %v3269 = vpop.f32.mrb[0].mxu0
    %v3270 = vadd.f32 %v2905, %v3269
    %v3271 = vpop.f32.mrb[0].mxu0
    %3272 = vmatprep.mubr.f32.mxu0 0.0
    %3273 = vmatmul.mubr.f32.gmra.mrb[0].mxu0 %v2973
    %v3274 = vpop.f32.mrb[0].mxu0
    %v3275 = vadd.f32 %v2905, %v3274
    %v3276 = vpop.f32.mrb[0].mxu0
    %3277 = vmatprep.mubr.f32.mxu0 0.0
    %3278 = vmatmul.mubr.f32.gmra.mrb[0].mxu0 %v2976
    %v3279 = vpop.f32.mrb[0].mxu0
    %v3280 = vadd.f32 %v2905, %v3279
    %v3281 = vpop.f32.mrb[0].mxu0
    %3282 = vmatprep.mubr.f32.mxu0 0.0
    %3283 = vmatmul.mubr.f32.gmra.mrb[0].mxu0 %v2979
    %v3284 = vpop.f32.mrb[0].mxu0
    %v3285 = vadd.f32 %v2905, %v3284
    %v3286 = vpop.f32.mrb[0].mxu0
    %3287 = vmatprep.mubr.f32.mxu0 0.0
    %3288 = vmatmul.mubr.f32.gmra.mrb[0].mxu0 %v2982
    %v3289 = vpop.f32.mrb[0].mxu0
    %v3290 = vadd.f32 %v2905, %v3289
    %v3291 = vpop.f32.mrb[0].mxu0
    %3292 = vmatprep.mubr.f32.mxu0 0.0
    %3293 = vmatmul.mubr.f32.gmra.mrb[0].mxu0 %v2985
    %v3294 = vpop.f32.mrb[0].mxu0
    %v3295 = vadd.f32 %v2905, %v3294
    %v3296 = vpop.f32.mrb[0].mxu0
    %3297 = vmatprep.mubr.f32.mxu0 0.0
    %3298 = vmatmul.mubr.f32.gmra.mrb[0].mxu0 %v2988
    %v3299 = vpop.f32.mrb[0].mxu0
    %v3300 = vadd.f32 %v2905, %v3299
    %v3301 = vpop.f32.mrb[0].mxu0
    %3302 = vmatprep.mubr.f32.mxu0 0.0
    %3303 = vmatmul.mubr.f32.gmra.mrb[0].mxu0 %v2991
    %v3304 = vpop.f32.mrb[0].mxu0
    %v3305 = vadd.f32 %v2905, %v3304
    %v3306 = vpop.f32.mrb[0].mxu0
    %3307 = vmatprep.mubr.f32.mxu0 0.0
    %3308 = vmatmul.mubr.f32.gmra.mrb[0].mxu0 %v2994
    %v3309 = vpop.f32.mrb[0].mxu0
    %v3310 = vadd.f32 %v2905, %v3309
    %v3311 = vpop.f32.mrb[0].mxu0
    %3312 = vmatprep.mubr.f32.mxu0 0.0
    %3313 = vmatmul.mubr.f32.gmra.mrb[0].mxu0 %v2997
    %v3314 = vpop.f32.mrb[0].mxu0
    %v3315 = vadd.f32 %v2905, %v3314
    %v3316 = vpop.f32.mrb[0].mxu0
    %3317 = vmatprep.mubr.f32.mxu0 0.0
    %3318 = vmatmul.mubr.f32.gmra.mrb[0].mxu0 %v3000
    %v3319 = vpop.f32.mrb[0].mxu0
    %v3320 = vadd.f32 %v2905, %v3319
    %v3321 = vpop.f32.mrb[0].mxu0
    %3322 = vmatprep.mubr.f32.mxu0 0.0
    %3323 = vmatmul.mubr.f32.gmra.mrb[0].mxu0 %v3003
    %v3324 = vpop.f32.mrb[0].mxu0
    %v3325 = vadd.f32 %v2905, %v3324
    %v3326 = vpop.f32.mrb[0].mxu0
    %3327 = vmatprep.mubr.f32.mxu0 0.0
    %3328 = vmatmul.mubr.f32.gmra.mrb[0].mxu0 %v3006
    %v3329 = vpop.f32.mrb[0].mxu0
    %v3330 = vadd.f32 %v2905, %v3329
    %v3331 = vpop.f32.mrb[0].mxu0
    %3332 = vmatprep.mubr.f32.mxu0 0.0
    %3333 = vmatmul.mubr.f32.gmra.mrb[0].mxu0 %v3009
    %v3334 = vpop.f32.mrb[0].mxu0
    %v3335 = vadd.f32 %v2905, %v3334
    %v3336 = vpop.f32.mrb[0].mxu0
    %3337 = vmatprep.mubr.f32.mxu0 0.0
    %3338 = vmatmul.mubr.f32.gmra.mrb[0].mxu0 %v3012
    %v3339 = vpop.f32.mrb[0].mxu0
    %v3340 = vadd.f32 %v2905, %v3339
    %v3341 = vpop.f32.mrb[0].mxu0
    %3342 = vmatprep.mubr.f32.mxu0 0.0
    %3343 = vmatmul.mubr.f32.gmra.mrb[0].mxu0 %v3015
    %v3344 = vpop.f32.mrb[0].mxu0
    %v3345 = vadd.f32 %v2905, %v3344
    %v3346 = vpop.f32.mrb[0].mxu0
    %3347 = vmatprep.mubr.f32.mxu0 0.0
    %3348 = vmatmul.mubr.f32.gmra.mrb[0].mxu0 %v3018
    %v3349 = vpop.f32.mrb[0].mxu0
    %v3350 = vadd.f32 %v2905, %v3349
    %v3351 = vpop.f32.mrb[0].mxu0
    %3352 = vmatprep.mubr.f32.mxu0 0.0
    %3353 = vmatmul.mubr.f32.gmra.mrb[0].mxu0 %v3021
    %v3354 = vpop.f32.mrb[0].mxu0
    %v3355 = vadd.f32 %v2905, %v3354
    %v3356 = vpop.f32.mrb[0].mxu0
    %3357 = vmatprep.mubr.f32.mxu0 0.0
    %3358 = vmatmul.mubr.f32.gmra.mrb[0].mxu0 %v3024
    %v3359 = vpop.f32.mrb[0].mxu0
    %v3360 = vadd.f32 %v2905, %v3359
    %v3361 = vpop.f32.mrb[0].mxu0
    %3362 = vmatprep.mubr.f32.mxu0 0.0
    %3363 = vmatmul.mubr.f32.gmra.mrb[0].mxu0 %v3027
    %v3364 = vpop.f32.mrb[0].mxu0
    %v3365 = vadd.f32 %v2905, %v3364
    %v3366 = vpop.f32.mrb[0].mxu0
    %3367 = vmatprep.mubr.f32.mxu0 0.0
    %3368 = vmatmul.mubr.f32.gmra.mrb[0].mxu0 %v3030
    %v3369 = vpop.f32.mrb[0].mxu0
    %v3370 = vadd.f32 %v2905, %v3369
    %v3371 = vpop.f32.mrb[0].mxu0
    %3372 = vmatprep.mubr.f32.mxu0 0.0
    %3373 = vmatmul.mubr.f32.gmra.mrb[0].mxu0 %v3033
    %v3374 = vpop.f32.mrb[0].mxu0
    %v3375 = vadd.f32 %v2905, %v3374
    %v3376 = vpop.f32.mrb[0].mxu0
    %3377 = vmatprep.mubr.f32.mxu0 0.0
    %3378 = vmatmul.mubr.f32.gmra.mrb[0].mxu0 %v3036
    %v3379 = vpop.f32.mrb[0].mxu0
    %v3380 = vadd.f32 %v2905, %v3379
    %v3381 = vpop.f32.mrb[0].mxu0
    %3382 = vmatprep.mubr.f32.mxu0 0.0
    %3383 = vmatmul.mubr.f32.gmra.mrb[0].mxu0 %v3039
    %v3384 = vpop.f32.mrb[0].mxu0
    %v3385 = vadd.f32 %v2905, %v3384
    %v3386 = vpop.f32.mrb[0].mxu0
    %3387 = vmatprep.mubr.f32.mxu0 0.0
    %3388 = vmatmul.mubr.f32.gmra.mrb[0].mxu0 %v3042
    %v3389 = vpop.f32.mrb[0].mxu0
    %v3390 = vadd.f32 %v2905, %v3389
    %v3391 = vpop.f32.mrb[0].mxu0
    %3392 = vmatprep.mubr.f32.mxu0 0.0
    %3393 = vmatmul.mubr.f32.gmra.mrb[0].mxu0 %v3045
    %v3394 = vpop.f32.mrb[0].mxu0
    %v3395 = vadd.f32 %v2905, %v3394
    %v3396 = vpop.f32.mrb[0].mxu0
    %3397 = vmatprep.mubr.f32.mxu0 0.0
    %3398 = vmatmul.mubr.f32.gmra.mrb[0].mxu0 %v3048
    %v3399 = vpop.f32.mrb[0].mxu0
    %v3400 = vadd.f32 %v2905, %v3399
    %v3401 = vpop.f32.mrb[0].mxu0
    %3402 = vmatprep.mubr.f32.mxu0 0.0
    %3403 = vmatmul.mubr.f32.gmra.mrb[0].mxu0 %v3051
    %v3404 = vpop.f32.mrb[0].mxu0
    %v3405 = vadd.f32 %v2905, %v3404
    %v3406 = vpop.f32.mrb[0].mxu0
    %3407 = vmatprep.mubr.f32.mxu0 0.0
    %3408 = vmatmul.mubr.f32.gmra.mrb[0].mxu0 %v3054
    %v3409 = vpop.f32.mrb[0].mxu0
    %v3410 = vadd.f32 %v2905, %v3409
    %v3411 = vpop.f32.mrb[0].mxu0
    %3412 = vmatprep.mubr.f32.mxu0 0.0
    %3413 = vmatmul.mubr.f32.gmra.mrb[0].mxu0 %v3057
    %v3414 = vpop.f32.mrb[0].mxu0
    %v3415 = vadd.f32 %v2905, %v3414
    %v3416 = vpop.f32.mrb[0].mxu0
    %3417 = vmatprep.mubr.f32.mxu0 0.0
    %3418 = vmatmul.mubr.f32.gmra.mrb[0].mxu0 %v3060
    %v3419 = vpop.f32.mrb[0].mxu0
    %v3420 = vadd.f32 %v2905, %v3419
    %v3421 = vpop.f32.mrb[0].mxu0
    %3422 = vmatprep.mubr.f32.mxu0 0.0
    %3423 = vmatmul.mubr.f32.gmra.mrb[0].mxu0 %v3063
    %v3424 = vpop.f32.mrb[0].mxu0
    %v3425 = vadd.f32 %v2905, %v3424
    %v3426 = vpop.f32.mrb[0].mxu0
    %3427 = vmatprep.mubr.f32.mxu0 0.0
    %3428 = vmatmul.mubr.f32.gmra.mrb[0].mxu0 %v3066
    %v3429 = vpop.f32.mrb[0].mxu0
    %v3430 = vadd.f32 %v2905, %v3429
    %v3431 = vpop.f32.mrb[0].mxu0
    %3432 = vmatprep.mubr.f32.mxu0 0.0
    %3433 = vmatmul.mubr.f32.gmra.mrb[0].mxu0 %v3069
    %v3434 = vpop.f32.mrb[0].mxu0
    %v3435 = vadd.f32 %v2905, %v3434
    %v3436 = vpop.f32.mrb[0].mxu0
    %3437 = vmatprep.mubr.f32.mxu0 0.0
    %3438 = vmatmul.mubr.f32.gmra.mrb[0].mxu0 %v3072
    %v3439 = vpop.f32.mrb[0].mxu0
    %v3440 = vadd.f32 %v2905, %v3439
    %v3441 = vpop.f32.mrb[0].mxu0
    %3442 = vmatprep.mubr.f32.mxu0 0.0
    %3443 = vmatmul.mubr.f32.gmra.mrb[0].mxu0 %v3075
    %v3444 = vpop.f32.mrb[0].mxu0
    %v3445 = vadd.f32 %v2905, %v3444
    %v3446 = vpop.f32.mrb[0].mxu0
    %3447 = vmatprep.mubr.f32.mxu0 0.0
    %3448 = vmatmul.mubr.f32.gmra.mrb[0].mxu0 %v3078
    %v3449 = vpop.f32.mrb[0].mxu0
    %v3450 = vadd.f32 %v2905, %v3449
    %v3451 = vpop.f32.mrb[0].mxu0
    %3452 = vmatprep.mubr.f32.mxu0 0.0
    %3453 = vmatmul.mubr.f32.gmra.mrb[0].mxu0 %v3081
    %v3454 = vpop.f32.mrb[0].mxu0
    %v3455 = vadd.f32 %v2905, %v3454
    %v3456 = vpop.f32.mrb[0].mxu0
    %3457 = vmatprep.mubr.f32.mxu0 0.0
    %3458 = vmatmul.mubr.f32.gmra.mrb[0].mxu0 %v3084
    %v3459 = vpop.f32.mrb[0].mxu0
    %v3460 = vadd.f32 %v2905, %v3459
    %v3461 = vpop.f32.mrb[0].mxu0
    %3462 = vmatprep.mubr.f32.mxu0 0.0
    %3463 = vmatmul.mubr.f32.gmra.mrb[0].mxu0 %v3087
    %v3464 = vpop.f32.mrb[0].mxu0
    %v3465 = vadd.f32 %v2905, %v3464
    %v3466 = vpop.f32.mrb[0].mxu0
    %3467 = vmatprep.mubr.f32.mxu0 0.0
    %3468 = vmatmul.mubr.f32.gmra.mrb[0].mxu0 %v3090
    %v3469 = vpop.f32.mrb[0].mxu0
    %v3470 = vadd.f32 %v2905, %v3469
    %v3471 = vpop.f32.mrb[0].mxu0
    %3472 = vmatprep.mubr.f32.mxu0 0.0
    %3473 = vmatmul.mubr.f32.gmra.mrb[0].mxu0 %v3093
    %v3474 = vpop.f32.mrb[0].mxu0
    %v3475 = vadd.f32 %v2905, %v3474
    %v3476 = vpop.f32.mrb[0].mxu0
    %3477 = vmatprep.mubr.f32.mxu0 0.0
    %3478 = vmatmul.mubr.f32.gmra.mrb[0].mxu0 %v3096
    %v3479 = vpop.f32.mrb[0].mxu0
    %v3480 = vadd.f32 %v2905, %v3479
    %v3481 = vpop.f32.mrb[0].mxu0
    %3482 = vdwg.mxu0
    %v3483 = vmax.f32 %v3165, 0.0
    %v3484 = vmax.f32 %v3170, 0.0
    %v3485 = vmax.f32 %v3175, 0.0
    %v3486 = vmax.f32 %v3180, 0.0
    %v3487 = vmax.f32 %v3185, 0.0
    %v3488 = vmax.f32 %v3190, 0.0
    %v3489 = vmax.f32 %v3195, 0.0
    %v3490 = vmax.f32 %v3200, 0.0
    %v3491 = vmax.f32 %v3205, 0.0
    %v3492 = vmax.f32 %v3210, 0.0
    %v3493 = vmax.f32 %v3215, 0.0
    %v3494 = vmax.f32 %v3220, 0.0
    %v3495 = vmax.f32 %v3225, 0.0
    %v3496 = vmax.f32 %v3230, 0.0
    %v3497 = vmax.f32 %v3235, 0.0
    %v3498 = vmax.f32 %v3240, 0.0
    %v3499 = vmax.f32 %v3245, 0.0
    %v3500 = vmax.f32 %v3250, 0.0
    %v3501 = vmax.f32 %v3255, 0.0
    %v3502 = vmax.f32 %v3260, 0.0
    %v3503 = vmax.f32 %v3265, 0.0
    %v3504 = vmax.f32 %v3270, 0.0
    %v3505 = vmax.f32 %v3275, 0.0
    %v3506 = vmax.f32 %v3280, 0.0
    %v3507 = vmax.f32 %v3285, 0.0
    %v3508 = vmax.f32 %v3290, 0.0
    %v3509 = vmax.f32 %v3295, 0.0
    %v3510 = vmax.f32 %v3300, 0.0
    %v3511 = vmax.f32 %v3305, 0.0
    %v3512 = vmax.f32 %v3310, 0.0
    %v3513 = vmax.f32 %v3315, 0.0
    %v3514 = vmax.f32 %v3320, 0.0
    %v3515 = vmax.f32 %v3325, 0.0
    %v3516 = vmax.f32 %v3330, 0.0
    %v3517 = vmax.f32 %v3335, 0.0
    %v3518 = vmax.f32 %v3340, 0.0
    %v3519 = vmax.f32 %v3345, 0.0
    %v3520 = vmax.f32 %v3350, 0.0
    %v3521 = vmax.f32 %v3355, 0.0
    %v3522 = vmax.f32 %v3360, 0.0
    %v3523 = vmax.f32 %v3365, 0.0
    %v3524 = vmax.f32 %v3370, 0.0
    %v3525 = vmax.f32 %v3375, 0.0
    %v3526 = vmax.f32 %v3380, 0.0
    %v3527 = vmax.f32 %v3385, 0.0
    %v3528 = vmax.f32 %v3390, 0.0
    %v3529 = vmax.f32 %v3395, 0.0
    %v3530 = vmax.f32 %v3400, 0.0
    %v3531 = vmax.f32 %v3405, 0.0
    %v3532 = vmax.f32 %v3410, 0.0
    %v3533 = vmax.f32 %v3415, 0.0
    %v3534 = vmax.f32 %v3420, 0.0
    %v3535 = vmax.f32 %v3425, 0.0
    %v3536 = vmax.f32 %v3430, 0.0
    %v3537 = vmax.f32 %v3435, 0.0
    %v3538 = vmax.f32 %v3440, 0.0
    %v3539 = vmax.f32 %v3445, 0.0
    %v3540 = vmax.f32 %v3450, 0.0
    %v3541 = vmax.f32 %v3455, 0.0
    %v3542 = vmax.f32 %v3460, 0.0
    %v3543 = vmax.f32 %v3465, 0.0
    %v3544 = vmax.f32 %v3470, 0.0
    %v3545 = vmax.f32 %v3475, 0.0
    %v3546 = vmax.f32 %v3480, 0.0
    %v3547 = vld [vmem:[%s5] sm:$0xff]
    %v3548 = vld [vmem:[%s5 + $0x8] sm:$0xff]
    %v3549 = vld [vmem:[%s5 + $0x10] sm:$0xff]
    %v3550 = vld [vmem:[%s5 + $0x18] sm:$0xff]
    %vm3551 = vcmask 261120
    %v3553 = vsel %vm3551, %v3483, 0
    %v3556 = vsel %vm3551, %v3484, 0
    %v3559 = vsel %vm3551, %v3485, 0
    %v3562 = vsel %vm3551, %v3486, 0
    %v3565 = vsel %vm3551, %v3487, 0
    %v3568 = vsel %vm3551, %v3488, 0
    %v3571 = vsel %vm3551, %v3489, 0
    %v3574 = vsel %vm3551, %v3490, 0
    %v3577 = vsel %vm3551, %v3491, 0
    %v3580 = vsel %vm3551, %v3492, 0
    %v3583 = vsel %vm3551, %v3493, 0
    %v3586 = vsel %vm3551, %v3494, 0
    %v3589 = vsel %vm3551, %v3495, 0
    %v3592 = vsel %vm3551, %v3496, 0
    %v3595 = vsel %vm3551, %v3497, 0
    %v3598 = vsel %vm3551, %v3498, 0
    %v3601 = vsel %vm3551, %v3499, 0
    %v3604 = vsel %vm3551, %v3500, 0
    %v3607 = vsel %vm3551, %v3501, 0
    %v3610 = vsel %vm3551, %v3502, 0
    %v3613 = vsel %vm3551, %v3503, 0
    %v3616 = vsel %vm3551, %v3504, 0
    %v3619 = vsel %vm3551, %v3505, 0
    %v3622 = vsel %vm3551, %v3506, 0
    %v3625 = vsel %vm3551, %v3507, 0
    %v3628 = vsel %vm3551, %v3508, 0
    %v3631 = vsel %vm3551, %v3509, 0
    %v3634 = vsel %vm3551, %v3510, 0
    %v3637 = vsel %vm3551, %v3511, 0
    %v3640 = vsel %vm3551, %v3512, 0
    %v3643 = vsel %vm3551, %v3513, 0
    %v3646 = vsel %vm3551, %v3514, 0
    %v3649 = vsel %vm3551, %v3515, 0
    %v3652 = vsel %vm3551, %v3516, 0
    %v3655 = vsel %vm3551, %v3517, 0
    %v3658 = vsel %vm3551, %v3518, 0
    %v3661 = vsel %vm3551, %v3519, 0
    %v3664 = vsel %vm3551, %v3520, 0
    %v3667 = vsel %vm3551, %v3521, 0
    %v3670 = vsel %vm3551, %v3522, 0
    %v3673 = vsel %vm3551, %v3523, 0
    %v3676 = vsel %vm3551, %v3524, 0
    %v3679 = vsel %vm3551, %v3525, 0
    %v3682 = vsel %vm3551, %v3526, 0
    %v3685 = vsel %vm3551, %v3527, 0
    %v3688 = vsel %vm3551, %v3528, 0
    %v3691 = vsel %vm3551, %v3529, 0
    %v3694 = vsel %vm3551, %v3530, 0
    %v3697 = vsel %vm3551, %v3531, 0
    %v3700 = vsel %vm3551, %v3532, 0
    %v3703 = vsel %vm3551, %v3533, 0
    %v3706 = vsel %vm3551, %v3534, 0
    %v3709 = vsel %vm3551, %v3535, 0
    %v3712 = vsel %vm3551, %v3536, 0
    %v3715 = vsel %vm3551, %v3537, 0
    %v3718 = vsel %vm3551, %v3538, 0
    %v3721 = vsel %vm3551, %v3539, 0
    %v3724 = vsel %vm3551, %v3540, 0
    %v3727 = vsel %vm3551, %v3541, 0
    %v3730 = vsel %vm3551, %v3542, 0
    %v3733 = vsel %vm3551, %v3543, 0
    %v3736 = vsel %vm3551, %v3544, 0
    %v3739 = vsel %vm3551, %v3545, 0
    %v3742 = vsel %vm3551, %v3546, 0
    %3744 = vmatprep.subr.mxu0 0.0
    %3745 = vmatpush1.msra.mxu0 %v3547
    %3746 = vmatprep.subr.mxu0 0.0
    %3747 = vmatpush1.msra.mxu0 %v3548
    %3748 = vmatprep.subr.mxu0 0.0
    %3749 = vmatpush1.msra.mxu0 %v3549
    %3750 = vmatprep.subr.mxu0 0.0
    %3751 = vmatpush1.msra.mxu0 %v3550
    %3752 = vmatprep.subr.mxu0 0.0
    %3753 = vmatpush1.msra.mxu0 0.0
    %3754 = vmatprep.subr.mxu0 0.0
    %3755 = vmatpush1.msra.mxu0 0.0
    %3756 = vmatprep.subr.mxu0 0.0
    %3757 = vmatpush1.msra.mxu0 0.0
    %3758 = vmatprep.subr.mxu0 0.0
    %3759 = vmatpush1.msra.mxu0 0.0
    %3760 = vmatprep.subr.mxu0 0.0
    %3761 = vmatpush1.msra.mxu0 0.0
    %3762 = vmatprep.subr.mxu0 0.0
    %3763 = vmatpush1.msra.mxu0 0.0
    %3764 = vmatprep.subr.mxu0 0.0
    %3765 = vmatpush1.msra.mxu0 0.0
    %3766 = vmatprep.subr.mxu0 0.0
    %3767 = vmatpush1.msra.mxu0 0.0
    %3768 = vmatprep.subr.mxu0 0.0
    %3769 = vmatpush1.msra.mxu0 0.0
    %3770 = vmatprep.subr.mxu0 0.0
    %3771 = vmatpush1.msra.mxu0 0.0
    %3772 = vmatprep.subr.mxu0 0.0
    %3773 = vmatpush1.msra.mxu0 0.0
    %3774 = vmatprep.subr.mxu0 0.0
    %3775 = vmatpush1.msra.mxu0 0.0
    %3776 = vmatprep.subr.mxu0 0.0
    %3777 = vmatpush1.msra.mxu0 0.0
    %3778 = vmatprep.subr.mxu0 0.0
    %3779 = vmatpush1.msra.mxu0 0.0
    %3780 = vmatprep.subr.mxu0 0.0
    %3781 = vmatpush1.msra.mxu0 0.0
    %3782 = vmatprep.subr.mxu0 0.0
    %3783 = vmatpush1.msra.mxu0 0.0
    %3784 = vmatprep.subr.mxu0 0.0
    %3785 = vmatpush1.msra.mxu0 0.0
    %3786 = vmatprep.subr.mxu0 0.0
    %3787 = vmatpush1.msra.mxu0 0.0
    %3788 = vmatprep.subr.mxu0 0.0
    %3789 = vmatpush1.msra.mxu0 0.0
    %3790 = vmatprep.subr.mxu0 0.0
    %3791 = vmatpush1.msra.mxu0 0.0
    %3792 = vmatprep.subr.mxu0 0.0
    %3793 = vmatpush1.msra.mxu0 0.0
    %3794 = vmatprep.subr.mxu0 0.0
    %3795 = vmatpush1.msra.mxu0 0.0
    %3796 = vmatprep.subr.mxu0 0.0
    %3797 = vmatpush1.msra.mxu0 0.0
    %3798 = vmatprep.subr.mxu0 0.0
    %3799 = vmatpush1.msra.mxu0 0.0
    %3800 = vmatprep.subr.mxu0 0.0
    %3801 = vmatpush1.msra.mxu0 0.0
    %3802 = vmatprep.subr.mxu0 0.0
    %3803 = vmatpush1.msra.mxu0 0.0
    %3804 = vmatprep.subr.mxu0 0.0
    %3805 = vmatpush1.msra.mxu0 0.0
    %3806 = vmatprep.subr.mxu0 0.0
    %3807 = vmatpush1.msra.mxu0 0.0
    %3808 = vmatprep.mubr.f32.mxu0 0.0
    %3809 = vmatmul.mubr.f32.gmra.mrb[0].mxu0 %v3553
    %v3810 = vpop.f32.mrb[0].mxu0
    %v3811 = vadd.f32 0.0, %v3810
    %v3812 = vpop.f32.mrb[0].mxu0
    %3813 = vmatprep.mubr.f32.mxu0 0.0
    %3814 = vmatmul.mubr.f32.gmra.mrb[0].mxu0 %v3556
    %v3815 = vpop.f32.mrb[0].mxu0
    %v3816 = vadd.f32 0.0, %v3815
    %v3817 = vpop.f32.mrb[0].mxu0
    %3818 = vmatprep.mubr.f32.mxu0 0.0
    %3819 = vmatmul.mubr.f32.gmra.mrb[0].mxu0 %v3559
    %v3820 = vpop.f32.mrb[0].mxu0
    %v3821 = vadd.f32 0.0, %v3820
    %v3822 = vpop.f32.mrb[0].mxu0
    %3823 = vmatprep.mubr.f32.mxu0 0.0
    %3824 = vmatmul.mubr.f32.gmra.mrb[0].mxu0 %v3562
    %v3825 = vpop.f32.mrb[0].mxu0
    %v3826 = vadd.f32 0.0, %v3825
    %v3827 = vpop.f32.mrb[0].mxu0
    %3828 = vmatprep.mubr.f32.mxu0 0.0
    %3829 = vmatmul.mubr.f32.gmra.mrb[0].mxu0 %v3565
    %v3830 = vpop.f32.mrb[0].mxu0
    %v3831 = vadd.f32 0.0, %v3830
    %v3832 = vpop.f32.mrb[0].mxu0
    %3833 = vmatprep.mubr.f32.mxu0 0.0
    %3834 = vmatmul.mubr.f32.gmra.mrb[0].mxu0 %v3568
    %v3835 = vpop.f32.mrb[0].mxu0
    %v3836 = vadd.f32 0.0, %v3835
    %v3837 = vpop.f32.mrb[0].mxu0
    %3838 = vmatprep.mubr.f32.mxu0 0.0
    %3839 = vmatmul.mubr.f32.gmra.mrb[0].mxu0 %v3571
    %v3840 = vpop.f32.mrb[0].mxu0
    %v3841 = vadd.f32 0.0, %v3840
    %v3842 = vpop.f32.mrb[0].mxu0
    %3843 = vmatprep.mubr.f32.mxu0 0.0
    %3844 = vmatmul.mubr.f32.gmra.mrb[0].mxu0 %v3574
    %v3845 = vpop.f32.mrb[0].mxu0
    %v3846 = vadd.f32 0.0, %v3845
    %v3847 = vpop.f32.mrb[0].mxu0
    %3848 = vmatprep.mubr.f32.mxu0 0.0
    %3849 = vmatmul.mubr.f32.gmra.mrb[0].mxu0 %v3577
    %v3850 = vpop.f32.mrb[0].mxu0
    %v3851 = vadd.f32 0.0, %v3850
    %v3852 = vpop.f32.mrb[0].mxu0
    %3853 = vmatprep.mubr.f32.mxu0 0.0
    %3854 = vmatmul.mubr.f32.gmra.mrb[0].mxu0 %v3580
    %v3855 = vpop.f32.mrb[0].mxu0
    %v3856 = vadd.f32 0.0, %v3855
    %v3857 = vpop.f32.mrb[0].mxu0
    %3858 = vmatprep.mubr.f32.mxu0 0.0
    %3859 = vmatmul.mubr.f32.gmra.mrb[0].mxu0 %v3583
    %v3860 = vpop.f32.mrb[0].mxu0
    %v3861 = vadd.f32 0.0, %v3860
    %v3862 = vpop.f32.mrb[0].mxu0
    %3863 = vmatprep.mubr.f32.mxu0 0.0
    %3864 = vmatmul.mubr.f32.gmra.mrb[0].mxu0 %v3586
    %v3865 = vpop.f32.mrb[0].mxu0
    %v3866 = vadd.f32 0.0, %v3865
    %v3867 = vpop.f32.mrb[0].mxu0
    %3868 = vmatprep.mubr.f32.mxu0 0.0
    %3869 = vmatmul.mubr.f32.gmra.mrb[0].mxu0 %v3589
    %v3870 = vpop.f32.mrb[0].mxu0
    %v3871 = vadd.f32 0.0, %v3870
    %v3872 = vpop.f32.mrb[0].mxu0
    %3873 = vmatprep.mubr.f32.mxu0 0.0
    %3874 = vmatmul.mubr.f32.gmra.mrb[0].mxu0 %v3592
    %v3875 = vpop.f32.mrb[0].mxu0
    %v3876 = vadd.f32 0.0, %v3875
    %v3877 = vpop.f32.mrb[0].mxu0
    %3878 = vmatprep.mubr.f32.mxu0 0.0
    %3879 = vmatmul.mubr.f32.gmra.mrb[0].mxu0 %v3595
    %v3880 = vpop.f32.mrb[0].mxu0
    %v3881 = vadd.f32 0.0, %v3880
    %v3882 = vpop.f32.mrb[0].mxu0
    %3883 = vmatprep.mubr.f32.mxu0 0.0
    %3884 = vmatmul.mubr.f32.gmra.mrb[0].mxu0 %v3598
    %v3885 = vpop.f32.mrb[0].mxu0
    %v3886 = vadd.f32 0.0, %v3885
    %v3887 = vpop.f32.mrb[0].mxu0
    %3888 = vmatprep.mubr.f32.mxu0 0.0
    %3889 = vmatmul.mubr.f32.gmra.mrb[0].mxu0 %v3601
    %v3890 = vpop.f32.mrb[0].mxu0
    %v3891 = vadd.f32 0.0, %v3890
    %v3892 = vpop.f32.mrb[0].mxu0
    %3893 = vmatprep.mubr.f32.mxu0 0.0
    %3894 = vmatmul.mubr.f32.gmra.mrb[0].mxu0 %v3604
    %v3895 = vpop.f32.mrb[0].mxu0
    %v3896 = vadd.f32 0.0, %v3895
    %v3897 = vpop.f32.mrb[0].mxu0
    %3898 = vmatprep.mubr.f32.mxu0 0.0
    %3899 = vmatmul.mubr.f32.gmra.mrb[0].mxu0 %v3607
    %v3900 = vpop.f32.mrb[0].mxu0
    %v3901 = vadd.f32 0.0, %v3900
    %v3902 = vpop.f32.mrb[0].mxu0
    %3903 = vmatprep.mubr.f32.mxu0 0.0
    %3904 = vmatmul.mubr.f32.gmra.mrb[0].mxu0 %v3610
    %v3905 = vpop.f32.mrb[0].mxu0
    %v3906 = vadd.f32 0.0, %v3905
    %v3907 = vpop.f32.mrb[0].mxu0
    %3908 = vmatprep.mubr.f32.mxu0 0.0
    %3909 = vmatmul.mubr.f32.gmra.mrb[0].mxu0 %v3613
    %v3910 = vpop.f32.mrb[0].mxu0
    %v3911 = vadd.f32 0.0, %v3910
    %v3912 = vpop.f32.mrb[0].mxu0
    %3913 = vmatprep.mubr.f32.mxu0 0.0
    %3914 = vmatmul.mubr.f32.gmra.mrb[0].mxu0 %v3616
    %v3915 = vpop.f32.mrb[0].mxu0
    %v3916 = vadd.f32 0.0, %v3915
    %v3917 = vpop.f32.mrb[0].mxu0
    %3918 = vmatprep.mubr.f32.mxu0 0.0
    %3919 = vmatmul.mubr.f32.gmra.mrb[0].mxu0 %v3619
    %v3920 = vpop.f32.mrb[0].mxu0
    %v3921 = vadd.f32 0.0, %v3920
    %v3922 = vpop.f32.mrb[0].mxu0
    %3923 = vmatprep.mubr.f32.mxu0 0.0
    %3924 = vmatmul.mubr.f32.gmra.mrb[0].mxu0 %v3622
    %v3925 = vpop.f32.mrb[0].mxu0
    %v3926 = vadd.f32 0.0, %v3925
    %v3927 = vpop.f32.mrb[0].mxu0
    %3928 = vmatprep.mubr.f32.mxu0 0.0
    %3929 = vmatmul.mubr.f32.gmra.mrb[0].mxu0 %v3625
    %v3930 = vpop.f32.mrb[0].mxu0
    %v3931 = vadd.f32 0.0, %v3930
    %v3932 = vpop.f32.mrb[0].mxu0
    %3933 = vmatprep.mubr.f32.mxu0 0.0
    %3934 = vmatmul.mubr.f32.gmra.mrb[0].mxu0 %v3628
    %v3935 = vpop.f32.mrb[0].mxu0
    %v3936 = vadd.f32 0.0, %v3935
    %v3937 = vpop.f32.mrb[0].mxu0
    %3938 = vmatprep.mubr.f32.mxu0 0.0
    %3939 = vmatmul.mubr.f32.gmra.mrb[0].mxu0 %v3631
    %v3940 = vpop.f32.mrb[0].mxu0
    %v3941 = vadd.f32 0.0, %v3940
    %v3942 = vpop.f32.mrb[0].mxu0
    %3943 = vmatprep.mubr.f32.mxu0 0.0
    %3944 = vmatmul.mubr.f32.gmra.mrb[0].mxu0 %v3634
    %v3945 = vpop.f32.mrb[0].mxu0
    %v3946 = vadd.f32 0.0, %v3945
    %v3947 = vpop.f32.mrb[0].mxu0
    %3948 = vmatprep.mubr.f32.mxu0 0.0
    %3949 = vmatmul.mubr.f32.gmra.mrb[0].mxu0 %v3637
    %v3950 = vpop.f32.mrb[0].mxu0
    %v3951 = vadd.f32 0.0, %v3950
    %v3952 = vpop.f32.mrb[0].mxu0
    %3953 = vmatprep.mubr.f32.mxu0 0.0
    %3954 = vmatmul.mubr.f32.gmra.mrb[0].mxu0 %v3640
    %v3955 = vpop.f32.mrb[0].mxu0
    %v3956 = vadd.f32 0.0, %v3955
    %v3957 = vpop.f32.mrb[0].mxu0
    %3958 = vmatprep.mubr.f32.mxu0 0.0
    %3959 = vmatmul.mubr.f32.gmra.mrb[0].mxu0 %v3643
    %v3960 = vpop.f32.mrb[0].mxu0
    %v3961 = vadd.f32 0.0, %v3960
    %v3962 = vpop.f32.mrb[0].mxu0
    %3963 = vmatprep.mubr.f32.mxu0 0.0
    %3964 = vmatmul.mubr.f32.gmra.mrb[0].mxu0 %v3646
    %v3965 = vpop.f32.mrb[0].mxu0
    %v3966 = vadd.f32 0.0, %v3965
    %v3967 = vpop.f32.mrb[0].mxu0
    %3968 = vmatprep.mubr.f32.mxu0 0.0
    %3969 = vmatmul.mubr.f32.gmra.mrb[0].mxu0 %v3649
    %v3970 = vpop.f32.mrb[0].mxu0
    %v3971 = vadd.f32 0.0, %v3970
    %v3972 = vpop.f32.mrb[0].mxu0
    %3973 = vmatprep.mubr.f32.mxu0 0.0
    %3974 = vmatmul.mubr.f32.gmra.mrb[0].mxu0 %v3652
    %v3975 = vpop.f32.mrb[0].mxu0
    %v3976 = vadd.f32 0.0, %v3975
    %v3977 = vpop.f32.mrb[0].mxu0
    %3978 = vmatprep.mubr.f32.mxu0 0.0
    %3979 = vmatmul.mubr.f32.gmra.mrb[0].mxu0 %v3655
    %v3980 = vpop.f32.mrb[0].mxu0
    %v3981 = vadd.f32 0.0, %v3980
    %v3982 = vpop.f32.mrb[0].mxu0
    %3983 = vmatprep.mubr.f32.mxu0 0.0
    %3984 = vmatmul.mubr.f32.gmra.mrb[0].mxu0 %v3658
    %v3985 = vpop.f32.mrb[0].mxu0
    %v3986 = vadd.f32 0.0, %v3985
    %v3987 = vpop.f32.mrb[0].mxu0
    %3988 = vmatprep.mubr.f32.mxu0 0.0
    %3989 = vmatmul.mubr.f32.gmra.mrb[0].mxu0 %v3661
    %v3990 = vpop.f32.mrb[0].mxu0
    %v3991 = vadd.f32 0.0, %v3990
    %v3992 = vpop.f32.mrb[0].mxu0
    %3993 = vmatprep.mubr.f32.mxu0 0.0
    %3994 = vmatmul.mubr.f32.gmra.mrb[0].mxu0 %v3664
    %v3995 = vpop.f32.mrb[0].mxu0
    %v3996 = vadd.f32 0.0, %v3995
    %v3997 = vpop.f32.mrb[0].mxu0
    %3998 = vmatprep.mubr.f32.mxu0 0.0
    %3999 = vmatmul.mubr.f32.gmra.mrb[0].mxu0 %v3667
    %v4000 = vpop.f32.mrb[0].mxu0
    %v4001 = vadd.f32 0.0, %v4000
    %v4002 = vpop.f32.mrb[0].mxu0
    %4003 = vmatprep.mubr.f32.mxu0 0.0
    %4004 = vmatmul.mubr.f32.gmra.mrb[0].mxu0 %v3670
    %v4005 = vpop.f32.mrb[0].mxu0
    %v4006 = vadd.f32 0.0, %v4005
    %v4007 = vpop.f32.mrb[0].mxu0
    %4008 = vmatprep.mubr.f32.mxu0 0.0
    %4009 = vmatmul.mubr.f32.gmra.mrb[0].mxu0 %v3673
    %v4010 = vpop.f32.mrb[0].mxu0
    %v4011 = vadd.f32 0.0, %v4010
    %v4012 = vpop.f32.mrb[0].mxu0
    %4013 = vmatprep.mubr.f32.mxu0 0.0
    %4014 = vmatmul.mubr.f32.gmra.mrb[0].mxu0 %v3676
    %v4015 = vpop.f32.mrb[0].mxu0
    %v4016 = vadd.f32 0.0, %v4015
    %v4017 = vpop.f32.mrb[0].mxu0
    %4018 = vmatprep.mubr.f32.mxu0 0.0
    %4019 = vmatmul.mubr.f32.gmra.mrb[0].mxu0 %v3679
    %v4020 = vpop.f32.mrb[0].mxu0
    %v4021 = vadd.f32 0.0, %v4020
    %v4022 = vpop.f32.mrb[0].mxu0
    %4023 = vmatprep.mubr.f32.mxu0 0.0
    %4024 = vmatmul.mubr.f32.gmra.mrb[0].mxu0 %v3682
    %v4025 = vpop.f32.mrb[0].mxu0
    %v4026 = vadd.f32 0.0, %v4025
    %v4027 = vpop.f32.mrb[0].mxu0
    %4028 = vmatprep.mubr.f32.mxu0 0.0
    %4029 = vmatmul.mubr.f32.gmra.mrb[0].mxu0 %v3685
    %v4030 = vpop.f32.mrb[0].mxu0
    %v4031 = vadd.f32 0.0, %v4030
    %v4032 = vpop.f32.mrb[0].mxu0
    %4033 = vmatprep.mubr.f32.mxu0 0.0
    %4034 = vmatmul.mubr.f32.gmra.mrb[0].mxu0 %v3688
    %v4035 = vpop.f32.mrb[0].mxu0
    %v4036 = vadd.f32 0.0, %v4035
    %v4037 = vpop.f32.mrb[0].mxu0
    %4038 = vmatprep.mubr.f32.mxu0 0.0
    %4039 = vmatmul.mubr.f32.gmra.mrb[0].mxu0 %v3691
    %v4040 = vpop.f32.mrb[0].mxu0
    %v4041 = vadd.f32 0.0, %v4040
    %v4042 = vpop.f32.mrb[0].mxu0
    %4043 = vmatprep.mubr.f32.mxu0 0.0
    %4044 = vmatmul.mubr.f32.gmra.mrb[0].mxu0 %v3694
    %v4045 = vpop.f32.mrb[0].mxu0
    %v4046 = vadd.f32 0.0, %v4045
    %v4047 = vpop.f32.mrb[0].mxu0
    %4048 = vmatprep.mubr.f32.mxu0 0.0
    %4049 = vmatmul.mubr.f32.gmra.mrb[0].mxu0 %v3697
    %v4050 = vpop.f32.mrb[0].mxu0
    %v4051 = vadd.f32 0.0, %v4050
    %v4052 = vpop.f32.mrb[0].mxu0
    %4053 = vmatprep.mubr.f32.mxu0 0.0
    %4054 = vmatmul.mubr.f32.gmra.mrb[0].mxu0 %v3700
    %v4055 = vpop.f32.mrb[0].mxu0
    %v4056 = vadd.f32 0.0, %v4055
    %v4057 = vpop.f32.mrb[0].mxu0
    %4058 = vmatprep.mubr.f32.mxu0 0.0
    %4059 = vmatmul.mubr.f32.gmra.mrb[0].mxu0 %v3703
    %v4060 = vpop.f32.mrb[0].mxu0
    %v4061 = vadd.f32 0.0, %v4060
    %v4062 = vpop.f32.mrb[0].mxu0
    %4063 = vmatprep.mubr.f32.mxu0 0.0
    %4064 = vmatmul.mubr.f32.gmra.mrb[0].mxu0 %v3706
    %v4065 = vpop.f32.mrb[0].mxu0
    %v4066 = vadd.f32 0.0, %v4065
    %v4067 = vpop.f32.mrb[0].mxu0
    %4068 = vmatprep.mubr.f32.mxu0 0.0
    %4069 = vmatmul.mubr.f32.gmra.mrb[0].mxu0 %v3709
    %v4070 = vpop.f32.mrb[0].mxu0
    %v4071 = vadd.f32 0.0, %v4070
    %v4072 = vpop.f32.mrb[0].mxu0
    %4073 = vmatprep.mubr.f32.mxu0 0.0
    %4074 = vmatmul.mubr.f32.gmra.mrb[0].mxu0 %v3712
    %v4075 = vpop.f32.mrb[0].mxu0
    %v4076 = vadd.f32 0.0, %v4075
    %v4077 = vpop.f32.mrb[0].mxu0
    %4078 = vmatprep.mubr.f32.mxu0 0.0
    %4079 = vmatmul.mubr.f32.gmra.mrb[0].mxu0 %v3715
    %v4080 = vpop.f32.mrb[0].mxu0
    %v4081 = vadd.f32 0.0, %v4080
    %v4082 = vpop.f32.mrb[0].mxu0
    %4083 = vmatprep.mubr.f32.mxu0 0.0
    %4084 = vmatmul.mubr.f32.gmra.mrb[0].mxu0 %v3718
    %v4085 = vpop.f32.mrb[0].mxu0
    %v4086 = vadd.f32 0.0, %v4085
    %v4087 = vpop.f32.mrb[0].mxu0
    %4088 = vmatprep.mubr.f32.mxu0 0.0
    %4089 = vmatmul.mubr.f32.gmra.mrb[0].mxu0 %v3721
    %v4090 = vpop.f32.mrb[0].mxu0
    %v4091 = vadd.f32 0.0, %v4090
    %v4092 = vpop.f32.mrb[0].mxu0
    %4093 = vmatprep.mubr.f32.mxu0 0.0
    %4094 = vmatmul.mubr.f32.gmra.mrb[0].mxu0 %v3724
    %v4095 = vpop.f32.mrb[0].mxu0
    %v4096 = vadd.f32 0.0, %v4095
    %v4097 = vpop.f32.mrb[0].mxu0
    %4098 = vmatprep.mubr.f32.mxu0 0.0
    %4099 = vmatmul.mubr.f32.gmra.mrb[0].mxu0 %v3727
    %v4100 = vpop.f32.mrb[0].mxu0
    %v4101 = vadd.f32 0.0, %v4100
    %v4102 = vpop.f32.mrb[0].mxu0
    %4103 = vmatprep.mubr.f32.mxu0 0.0
    %4104 = vmatmul.mubr.f32.gmra.mrb[0].mxu0 %v3730
    %v4105 = vpop.f32.mrb[0].mxu0
    %v4106 = vadd.f32 0.0, %v4105
    %v4107 = vpop.f32.mrb[0].mxu0
    %4108 = vmatprep.mubr.f32.mxu0 0.0
    %4109 = vmatmul.mubr.f32.gmra.mrb[0].mxu0 %v3733
    %v4110 = vpop.f32.mrb[0].mxu0
    %v4111 = vadd.f32 0.0, %v4110
    %v4112 = vpop.f32.mrb[0].mxu0
    %4113 = vmatprep.mubr.f32.mxu0 0.0
    %4114 = vmatmul.mubr.f32.gmra.mrb[0].mxu0 %v3736
    %v4115 = vpop.f32.mrb[0].mxu0
    %v4116 = vadd.f32 0.0, %v4115
    %v4117 = vpop.f32.mrb[0].mxu0
    %4118 = vmatprep.mubr.f32.mxu0 0.0
    %4119 = vmatmul.mubr.f32.gmra.mrb[0].mxu0 %v3739
    %v4120 = vpop.f32.mrb[0].mxu0
    %v4121 = vadd.f32 0.0, %v4120
    %v4122 = vpop.f32.mrb[0].mxu0
    %4123 = vmatprep.mubr.f32.mxu0 0.0
    %4124 = vmatmul.mubr.f32.gmra.mrb[0].mxu0 %v3742
    %v4125 = vpop.f32.mrb[0].mxu0
    %v4126 = vadd.f32 0.0, %v4125
    %v4127 = vpop.f32.mrb[0].mxu0
    %4128 = vdwg.mxu0
    %4129 = vxpose.xlu0.b32.start [1/16] %v3811, 128
    %4130 = vxpose.xlu0.b32.cont [2/16] %v3816, 128
    %4131 = vxpose.xlu0.b32.cont [3/16] %v3821, 128
    %4132 = vxpose.xlu0.b32.cont [4/16] %v3826, 128
    %4133 = vxpose.xlu0.b32.cont [5/16] %v3831, 128
    %4134 = vxpose.xlu0.b32.cont [6/16] %v3836, 128
    %4135 = vxpose.xlu0.b32.cont [7/16] %v3841, 128
    %4136 = vxpose.xlu0.b32.cont [8/16] %v3846, 128
    %4137 = vxpose.xlu0.b32.cont [9/16] %v3851, 128
    %4138 = vxpose.xlu0.b32.cont [10/16] %v3856, 128
    %4139 = vxpose.xlu0.b32.cont [11/16] %v3861, 128
    %4140 = vxpose.xlu0.b32.cont [12/16] %v3866, 128
    %4141 = vxpose.xlu0.b32.cont [13/16] %v3871, 128
    %4142 = vxpose.xlu0.b32.cont [14/16] %v3876, 128
    %4143 = vxpose.xlu0.b32.cont [15/16] %v3881, 128
    %4144 = vxpose.xlu0.b32.end [16/16] %v3886, 128
    %v4145 = vpop.trf.xlu0
    %v4146 = vpop.trf.xlu0
    %v4147 = vpop.trf.xlu0
    %v4148 = vpop.trf.xlu0
    %v4149 = vpop.trf.xlu0
    %v4150 = vpop.trf.xlu0
    %v4151 = vpop.trf.xlu0
    %v4152 = vpop.trf.xlu0
    %v4153 = vpop.trf.xlu0
    %v4154 = vpop.trf.xlu0
    %v4155 = vpop.trf.xlu0
    %v4156 = vpop.trf.xlu0
    %v4157 = vpop.trf.xlu0
    %v4158 = vpop.trf.xlu0
    %v4159 = vpop.trf.xlu0
    %v4160 = vpop.trf.xlu0
    %4161 = vxpose.xlu0.b32.start [1/16] %v3891, 128
    %4162 = vxpose.xlu0.b32.cont [2/16] %v3896, 128
    %4163 = vxpose.xlu0.b32.cont [3/16] %v3901, 128
    %4164 = vxpose.xlu0.b32.cont [4/16] %v3906, 128
    %4165 = vxpose.xlu0.b32.cont [5/16] %v3911, 128
    %4166 = vxpose.xlu0.b32.cont [6/16] %v3916, 128
    %4167 = vxpose.xlu0.b32.cont [7/16] %v3921, 128
    %4168 = vxpose.xlu0.b32.cont [8/16] %v3926, 128
    %4169 = vxpose.xlu0.b32.cont [9/16] %v3931, 128
    %4170 = vxpose.xlu0.b32.cont [10/16] %v3936, 128
    %4171 = vxpose.xlu0.b32.cont [11/16] %v3941, 128
    %4172 = vxpose.xlu0.b32.cont [12/16] %v3946, 128
    %4173 = vxpose.xlu0.b32.cont [13/16] %v3951, 128
    %4174 = vxpose.xlu0.b32.cont [14/16] %v3956, 128
    %4175 = vxpose.xlu0.b32.cont [15/16] %v3961, 128
    %4176 = vxpose.xlu0.b32.end [16/16] %v3966, 128
    %v4177 = vpop.trf.xlu0
    %v4178 = vpop.trf.xlu0
    %v4179 = vpop.trf.xlu0
    %v4180 = vpop.trf.xlu0
    %v4181 = vpop.trf.xlu0
    %v4182 = vpop.trf.xlu0
    %v4183 = vpop.trf.xlu0
    %v4184 = vpop.trf.xlu0
    %v4185 = vpop.trf.xlu0
    %v4186 = vpop.trf.xlu0
    %v4187 = vpop.trf.xlu0
    %v4188 = vpop.trf.xlu0
    %v4189 = vpop.trf.xlu0
    %v4190 = vpop.trf.xlu0
    %v4191 = vpop.trf.xlu0
    %v4192 = vpop.trf.xlu0
    %4193 = vxpose.xlu0.b32.start [1/16] %v3971, 128
    %4194 = vxpose.xlu0.b32.cont [2/16] %v3976, 128
    %4195 = vxpose.xlu0.b32.cont [3/16] %v3981, 128
    %4196 = vxpose.xlu0.b32.cont [4/16] %v3986, 128
    %4197 = vxpose.xlu0.b32.cont [5/16] %v3991, 128
    %4198 = vxpose.xlu0.b32.cont [6/16] %v3996, 128
    %4199 = vxpose.xlu0.b32.cont [7/16] %v4001, 128
    %4200 = vxpose.xlu0.b32.cont [8/16] %v4006, 128
    %4201 = vxpose.xlu0.b32.cont [9/16] %v4011, 128
    %4202 = vxpose.xlu0.b32.cont [10/16] %v4016, 128
    %4203 = vxpose.xlu0.b32.cont [11/16] %v4021, 128
    %4204 = vxpose.xlu0.b32.cont [12/16] %v4026, 128
    %4205 = vxpose.xlu0.b32.cont [13/16] %v4031, 128
    %4206 = vxpose.xlu0.b32.cont [14/16] %v4036, 128
    %4207 = vxpose.xlu0.b32.cont [15/16] %v4041, 128
    %4208 = vxpose.xlu0.b32.end [16/16] %v4046, 128
    %v4209 = vpop.trf.xlu0
    %v4210 = vpop.trf.xlu0
    %v4211 = vpop.trf.xlu0
    %v4212 = vpop.trf.xlu0
    %v4213 = vpop.trf.xlu0
    %v4214 = vpop.trf.xlu0
    %v4215 = vpop.trf.xlu0
    %v4216 = vpop.trf.xlu0
    %v4217 = vpop.trf.xlu0
    %v4218 = vpop.trf.xlu0
    %v4219 = vpop.trf.xlu0
    %v4220 = vpop.trf.xlu0
    %v4221 = vpop.trf.xlu0
    %v4222 = vpop.trf.xlu0
    %v4223 = vpop.trf.xlu0
    %v4224 = vpop.trf.xlu0
    %4225 = vxpose.xlu0.b32.start [1/16] %v4051, 128
    %4226 = vxpose.xlu0.b32.cont [2/16] %v4056, 128
    %4227 = vxpose.xlu0.b32.cont [3/16] %v4061, 128
    %4228 = vxpose.xlu0.b32.cont [4/16] %v4066, 128
    %4229 = vxpose.xlu0.b32.cont [5/16] %v4071, 128
    %4230 = vxpose.xlu0.b32.cont [6/16] %v4076, 128
    %4231 = vxpose.xlu0.b32.cont [7/16] %v4081, 128
    %4232 = vxpose.xlu0.b32.cont [8/16] %v4086, 128
    %4233 = vxpose.xlu0.b32.cont [9/16] %v4091, 128
    %4234 = vxpose.xlu0.b32.cont [10/16] %v4096, 128
    %4235 = vxpose.xlu0.b32.cont [11/16] %v4101, 128
    %4236 = vxpose.xlu0.b32.cont [12/16] %v4106, 128
    %4237 = vxpose.xlu0.b32.cont [13/16] %v4111, 128
    %4238 = vxpose.xlu0.b32.cont [14/16] %v4116, 128
    %4239 = vxpose.xlu0.b32.cont [15/16] %v4121, 128
    %4240 = vxpose.xlu0.b32.end [16/16] %v4126, 128
    %v4241 = vpop.trf.xlu0
    %v4242 = vpop.trf.xlu0
    %v4243 = vpop.trf.xlu0
    %v4244 = vpop.trf.xlu0
    %v4245 = vpop.trf.xlu0
    %v4246 = vpop.trf.xlu0
    %v4247 = vpop.trf.xlu0
    %v4248 = vpop.trf.xlu0
    %v4249 = vpop.trf.xlu0
    %v4250 = vpop.trf.xlu0
    %v4251 = vpop.trf.xlu0
    %v4252 = vpop.trf.xlu0
    %v4253 = vpop.trf.xlu0
    %v4254 = vpop.trf.xlu0
    %v4255 = vpop.trf.xlu0
    %v4256 = vpop.trf.xlu0
    %v4258 = vrot.slane %v4177, 7
    %v4261 = vrot.slane %v4209, 6
    %v4264 = vrot.slane %v4241, 5
    %vm4266 = vcmask 1040384
    %v4267 = vsel %vm4266, %v4145, %v4258
    %vm4268 = vcmask 1041408
    %v4269 = vsel %vm4268, %v4267, %v4261
    %vm4270 = vcmask 1042432
    %v4271 = vsel %vm4270, %v4269, %v4264
    %v4272 = vlaneseq
    %v4273 = vshrl.u32 %v4272, 7
    %v4274 = vsub.s32 0, %v4273
    %v4275 = vrot.slane %v1924, %v4274
    %v4276 = vadd.f32 %v4271, %v4275
    %v4277 = vxor.u32 %v4276, 2147483648
    %v4278 = vmul.f32 %v4277, 1.442695
    %v4279 = vpow.pop %v4278
    %v4280 = vadd.f32 %v4279, 1.0
    %v4281 = vrcp.pop %v4280
    %v4282 = vmul.f32 1.0, %v4281
    %4283 = vst [vmem:[#allocation2] sm:$0xf] %v4282
    // Predicated region
    $region30: #{tpu_custom_call.1} parent=1 // pred_check
      _
    $region31: #{tpu_custom_call.1} parent=1 // pred_check_branch
      %4285 = sbr.rel (0) target = $region33
    $region32: #{tpu_custom_call.1} parent=1 // pred_region
      %s4287 = ssub.s32 64, 64
      %4288 = vsyncadd [#allocation3], %s4287
      %s4290 = sshll.u32 [#allocation2], 4
      %s4291 = int_to_ptr.vmem [resolvable:$true] %s4290
      %4293 = dma.vmem_to_hbm [thread:$0]  %s4291, 64, %s7, [#allocation3]
    $region33: #{tpu_custom_call.1} parent=1 // pred_fallthru
      _
    // Predicated region
    $region34: #{tpu_custom_call.1} parent=1 // pred_check
      _
    $region35: #{tpu_custom_call.1} parent=1 // pred_check_branch
      %4295 = sbr.rel (0) target = $region37
    $region36: #{tpu_custom_call.1} parent=1 // pred_region
      %4296 = dma.done [#allocation3], 64
    $region37: #{tpu_custom_call.1} parent=1 // pred_fallthru
      _
    %4297 = vsyncpa [#allocation3], 1

</llo_original>
